<compile_context>
chip_gen: v7x
topology: tpu7x:2x2x1
jax: 0.10.0
libtpu: 0.0.40
codegen_flags: <defaults>
</compile_context>

<pallas_src>
import functools
import math

import jax
import jax.numpy as jnp
from jax.experimental import pallas as pl
from jax.experimental.pallas import tpu as pltpu


def _round_up(x, m):
    return ((x + m - 1) // m) * m


# ---------------------------------------------------------------------------
# Kernel 1: tiled dense matmul  out = z @ W + b   (bf16 operands, f32 accumulate)
# ---------------------------------------------------------------------------
def _dense_kernel(x_ref, w_ref, b_ref, o_ref, acc_ref):
    k = pl.program_id(2)

    @pl.when(k == 0)
    def _():
        acc_ref[...] = jnp.zeros_like(acc_ref)

    acc_ref[...] += jnp.dot(x_ref[...], w_ref[...],
                            preferred_element_type=jnp.float32)

    @pl.when(k == pl.num_programs(2) - 1)
    def _():
        o_ref[...] = (acc_ref[...] + b_ref[...]).astype(o_ref.dtype)


def dense_matmul(x, w, b):
    """out = x @ w + b ; x:(M,K) f32, w:(K,N) f32, b:(N,) f32 -> (M,N) f32."""
    M, K = x.shape
    K2, N = w.shape
    assert K == K2

    tm = min(256, _round_up(M, 16))     # bf16-friendly sublane multiple
    tk = min(512, _round_up(K, 128))
    tn = min(512, _round_up(N, 128))
    Mp, Kp, Np = _round_up(M, tm), _round_up(K, tk), _round_up(N, tn)

    # zero-pad to exact tile multiples (zeros are neutral for the K reduction)
    xp = jnp.zeros((Mp, Kp), jnp.bfloat16).at[:M, :K].set(x.astype(jnp.bfloat16))
    wp = jnp.zeros((Kp, Np), jnp.bfloat16).at[:K, :N].set(w.astype(jnp.bfloat16))
    bp = jnp.zeros((1, Np), jnp.float32).at[0, :N].set(b.astype(jnp.float32))

    out = pl.pallas_call(
        _dense_kernel,
        out_shape=jax.ShapeDtypeStruct((Mp, Np), jnp.float32),
        grid_spec=pltpu.PrefetchScalarGridSpec(
            num_scalar_prefetch=0,
            grid=(Mp // tm, Np // tn, Kp // tk),
            in_specs=[
                pl.BlockSpec((tm, tk), lambda i, j, k: (i, k)),
                pl.BlockSpec((tk, tn), lambda i, j, k: (k, j)),
                pl.BlockSpec((1, tn), lambda i, j, k: (0, j)),
            ],
            out_specs=pl.BlockSpec((tm, tn), lambda i, j, k: (i, j)),
            scratch_shapes=[pltpu.VMEM((tm, tn), jnp.float32)],
        ),
        compiler_params=pltpu.CompilerParams(
            dimension_semantics=("parallel", "parallel", "arbitrary"),
            vmem_limit_bytes=32 * 1024 * 1024,
        ),
    )(xp, wp, bp)
    return out[:M, :N]


# ---------------------------------------------------------------------------
# Kernel 2: fused ConvTranspose2d + bias + leaky_relu (+ sigmoid), NCHW.
# Patch extraction happens in-kernel (no HBM im2col): for each of the kH*kW*Cin
# taps we read a shifted window of the padded image held in VMEM ONCE and
# accumulate it into all Cout accumulators (VPU, scalar weights from SMEM).
# The epilogue stays in f32.
# ---------------------------------------------------------------------------
def _convt_kernel(x_ref, w_ref, b_ref, o_ref, *, kH, kW, Cin, Cout, Ho, Wo,
                  apply_sigmoid, neg_slope):
    # x_ref: (1, Cin, Hp, Wp) VMEM   (one batch element, dilated+padded image)
    # w_ref: (kH*kW*Cin*Cout,) SMEM  (spatially flipped ConvTranspose weights)
    # b_ref: (Cout,) SMEM
    # o_ref: (1, Cout, Ho, Wo) VMEM
    accs = [jnp.zeros((1, Ho, Wo), jnp.float32) for _ in range(Cout)]
    for cin in range(Cin):
        for dy in range(kH):
            for dx in range(kW):
                # one static-sliced patch load, reused for every output channel
                patch = x_ref[:, cin, dy:dy + Ho, dx:dx + Wo]
                base = ((dy * kW + dx) * Cin + cin) * Cout
                for cout in range(Cout):
                    accs[cout] = accs[cout] + w_ref[base + cout] * patch
    for cout in range(Cout):
        a = accs[cout] + b_ref[cout]
        a = jnp.where(a >= 0.0, a, neg_slope * a)                 # F.leaky_relu
        if apply_sigmoid:
            a = pl.reciprocal(1.0 + jnp.exp(-a), approx=True)     # F.sigmoid (EUP)
        o_ref[:, cout, :, :] = a


def conv_transpose2d(x_nchw, weight, bias, stride, padding, apply_sigmoid):
    """PyTorch ConvTranspose2d (weight layout (Cin, Cout, kH, kW)) + leaky_relu
    (+ optional sigmoid).  Input/output are NCHW."""
    B, Cin, H, W = x_nchw.shape
    Cin_w, Cout, kH, kW = weight.shape
    assert Cin == Cin_w
    assert kH - 1 - padding >= 0 and kW - 1 - padding >= 0

    # Transposed conv == zero-insertion (stride) + (k-1-p) pad + correlation
    # with the spatially flipped kernel.  Dilation + padding fused into a
    # single strided .set on a zeros array (one XLA op, one HBM pass).
    ph, pw = kH - 1 - padding, kW - 1 - padding
    Hd, Wd = (H - 1) * stride + 1, (W - 1) * stride + 1
    Hp, Wp = Hd + 2 * ph, Wd + 2 * pw
    Ho, Wo = Hp - kH + 1, Wp - kW + 1      # == (H-1)*stride - 2*padding + k

    x_f32 = x_nchw.astype(jnp.float32)
    if stride > 1 or ph > 0 or pw > 0:
        xp = jnp.zeros((B, Cin, Hp, Wp), jnp.float32).at[
            :, :, ph:ph + Hd:stride, pw:pw + Wd:stride].set(x_f32)
    else:
        xp = x_f32

    # equivalent regular-conv weights: (kH, kW, Cin, Cout), spatially flipped
    w_flip = jnp.transpose(weight, (2, 3, 0, 1))[::-1, ::-1, :, :]
    w_flat = w_flip.reshape(-1).astype(jnp.float32)
    b_flat = bias.astype(jnp.float32)

    kernel = functools.partial(
        _convt_kernel, kH=kH, kW=kW, Cin=Cin, Cout=Cout, Ho=Ho, Wo=Wo,
        apply_sigmoid=apply_sigmoid, neg_slope=0.01)

    return pl.pallas_call(
        kernel,
        out_shape=jax.ShapeDtypeStruct((B, Cout, Ho, Wo), jnp.float32),
        grid=(B,),                                   # batch-parallel (megacore)
        in_specs=[
            pl.BlockSpec((1, Cin, Hp, Wp), lambda b: (b, 0, 0, 0)),
            pl.BlockSpec(memory_space=pltpu.MemorySpace.SMEM),
            pl.BlockSpec(memory_space=pltpu.MemorySpace.SMEM),
        ],
        out_specs=pl.BlockSpec((1, Cout, Ho, Wo), lambda b: (b, 0, 0, 0)),
        compiler_params=pltpu.CompilerParams(
            dimension_semantics=("parallel",),
            vmem_limit_bytes=32 * 1024 * 1024,
        ),
    )(xp, w_flat, b_flat)


# ---------------------------------------------------------------------------
# Decoder forward (mirrors the PyTorch module), NCHW end-to-end
# ---------------------------------------------------------------------------
def decoder_forward(params, z, init_dim, strides, pads):
    h = dense_matmul(z, params["dense_w"], params["dense_b"])      # (B, H*W*f0)
    B, D = h.shape
    img = math.isqrt(D // init_dim)                                # exact int sqrt
    assert img * img * init_dim == D
    x = h.reshape(B, init_dim, img, img)                           # view(-1,f0,H,W)
    n_layers = len(params["convT_w"])
    for i in range(n_layers):
        x = conv_transpose2d(x, params["convT_w"][i], params["convT_b"][i],
                             strides[i], pads[i],
                             apply_sigmoid=(i == n_layers - 1))
    return x                                                       # NCHW, like PyTorch


# ---------------------------------------------------------------------------
# Pure-JAX (XLA) reference of the same math, for correctness checking
# ---------------------------------------------------------------------------
def decoder_reference(params, z, init_dim, strides, pads):
    h = z @ params["dense_w"] + params["dense_b"]
    B, D = h.shape
    img = math.isqrt(D // init_dim)
    x = h.reshape(B, init_dim, img, img)
    n_layers = len(params["convT_w"])
    for i in range(n_layers):
        wt = params["convT_w"][i]                       # (Cin, Cout, kH, kW)
        kH, kW = int(wt.shape[2]), int(wt.shape[3])
        p, s = pads[i], strides[i]
        rhs = jnp.transpose(wt, (1, 0, 2, 3))[:, :, ::-1, ::-1]   # OIHW, flipped
        x = jax.lax.conv_general_dilated(
            x, rhs, window_strides=(1, 1),
            padding=[(kH - 1 - p, kH - 1 - p), (kW - 1 - p, kW - 1 - p)],
            lhs_dilation=(s, s),
            dimension_numbers=("NCHW", "OIHW", "NCHW"))
        x = x + params["convT_b"][i].reshape(1, -1, 1, 1)
        x = jnp.where(x >= 0, x, 0.01 * x)
    return jax.nn.sigmoid(x)


# ---------------------------------------------------------------------------
# Deterministic parameter construction
# ---------------------------------------------------------------------------
def make_params(key, img_size, latent_z_dim, filters, kernels):
    f0 = filters[0]
    conv_in = img_size[0] * img_size[1] * f0
    n_layers = len(filters)
    keys = jax.random.split(key, 2 + 2 * n_layers)

    params = {
        "dense_w": 0.05 * jax.random.normal(keys[0], (latent_z_dim, conv_in), jnp.float32),
        "dense_b": 0.05 * jax.random.normal(keys[1], (conv_in,), jnp.float32),
        "convT_w": [],
        "convT_b": [],
    }
    for i in range(n_layers):
        in_ch = filters[i - 1] if i > 0 else f0
        out_ch = filters[i] if i > 0 else f0
        k = kernels[i]
        params["convT_w"].append(
            0.1 * jax.random.normal(keys[2 + 2 * i], (in_ch, out_ch, k, k), jnp.float32))
        params["convT_b"].append(
            0.1 * jax.random.normal(keys[3 + 2 * i], (out_ch,), jnp.float32))
    return params


if __name__ == "__main__":
    # Small, module-consistent configuration
    img_size = (8, 8)
    latent_z_dim = 16
    dec_convt_filters = [4, 4]
    dec_convt_kernel = [3, 3]
    dec_convt_strides = [2, 1]
    dec_convt_pad = [1, 1]
    batch = 2

    key = jax.random.PRNGKey(0)
    k_params, k_z = jax.random.split(key)
    params = make_params(k_params, img_size, latent_z_dim,
                         dec_convt_filters, dec_convt_kernel)
    z = jax.random.normal(k_z, (batch, latent_z_dim), jnp.float32)

    fwd = jax.jit(lambda p, zz: decoder_forward(
        p, zz, dec_convt_filters[0], dec_convt_strides, dec_convt_pad))
    out = jax.block_until_ready(fwd(params, z))

    ref = jax.block_until_ready(decoder_reference(
        params, z, dec_convt_filters[0], dec_convt_strides, dec_convt_pad))

    # layer0: (8-1)*2 - 2 + 3 = 15 ; layer1 (stride 1, pad 1, k 3) keeps 15
    assert out.shape == (batch, dec_convt_filters[-1], 15, 15), out.shape
    assert bool(jnp.all(jnp.isfinite(out)))
    assert bool(jnp.all((out >= 0.0) & (out <= 1.0)))        # sigmoid range
    max_err = float(jnp.max(jnp.abs(out - ref)))
    assert jnp.allclose(out, ref, atol=2e-2, rtol=2e-2), max_err

    print("KERNEL_OK")
</pallas_src>

<mosaic_0001>
module attributes {stable_mosaic.version = 11 : i64} {
  func.func @_dense_kernel(%arg0: i32, %arg1: i32, %arg2: i32, %arg3: memref<16x128xbf16, #tpu.memory_space<vmem>>, %arg4: memref<128x256xbf16, #tpu.memory_space<vmem>>, %arg5: memref<1x256xf32, #tpu.memory_space<vmem>>, %arg6: memref<16x256xf32, #tpu.memory_space<vmem>>, %arg7: memref<16x256xf32, #tpu.memory_space<vmem>>) attributes {dimension_semantics = [#tpu.dimension_semantics<parallel>, #tpu.dimension_semantics<parallel>, #tpu.dimension_semantics<arbitrary>], iteration_bounds = array<i64: 1, 1, 1>, scalar_prefetch = 0 : i64, scratch_operands = 1 : i64, tpu.core_type = #tpu.core_type<tc>, window_params = [{transform_indices = @transform_0, window_bounds = array<i64: 16, 128>}, {transform_indices = @transform_1, window_bounds = array<i64: 128, 256>}, {transform_indices = @transform_2, window_bounds = array<i64: 1, 256>}, {transform_indices = @transform_3, window_bounds = array<i64: 16, 256>}]} {
    %c0_i32 = arith.constant 0 : i32
    %0 = arith.cmpi eq, %arg2, %c0_i32 : i32
    %1 = arith.extui %0 : i1 to i32
    %c0_i32_0 = arith.constant 0 : i32
    %2 = arith.cmpi ne, %1, %c0_i32_0 : i32
    scf.if %2 {
      %cst_10 = arith.constant 0.000000e+00 : f32
      %12 = vector.broadcast %cst_10 : f32 to vector<16x256xf32>
      %c0_11 = arith.constant 0 : index
      %c0_12 = arith.constant 0 : index
      %13 = vector.load %arg7[%c0_11, %c0_12] : memref<16x256xf32, #tpu.memory_space<vmem>>, vector<16x256xf32>
      tpu.vector_store %arg7[%c0_11, %c0_12], %12 {strides = array<i32>} : memref<16x256xf32, #tpu.memory_space<vmem>>, vector<16x256xf32>,
    } else {
    }
    %c0 = arith.constant 0 : index
    %c0_1 = arith.constant 0 : index
    %3 = vector.load %arg7[%c0, %c0_1] : memref<16x256xf32, #tpu.memory_space<vmem>>, vector<16x256xf32>
    %c0_2 = arith.constant 0 : index
    %c0_3 = arith.constant 0 : index
    %4 = vector.load %arg3[%c0_2, %c0_3] : memref<16x128xbf16, #tpu.memory_space<vmem>>, vector<16x128xbf16>
    %c0_4 = arith.constant 0 : index
    %c0_5 = arith.constant 0 : index
    %5 = vector.load %arg4[%c0_4, %c0_5] : memref<128x256xbf16, #tpu.memory_space<vmem>>, vector<128x256xbf16>
    %cst = arith.constant dense<0.000000e+00> : vector<16x256xf32>
    %6 = tpu.matmul %4, %5, %cst {dimension_numbers = #tpu.dot_dimension_numbers<[1], [0], [0], [1], [0, 0, 1, 1], [], []>} : vector<16x128xbf16>, vector<128x256xbf16>, vector<16x256xf32> -> vector<16x256xf32>
    %7 = arith.addf %3, %6 : vector<16x256xf32>
    %c0_6 = arith.constant 0 : index
    %c0_7 = arith.constant 0 : index
    %8 = vector.load %arg7[%c0_6, %c0_7] : memref<16x256xf32, #tpu.memory_space<vmem>>, vector<16x256xf32>
    tpu.vector_store %arg7[%c0_6, %c0_7], %7 {strides = array<i32>} : memref<16x256xf32, #tpu.memory_space<vmem>>, vector<16x256xf32>,
    %c0_i32_8 = arith.constant 0 : i32
    %9 = arith.cmpi eq, %arg2, %c0_i32_8 : i32
    %10 = arith.extui %9 : i1 to i32
    %c0_i32_9 = arith.constant 0 : i32
    %11 = arith.cmpi ne, %10, %c0_i32_9 : i32
    scf.if %11 {
      %c0_10 = arith.constant 0 : index
      %c0_11 = arith.constant 0 : index
      %12 = vector.load %arg7[%c0_10, %c0_11] : memref<16x256xf32, #tpu.memory_space<vmem>>, vector<16x256xf32>
      %c0_12 = arith.constant 0 : index
      %c0_13 = arith.constant 0 : index
      %13 = vector.load %arg5[%c0_12, %c0_13] : memref<1x256xf32, #tpu.memory_space<vmem>>, vector<1x256xf32>
      %14 = vector.broadcast %13 : vector<1x256xf32> to vector<16x256xf32>
      %15 = arith.addf %12, %14 : vector<16x256xf32>
      %c0_14 = arith.constant 0 : index
      %c0_15 = arith.constant 0 : index
      %16 = vector.load %arg6[%c0_14, %c0_15] : memref<16x256xf32, #tpu.memory_space<vmem>>, vector<16x256xf32>
      tpu.vector_store %arg6[%c0_14, %c0_15], %15 {strides = array<i32>} : memref<16x256xf32, #tpu.memory_space<vmem>>, vector<16x256xf32>,
    } else {
    }
    return
  }
  func.func @transform_0(%arg0: i32, %arg1: i32, %arg2: i32) -> (i32, i32) {
    %c0_i32 = arith.constant 0 : i32
    return %arg0, %arg2 : i32, i32
  }
  func.func @transform_1(%arg0: i32, %arg1: i32, %arg2: i32) -> (i32, i32) {
    %c0_i32 = arith.constant 0 : i32
    return %arg2, %arg1 : i32, i32
  }
  func.func @transform_2(%arg0: i32, %arg1: i32, %arg2: i32) -> (i32, i32) {
    %c0_i32 = arith.constant 0 : i32
    %c0_i32_0 = arith.constant 0 : i32
    return %c0_i32, %arg1 : i32, i32
  }
  func.func @transform_3(%arg0: i32, %arg1: i32, %arg2: i32) -> (i32, i32) {
    %c0_i32 = arith.constant 0 : i32
    return %arg0, %arg1 : i32, i32
  }
}

module attributes {stable_mosaic.version = 11 : i64} {
  func.func @_convt_kernel(%arg0: i32, %arg1: memref<1x4x17x17xf32, #tpu.memory_space<vmem>>, %arg2: memref<144xf32, #tpu.memory_space<smem>>, %arg3: memref<4xf32, #tpu.memory_space<smem>>, %arg4: memref<1x4x15x15xf32, #tpu.memory_space<vmem>>) attributes {dimension_semantics = [#tpu.dimension_semantics<parallel>], iteration_bounds = array<i64: 2>, scalar_prefetch = 0 : i64, scratch_operands = 0 : i64, tpu.core_type = #tpu.core_type<tc>, window_params = [{transform_indices = @transform_0, window_bounds = array<i64: 1, 4, 17, 17>}, {transform_indices = @transform_1, window_bounds = array<i64: 144>}, {transform_indices = @transform_2, window_bounds = array<i64: 4>}, {transform_indices = @transform_3, window_bounds = array<i64: 1, 4, 15, 15>}]} {
    %cst = arith.constant 0.000000e+00 : f32
    %0 = vector.broadcast %cst : f32 to vector<1x15x15xf32>
    %cst_0 = arith.constant 0.000000e+00 : f32
    %1 = vector.broadcast %cst_0 : f32 to vector<1x15x15xf32>
    %cst_1 = arith.constant 0.000000e+00 : f32
    %2 = vector.broadcast %cst_1 : f32 to vector<1x15x15xf32>
    %cst_2 = arith.constant 0.000000e+00 : f32
    %3 = vector.broadcast %cst_2 : f32 to vector<1x15x15xf32>
    %c0 = arith.constant 0 : index
    %c0_3 = arith.constant 0 : index
    %c0_4 = arith.constant 0 : index
    %c0_5 = arith.constant 0 : index
    %4 = vector.load %arg1[%c0, %c0_3, %c0_4, %c0_5] : memref<1x4x17x17xf32, #tpu.memory_space<vmem>>, vector<1x1x15x15xf32>
    %5 = vector.shape_cast %4 : vector<1x1x15x15xf32> to vector<1x15x15xf32>
    %c0_6 = arith.constant 0 : index
    %6 = memref.load %arg2[%c0_6] : memref<144xf32, #tpu.memory_space<smem>>
    %7 = vector.broadcast %6 : f32 to vector<1x15x15xf32>
    %8 = arith.mulf %7, %5 : vector<1x15x15xf32>
    %9 = arith.addf %0, %8 : vector<1x15x15xf32>
    %c1 = arith.constant 1 : index
    %10 = memref.load %arg2[%c1] : memref<144xf32, #tpu.memory_space<smem>>
    %11 = vector.broadcast %10 : f32 to vector<1x15x15xf32>
    %12 = arith.mulf %11, %5 : vector<1x15x15xf32>
    %13 = arith.addf %1, %12 : vector<1x15x15xf32>
    %c2 = arith.constant 2 : index
    %14 = memref.load %arg2[%c2] : memref<144xf32, #tpu.memory_space<smem>>
    %15 = vector.broadcast %14 : f32 to vector<1x15x15xf32>
    %16 = arith.mulf %15, %5 : vector<1x15x15xf32>
    %17 = arith.addf %2, %16 : vector<1x15x15xf32>
    %c3 = arith.constant 3 : index
    %18 = memref.load %arg2[%c3] : memref<144xf32, #tpu.memory_space<smem>>
    %19 = vector.broadcast %18 : f32 to vector<1x15x15xf32>
    %20 = arith.mulf %19, %5 : vector<1x15x15xf32>
    %21 = arith.addf %3, %20 : vector<1x15x15xf32>
    %c0_7 = arith.constant 0 : index
    %c0_8 = arith.constant 0 : index
    %c0_9 = arith.constant 0 : index
    %c1_10 = arith.constant 1 : index
    %22 = vector.load %arg1[%c0_7, %c0_8, %c0_9, %c1_10] : memref<1x4x17x17xf32, #tpu.memory_space<vmem>>, vector<1x1x15x15xf32>
    %23 = vector.shape_cast %22 : vector<1x1x15x15xf32> to vector<1x15x15xf32>
    %c16 = arith.constant 16 : index
    %24 = memref.load %arg2[%c16] : memref<144xf32, #tpu.memory_space<smem>>
    %25 = vector.broadcast %24 : f32 to vector<1x15x15xf32>
    %26 = arith.mulf %25, %23 : vector<1x15x15xf32>
    %27 = arith.addf %9, %26 : vector<1x15x15xf32>
    %c17 = arith.constant 17 : index
    %28 = memref.load %arg2[%c17] : memref<144xf32, #tpu.memory_space<smem>>
    %29 = vector.broadcast %28 : f32 to vector<1x15x15xf32>
    %30 = arith.mulf %29, %23 : vector<1x15x15xf32>
    %31 = arith.addf %13, %30 : vector<1x15x15xf32>
    %c18 = arith.constant 18 : index
    %32 = memref.load %arg2[%c18] : memref<144xf32, #tpu.memory_space<smem>>
    %33 = vector.broadcast %32 : f32 to vector<1x15x15xf32>
    %34 = arith.mulf %33, %23 : vector<1x15x15xf32>
    %35 = arith.addf %17, %34 : vector<1x15x15xf32>
    %c19 = arith.constant 19 : index
    %36 = memref.load %arg2[%c19] : memref<144xf32, #tpu.memory_space<smem>>
    %37 = vector.broadcast %36 : f32 to vector<1x15x15xf32>
    %38 = arith.mulf %37, %23 : vector<1x15x15xf32>
    %39 = arith.addf %21, %38 : vector<1x15x15xf32>
    %c0_11 = arith.constant 0 : index
    %c0_12 = arith.constant 0 : index
    %c0_13 = arith.constant 0 : index
    %c2_14 = arith.constant 2 : index
    %40 = vector.load %arg1[%c0_11, %c0_12, %c0_13, %c2_14] : memref<1x4x17x17xf32, #tpu.memory_space<vmem>>, vector<1x1x15x15xf32>
    %41 = vector.shape_cast %40 : vector<1x1x15x15xf32> to vector<1x15x15xf32>
    %c32 = arith.constant 32 : index
    %42 = memref.load %arg2[%c32] : memref<144xf32, #tpu.memory_space<smem>>
    %43 = vector.broadcast %42 : f32 to vector<1x15x15xf32>
    %44 = arith.mulf %43, %41 : vector<1x15x15xf32>
    %45 = arith.addf %27, %44 : vector<1x15x15xf32>
    %c33 = arith.constant 33 : index
    %46 = memref.load %arg2[%c33] : memref<144xf32, #tpu.memory_space<smem>>
    %47 = vector.broadcast %46 : f32 to vector<1x15x15xf32>
    %48 = arith.mulf %47, %41 : vector<1x15x15xf32>
    %49 = arith.addf %31, %48 : vector<1x15x15xf32>
    %c34 = arith.constant 34 : index
    %50 = memref.load %arg2[%c34] : memref<144xf32, #tpu.memory_space<smem>>
    %51 = vector.broadcast %50 : f32 to vector<1x15x15xf32>
    %52 = arith.mulf %51, %41 : vector<1x15x15xf32>
    %53 = arith.addf %35, %52 : vector<1x15x15xf32>
    %c35 = arith.constant 35 : index
    %54 = memref.load %arg2[%c35] : memref<144xf32, #tpu.memory_space<smem>>
    %55 = vector.broadcast %54 : f32 to vector<1x15x15xf32>
    %56 = arith.mulf %55, %41 : vector<1x15x15xf32>
    %57 = arith.addf %39, %56 : vector<1x15x15xf32>
    %c0_15 = arith.constant 0 : index
    %c0_16 = arith.constant 0 : index
    %c1_17 = arith.constant 1 : index
    %c0_18 = arith.constant 0 : index
    %58 = vector.load %arg1[%c0_15, %c0_16, %c1_17, %c0_18] : memref<1x4x17x17xf32, #tpu.memory_space<vmem>>, vector<1x1x15x15xf32>
    %59 = vector.shape_cast %58 : vector<1x1x15x15xf32> to vector<1x15x15xf32>
    %c48 = arith.constant 48 : index
    %60 = memref.load %arg2[%c48] : memref<144xf32, #tpu.memory_space<smem>>
    %61 = vector.broadcast %60 : f32 to vector<1x15x15xf32>
    %62 = arith.mulf %61, %59 : vector<1x15x15xf32>
    %63 = arith.addf %45, %62 : vector<1x15x15xf32>
    %c49 = arith.constant 49 : index
    %64 = memref.load %arg2[%c49] : memref<144xf32, #tpu.memory_space<smem>>
    %65 = vector.broadcast %64 : f32 to vector<1x15x15xf32>
    %66 = arith.mulf %65, %59 : vector<1x15x15xf32>
    %67 = arith.addf %49, %66 : vector<1x15x15xf32>
    %c50 = arith.constant 50 : index
    %68 = memref.load %arg2[%c50] : memref<144xf32, #tpu.memory_space<smem>>
    %69 = vector.broadcast %68 : f32 to vector<1x15x15xf32>
    %70 = arith.mulf %69, %59 : vector<1x15x15xf32>
    %71 = arith.addf %53, %70 : vector<1x15x15xf32>
    %c51 = arith.constant 51 : index
    %72 = memref.load %arg2[%c51] : memref<144xf32, #tpu.memory_space<smem>>
    %73 = vector.broadcast %72 : f32 to vector<1x15x15xf32>
    %74 = arith.mulf %73, %59 : vector<1x15x15xf32>
    %75 = arith.addf %57, %74 : vector<1x15x15xf32>
    %c0_19 = arith.constant 0 : index
    %c0_20 = arith.constant 0 : index
    %c1_21 = arith.constant 1 : index
    %c1_22 = arith.constant 1 : index
    %76 = vector.load %arg1[%c0_19, %c0_20, %c1_21, %c1_22] : memref<1x4x17x17xf32, #tpu.memory_space<vmem>>, vector<1x1x15x15xf32>
    %77 = vector.shape_cast %76 : vector<1x1x15x15xf32> to vector<1x15x15xf32>
    %c64 = arith.constant 64 : index
    %78 = memref.load %arg2[%c64] : memref<144xf32, #tpu.memory_space<smem>>
    %79 = vector.broadcast %78 : f32 to vector<1x15x15xf32>
    %80 = arith.mulf %79, %77 : vector<1x15x15xf32>
    %81 = arith.addf %63, %80 : vector<1x15x15xf32>
    %c65 = arith.constant 65 : index
    %82 = memref.load %arg2[%c65] : memref<144xf32, #tpu.memory_space<smem>>
    %83 = vector.broadcast %82 : f32 to vector<1x15x15xf32>
    %84 = arith.mulf %83, %77 : vector<1x15x15xf32>
    %85 = arith.addf %67, %84 : vector<1x15x15xf32>
    %c66 = arith.constant 66 : index
    %86 = memref.load %arg2[%c66] : memref<144xf32, #tpu.memory_space<smem>>
    %87 = vector.broadcast %86 : f32 to vector<1x15x15xf32>
    %88 = arith.mulf %87, %77 : vector<1x15x15xf32>
    %89 = arith.addf %71, %88 : vector<1x15x15xf32>
    %c67 = arith.constant 67 : index
    %90 = memref.load %arg2[%c67] : memref<144xf32, #tpu.memory_space<smem>>
    %91 = vector.broadcast %90 : f32 to vector<1x15x15xf32>
    %92 = arith.mulf %91, %77 : vector<1x15x15xf32>
    %93 = arith.addf %75, %92 : vector<1x15x15xf32>
    %c0_23 = arith.constant 0 : index
    %c0_24 = arith.constant 0 : index
    %c1_25 = arith.constant 1 : index
    %c2_26 = arith.constant 2 : index
    %94 = vector.load %arg1[%c0_23, %c0_24, %c1_25, %c2_26] : memref<1x4x17x17xf32, #tpu.memory_space<vmem>>, vector<1x1x15x15xf32>
    %95 = vector.shape_cast %94 : vector<1x1x15x15xf32> to vector<1x15x15xf32>
    %c80 = arith.constant 80 : index
    %96 = memref.load %arg2[%c80] : memref<144xf32, #tpu.memory_space<smem>>
    %97 = vector.broadcast %96 : f32 to vector<1x15x15xf32>
    %98 = arith.mulf %97, %95 : vector<1x15x15xf32>
    %99 = arith.addf %81, %98 : vector<1x15x15xf32>
    %c81 = arith.constant 81 : index
    %100 = memref.load %arg2[%c81] : memref<144xf32, #tpu.memory_space<smem>>
    %101 = vector.broadcast %100 : f32 to vector<1x15x15xf32>
    %102 = arith.mulf %101, %95 : vector<1x15x15xf32>
    %103 = arith.addf %85, %102 : vector<1x15x15xf32>
    %c82 = arith.constant 82 : index
    %104 = memref.load %arg2[%c82] : memref<144xf32, #tpu.memory_space<smem>>
    %105 = vector.broadcast %104 : f32 to vector<1x15x15xf32>
    %106 = arith.mulf %105, %95 : vector<1x15x15xf32>
    %107 = arith.addf %89, %106 : vector<1x15x15xf32>
    %c83 = arith.constant 83 : index
    %108 = memref.load %arg2[%c83] : memref<144xf32, #tpu.memory_space<smem>>
    %109 = vector.broadcast %108 : f32 to vector<1x15x15xf32>
    %110 = arith.mulf %109, %95 : vector<1x15x15xf32>
    %111 = arith.addf %93, %110 : vector<1x15x15xf32>
    %c0_27 = arith.constant 0 : index
    %c0_28 = arith.constant 0 : index
    %c2_29 = arith.constant 2 : index
    %c0_30 = arith.constant 0 : index
    %112 = vector.load %arg1[%c0_27, %c0_28, %c2_29, %c0_30] : memref<1x4x17x17xf32, #tpu.memory_space<vmem>>, vector<1x1x15x15xf32>
    %113 = vector.shape_cast %112 : vector<1x1x15x15xf32> to vector<1x15x15xf32>
    %c96 = arith.constant 96 : index
    %114 = memref.load %arg2[%c96] : memref<144xf32, #tpu.memory_space<smem>>
    %115 = vector.broadcast %114 : f32 to vector<1x15x15xf32>
    %116 = arith.mulf %115, %113 : vector<1x15x15xf32>
    %117 = arith.addf %99, %116 : vector<1x15x15xf32>
    %c97 = arith.constant 97 : index
    %118 = memref.load %arg2[%c97] : memref<144xf32, #tpu.memory_space<smem>>
    %119 = vector.broadcast %118 : f32 to vector<1x15x15xf32>
    %120 = arith.mulf %119, %113 : vector<1x15x15xf32>
    %121 = arith.addf %103, %120 : vector<1x15x15xf32>
    %c98 = arith.constant 98 : index
    %122 = memref.load %arg2[%c98] : memref<144xf32, #tpu.memory_space<smem>>
    %123 = vector.broadcast %122 : f32 to vector<1x15x15xf32>
    %124 = arith.mulf %123, %113 : vector<1x15x15xf32>
    %125 = arith.addf %107, %124 : vector<1x15x15xf32>
    %c99 = arith.constant 99 : index
    %126 = memref.load %arg2[%c99] : memref<144xf32, #tpu.memory_space<smem>>
    %127 = vector.broadcast %126 : f32 to vector<1x15x15xf32>
    %128 = arith.mulf %127, %113 : vector<1x15x15xf32>
    %129 = arith.addf %111, %128 : vector<1x15x15xf32>
    %c0_31 = arith.constant 0 : index
    %c0_32 = arith.constant 0 : index
    %c2_33 = arith.constant 2 : index
    %c1_34 = arith.constant 1 : index
    %130 = vector.load %arg1[%c0_31, %c0_32, %c2_33, %c1_34] : memref<1x4x17x17xf32, #tpu.memory_space<vmem>>, vector<1x1x15x15xf32>
    %131 = vector.shape_cast %130 : vector<1x1x15x15xf32> to vector<1x15x15xf32>
    %c112 = arith.constant 112 : index
    %132 = memref.load %arg2[%c112] : memref<144xf32, #tpu.memory_space<smem>>
    %133 = vector.broadcast %132 : f32 to vector<1x15x15xf32>
    %134 = arith.mulf %133, %131 : vector<1x15x15xf32>
    %135 = arith.addf %117, %134 : vector<1x15x15xf32>
    %c113 = arith.constant 113 : index
    %136 = memref.load %arg2[%c113] : memref<144xf32, #tpu.memory_space<smem>>
    %137 = vector.broadcast %136 : f32 to vector<1x15x15xf32>
    %138 = arith.mulf %137, %131 : vector<1x15x15xf32>
    %139 = arith.addf %121, %138 : vector<1x15x15xf32>
    %c114 = arith.constant 114 : index
    %140 = memref.load %arg2[%c114] : memref<144xf32, #tpu.memory_space<smem>>
    %141 = vector.broadcast %140 : f32 to vector<1x15x15xf32>
    %142 = arith.mulf %141, %131 : vector<1x15x15xf32>
    %143 = arith.addf %125, %142 : vector<1x15x15xf32>
    %c115 = arith.constant 115 : index
    %144 = memref.load %arg2[%c115] : memref<144xf32, #tpu.memory_space<smem>>
    %145 = vector.broadcast %144 : f32 to vector<1x15x15xf32>
    %146 = arith.mulf %145, %131 : vector<1x15x15xf32>
    %147 = arith.addf %129, %146 : vector<1x15x15xf32>
    %c0_35 = arith.constant 0 : index
    %c0_36 = arith.constant 0 : index
    %c2_37 = arith.constant 2 : index
    %c2_38 = arith.constant 2 : index
    %148 = vector.load %arg1[%c0_35, %c0_36, %c2_37, %c2_38] : memref<1x4x17x17xf32, #tpu.memory_space<vmem>>, vector<1x1x15x15xf32>
    %149 = vector.shape_cast %148 : vector<1x1x15x15xf32> to vector<1x15x15xf32>
    %c128 = arith.constant 128 : index
    %150 = memref.load %arg2[%c128] : memref<144xf32, #tpu.memory_space<smem>>
    %151 = vector.broadcast %150 : f32 to vector<1x15x15xf32>
    %152 = arith.mulf %151, %149 : vector<1x15x15xf32>
    %153 = arith.addf %135, %152 : vector<1x15x15xf32>
    %c129 = arith.constant 129 : index
    %154 = memref.load %arg2[%c129] : memref<144xf32, #tpu.memory_space<smem>>
    %155 = vector.broadcast %154 : f32 to vector<1x15x15xf32>
    %156 = arith.mulf %155, %149 : vector<1x15x15xf32>
    %157 = arith.addf %139, %156 : vector<1x15x15xf32>
    %c130 = arith.constant 130 : index
    %158 = memref.load %arg2[%c130] : memref<144xf32, #tpu.memory_space<smem>>
    %159 = vector.broadcast %158 : f32 to vector<1x15x15xf32>
    %160 = arith.mulf %159, %149 : vector<1x15x15xf32>
    %161 = arith.addf %143, %160 : vector<1x15x15xf32>
    %c131 = arith.constant 131 : index
    %162 = memref.load %arg2[%c131] : memref<144xf32, #tpu.memory_space<smem>>
    %163 = vector.broadcast %162 : f32 to vector<1x15x15xf32>
    %164 = arith.mulf %163, %149 : vector<1x15x15xf32>
    %165 = arith.addf %147, %164 : vector<1x15x15xf32>
    %c0_39 = arith.constant 0 : index
    %c1_40 = arith.constant 1 : index
    %c0_41 = arith.constant 0 : index
    %c0_42 = arith.constant 0 : index
    %166 = vector.load %arg1[%c0_39, %c1_40, %c0_41, %c0_42] : memref<1x4x17x17xf32, #tpu.memory_space<vmem>>, vector<1x1x15x15xf32>
    %167 = vector.shape_cast %166 : vector<1x1x15x15xf32> to vector<1x15x15xf32>
    %c4 = arith.constant 4 : index
    %168 = memref.load %arg2[%c4] : memref<144xf32, #tpu.memory_space<smem>>
    %169 = vector.broadcast %168 : f32 to vector<1x15x15xf32>
    %170 = arith.mulf %169, %167 : vector<1x15x15xf32>
    %171 = arith.addf %153, %170 : vector<1x15x15xf32>
    %c5 = arith.constant 5 : index
    %172 = memref.load %arg2[%c5] : memref<144xf32, #tpu.memory_space<smem>>
    %173 = vector.broadcast %172 : f32 to vector<1x15x15xf32>
    %174 = arith.mulf %173, %167 : vector<1x15x15xf32>
    %175 = arith.addf %157, %174 : vector<1x15x15xf32>
    %c6 = arith.constant 6 : index
    %176 = memref.load %arg2[%c6] : memref<144xf32, #tpu.memory_space<smem>>
    %177 = vector.broadcast %176 : f32 to vector<1x15x15xf32>
    %178 = arith.mulf %177, %167 : vector<1x15x15xf32>
    %179 = arith.addf %161, %178 : vector<1x15x15xf32>
    %c7 = arith.constant 7 : index
    %180 = memref.load %arg2[%c7] : memref<144xf32, #tpu.memory_space<smem>>
    %181 = vector.broadcast %180 : f32 to vector<1x15x15xf32>
    %182 = arith.mulf %181, %167 : vector<1x15x15xf32>
    %183 = arith.addf %165, %182 : vector<1x15x15xf32>
    %c0_43 = arith.constant 0 : index
    %c1_44 = arith.constant 1 : index
    %c0_45 = arith.constant 0 : index
    %c1_46 = arith.constant 1 : index
    %184 = vector.load %arg1[%c0_43, %c1_44, %c0_45, %c1_46] : memref<1x4x17x17xf32, #tpu.memory_space<vmem>>, vector<1x1x15x15xf32>
    %185 = vector.shape_cast %184 : vector<1x1x15x15xf32> to vector<1x15x15xf32>
    %c20 = arith.constant 20 : index
    %186 = memref.load %arg2[%c20] : memref<144xf32, #tpu.memory_space<smem>>
    %187 = vector.broadcast %186 : f32 to vector<1x15x15xf32>
    %188 = arith.mulf %187, %185 : vector<1x15x15xf32>
    %189 = arith.addf %171, %188 : vector<1x15x15xf32>
    %c21 = arith.constant 21 : index
    %190 = memref.load %arg2[%c21] : memref<144xf32, #tpu.memory_space<smem>>
    %191 = vector.broadcast %190 : f32 to vector<1x15x15xf32>
    %192 = arith.mulf %191, %185 : vector<1x15x15xf32>
    %193 = arith.addf %175, %192 : vector<1x15x15xf32>
    %c22 = arith.constant 22 : index
    %194 = memref.load %arg2[%c22] : memref<144xf32, #tpu.memory_space<smem>>
    %195 = vector.broadcast %194 : f32 to vector<1x15x15xf32>
    %196 = arith.mulf %195, %185 : vector<1x15x15xf32>
    %197 = arith.addf %179, %196 : vector<1x15x15xf32>
    %c23 = arith.constant 23 : index
    %198 = memref.load %arg2[%c23] : memref<144xf32, #tpu.memory_space<smem>>
    %199 = vector.broadcast %198 : f32 to vector<1x15x15xf32>
    %200 = arith.mulf %199, %185 : vector<1x15x15xf32>
    %201 = arith.addf %183, %200 : vector<1x15x15xf32>
    %c0_47 = arith.constant 0 : index
    %c1_48 = arith.constant 1 : index
    %c0_49 = arith.constant 0 : index
    %c2_50 = arith.constant 2 : index
    %202 = vector.load %arg1[%c0_47, %c1_48, %c0_49, %c2_50] : memref<1x4x17x17xf32, #tpu.memory_space<vmem>>, vector<1x1x15x15xf32>
    %203 = vector.shape_cast %202 : vector<1x1x15x15xf32> to vector<1x15x15xf32>
    %c36 = arith.constant 36 : index
    %204 = memref.load %arg2[%c36] : memref<144xf32, #tpu.memory_space<smem>>
    %205 = vector.broadcast %204 : f32 to vector<1x15x15xf32>
    %206 = arith.mulf %205, %203 : vector<1x15x15xf32>
    %207 = arith.addf %189, %206 : vector<1x15x15xf32>
    %c37 = arith.constant 37 : index
    %208 = memref.load %arg2[%c37] : memref<144xf32, #tpu.memory_space<smem>>
    %209 = vector.broadcast %208 : f32 to vector<1x15x15xf32>
    %210 = arith.mulf %209, %203 : vector<1x15x15xf32>
    %211 = arith.addf %193, %210 : vector<1x15x15xf32>
    %c38 = arith.constant 38 : index
    %212 = memref.load %arg2[%c38] : memref<144xf32, #tpu.memory_space<smem>>
    %213 = vector.broadcast %212 : f32 to vector<1x15x15xf32>
    %214 = arith.mulf %213, %203 : vector<1x15x15xf32>
    %215 = arith.addf %197, %214 : vector<1x15x15xf32>
    %c39 = arith.constant 39 : index
    %216 = memref.load %arg2[%c39] : memref<144xf32, #tpu.memory_space<smem>>
    %217 = vector.broadcast %216 : f32 to vector<1x15x15xf32>
    %218 = arith.mulf %217, %203 : vector<1x15x15xf32>
    %219 = arith.addf %201, %218 : vector<1x15x15xf32>
    %c0_51 = arith.constant 0 : index
    %c1_52 = arith.constant 1 : index
    %c1_53 = arith.constant 1 : index
    %c0_54 = arith.constant 0 : index
    %220 = vector.load %arg1[%c0_51, %c1_52, %c1_53, %c0_54] : memref<1x4x17x17xf32, #tpu.memory_space<vmem>>, vector<1x1x15x15xf32>
    %221 = vector.shape_cast %220 : vector<1x1x15x15xf32> to vector<1x15x15xf32>
    %c52 = arith.constant 52 : index
    %222 = memref.load %arg2[%c52] : memref<144xf32, #tpu.memory_space<smem>>
    %223 = vector.broadcast %222 : f32 to vector<1x15x15xf32>
    %224 = arith.mulf %223, %221 : vector<1x15x15xf32>
    %225 = arith.addf %207, %224 : vector<1x15x15xf32>
    %c53 = arith.constant 53 : index
    %226 = memref.load %arg2[%c53] : memref<144xf32, #tpu.memory_space<smem>>
    %227 = vector.broadcast %226 : f32 to vector<1x15x15xf32>
    %228 = arith.mulf %227, %221 : vector<1x15x15xf32>
    %229 = arith.addf %211, %228 : vector<1x15x15xf32>
    %c54 = arith.constant 54 : index
    %230 = memref.load %arg2[%c54] : memref<144xf32, #tpu.memory_space<smem>>
    %231 = vector.broadcast %230 : f32 to vector<1x15x15xf32>
    %232 = arith.mulf %231, %221 : vector<1x15x15xf32>
    %233 = arith.addf %215, %232 : vector<1x15x15xf32>
    %c55 = arith.constant 55 : index
    %234 = memref.load %arg2[%c55] : memref<144xf32, #tpu.memory_space<smem>>
    %235 = vector.broadcast %234 : f32 to vector<1x15x15xf32>
    %236 = arith.mulf %235, %221 : vector<1x15x15xf32>
    %237 = arith.addf %219, %236 : vector<1x15x15xf32>
    %c0_55 = arith.constant 0 : index
    %c1_56 = arith.constant 1 : index
    %c1_57 = arith.constant 1 : index
    %c1_58 = arith.constant 1 : index
    %238 = vector.load %arg1[%c0_55, %c1_56, %c1_57, %c1_58] : memref<1x4x17x17xf32, #tpu.memory_space<vmem>>, vector<1x1x15x15xf32>
    %239 = vector.shape_cast %238 : vector<1x1x15x15xf32> to vector<1x15x15xf32>
    %c68 = arith.constant 68 : index
    %240 = memref.load %arg2[%c68] : memref<144xf32, #tpu.memory_space<smem>>
    %241 = vector.broadcast %240 : f32 to vector<1x15x15xf32>
    %242 = arith.mulf %241, %239 : vector<1x15x15xf32>
    %243 = arith.addf %225, %242 : vector<1x15x15xf32>
    %c69 = arith.constant 69 : index
    %244 = memref.load %arg2[%c69] : memref<144xf32, #tpu.memory_space<smem>>
    %245 = vector.broadcast %244 : f32 to vector<1x15x15xf32>
    %246 = arith.mulf %245, %239 : vector<1x15x15xf32>
    %247 = arith.addf %229, %246 : vector<1x15x15xf32>
    %c70 = arith.constant 70 : index
    %248 = memref.load %arg2[%c70] : memref<144xf32, #tpu.memory_space<smem>>
    %249 = vector.broadcast %248 : f32 to vector<1x15x15xf32>
    %250 = arith.mulf %249, %239 : vector<1x15x15xf32>
    %251 = arith.addf %233, %250 : vector<1x15x15xf32>
    %c71 = arith.constant 71 : index
    %252 = memref.load %arg2[%c71] : memref<144xf32, #tpu.memory_space<smem>>
    %253 = vector.broadcast %252 : f32 to vector<1x15x15xf32>
    %254 = arith.mulf %253, %239 : vector<1x15x15xf32>
    %255 = arith.addf %237, %254 : vector<1x15x15xf32>
    %c0_59 = arith.constant 0 : index
    %c1_60 = arith.constant 1 : index
    %c1_61 = arith.constant 1 : index
    %c2_62 = arith.constant 2 : index
    %256 = vector.load %arg1[%c0_59, %c1_60, %c1_61, %c2_62] : memref<1x4x17x17xf32, #tpu.memory_space<vmem>>, vector<1x1x15x15xf32>
    %257 = vector.shape_cast %256 : vector<1x1x15x15xf32> to vector<1x15x15xf32>
    %c84 = arith.constant 84 : index
    %258 = memref.load %arg2[%c84] : memref<144xf32, #tpu.memory_space<smem>>
    %259 = vector.broadcast %258 : f32 to vector<1x15x15xf32>
    %260 = arith.mulf %259, %257 : vector<1x15x15xf32>
    %261 = arith.addf %243, %260 : vector<1x15x15xf32>
    %c85 = arith.constant 85 : index
    %262 = memref.load %arg2[%c85] : memref<144xf32, #tpu.memory_space<smem>>
    %263 = vector.broadcast %262 : f32 to vector<1x15x15xf32>
    %264 = arith.mulf %263, %257 : vector<1x15x15xf32>
    %265 = arith.addf %247, %264 : vector<1x15x15xf32>
    %c86 = arith.constant 86 : index
    %266 = memref.load %arg2[%c86] : memref<144xf32, #tpu.memory_space<smem>>
    %267 = vector.broadcast %266 : f32 to vector<1x15x15xf32>
    %268 = arith.mulf %267, %257 : vector<1x15x15xf32>
    %269 = arith.addf %251, %268 : vector<1x15x15xf32>
    %c87 = arith.constant 87 : index
    %270 = memref.load %arg2[%c87] : memref<144xf32, #tpu.memory_space<smem>>
    %271 = vector.broadcast %270 : f32 to vector<1x15x15xf32>
    %272 = arith.mulf %271, %257 : vector<1x15x15xf32>
    %273 = arith.addf %255, %272 : vector<1x15x15xf32>
    %c0_63 = arith.constant 0 : index
    %c1_64 = arith.constant 1 : index
    %c2_65 = arith.constant 2 : index
    %c0_66 = arith.constant 0 : index
    %274 = vector.load %arg1[%c0_63, %c1_64, %c2_65, %c0_66] : memref<1x4x17x17xf32, #tpu.memory_space<vmem>>, vector<1x1x15x15xf32>
    %275 = vector.shape_cast %274 : vector<1x1x15x15xf32> to vector<1x15x15xf32>
    %c100 = arith.constant 100 : index
    %276 = memref.load %arg2[%c100] : memref<144xf32, #tpu.memory_space<smem>>
    %277 = vector.broadcast %276 : f32 to vector<1x15x15xf32>
    %278 = arith.mulf %277, %275 : vector<1x15x15xf32>
    %279 = arith.addf %261, %278 : vector<1x15x15xf32>
    %c101 = arith.constant 101 : index
    %280 = memref.load %arg2[%c101] : memref<144xf32, #tpu.memory_space<smem>>
    %281 = vector.broadcast %280 : f32 to vector<1x15x15xf32>
    %282 = arith.mulf %281, %275 : vector<1x15x15xf32>
    %283 = arith.addf %265, %282 : vector<1x15x15xf32>
    %c102 = arith.constant 102 : index
    %284 = memref.load %arg2[%c102] : memref<144xf32, #tpu.memory_space<smem>>
    %285 = vector.broadcast %284 : f32 to vector<1x15x15xf32>
    %286 = arith.mulf %285, %275 : vector<1x15x15xf32>
    %287 = arith.addf %269, %286 : vector<1x15x15xf32>
    %c103 = arith.constant 103 : index
    %288 = memref.load %arg2[%c103] : memref<144xf32, #tpu.memory_space<smem>>
    %289 = vector.broadcast %288 : f32 to vector<1x15x15xf32>
    %290 = arith.mulf %289, %275 : vector<1x15x15xf32>
    %291 = arith.addf %273, %290 : vector<1x15x15xf32>
    %c0_67 = arith.constant 0 : index
    %c1_68 = arith.constant 1 : index
    %c2_69 = arith.constant 2 : index
    %c1_70 = arith.constant 1 : index
    %292 = vector.load %arg1[%c0_67, %c1_68, %c2_69, %c1_70] : memref<1x4x17x17xf32, #tpu.memory_space<vmem>>, vector<1x1x15x15xf32>
    %293 = vector.shape_cast %292 : vector<1x1x15x15xf32> to vector<1x15x15xf32>
    %c116 = arith.constant 116 : index
    %294 = memref.load %arg2[%c116] : memref<144xf32, #tpu.memory_space<smem>>
    %295 = vector.broadcast %294 : f32 to vector<1x15x15xf32>
    %296 = arith.mulf %295, %293 : vector<1x15x15xf32>
    %297 = arith.addf %279, %296 : vector<1x15x15xf32>
    %c117 = arith.constant 117 : index
    %298 = memref.load %arg2[%c117] : memref<144xf32, #tpu.memory_space<smem>>
    %299 = vector.broadcast %298 : f32 to vector<1x15x15xf32>
    %300 = arith.mulf %299, %293 : vector<1x15x15xf32>
    %301 = arith.addf %283, %300 : vector<1x15x15xf32>
    %c118 = arith.constant 118 : index
    %302 = memref.load %arg2[%c118] : memref<144xf32, #tpu.memory_space<smem>>
    %303 = vector.broadcast %302 : f32 to vector<1x15x15xf32>
    %304 = arith.mulf %303, %293 : vector<1x15x15xf32>
    %305 = arith.addf %287, %304 : vector<1x15x15xf32>
    %c119 = arith.constant 119 : index
    %306 = memref.load %arg2[%c119] : memref<144xf32, #tpu.memory_space<smem>>
    %307 = vector.broadcast %306 : f32 to vector<1x15x15xf32>
    %308 = arith.mulf %307, %293 : vector<1x15x15xf32>
    %309 = arith.addf %291, %308 : vector<1x15x15xf32>
    %c0_71 = arith.constant 0 : index
    %c1_72 = arith.constant 1 : index
    %c2_73 = arith.constant 2 : index
    %c2_74 = arith.constant 2 : index
    %310 = vector.load %arg1[%c0_71, %c1_72, %c2_73, %c2_74] : memref<1x4x17x17xf32, #tpu.memory_space<vmem>>, vector<1x1x15x15xf32>
    %311 = vector.shape_cast %310 : vector<1x1x15x15xf32> to vector<1x15x15xf32>
    %c132 = arith.constant 132 : index
    %312 = memref.load %arg2[%c132] : memref<144xf32, #tpu.memory_space<smem>>
    %313 = vector.broadcast %312 : f32 to vector<1x15x15xf32>
    %314 = arith.mulf %313, %311 : vector<1x15x15xf32>
    %315 = arith.addf %297, %314 : vector<1x15x15xf32>
    %c133 = arith.constant 133 : index
    %316 = memref.load %arg2[%c133] : memref<144xf32, #tpu.memory_space<smem>>
    %317 = vector.broadcast %316 : f32 to vector<1x15x15xf32>
    %318 = arith.mulf %317, %311 : vector<1x15x15xf32>
    %319 = arith.addf %301, %318 : vector<1x15x15xf32>
    %c134 = arith.constant 134 : index
    %320 = memref.load %arg2[%c134] : memref<144xf32, #tpu.memory_space<smem>>
    %321 = vector.broadcast %320 : f32 to vector<1x15x15xf32>
    %322 = arith.mulf %321, %311 : vector<1x15x15xf32>
    %323 = arith.addf %305, %322 : vector<1x15x15xf32>
    %c135 = arith.constant 135 : index
    %324 = memref.load %arg2[%c135] : memref<144xf32, #tpu.memory_space<smem>>
    %325 = vector.broadcast %324 : f32 to vector<1x15x15xf32>
    %326 = arith.mulf %325, %311 : vector<1x15x15xf32>
    %327 = arith.addf %309, %326 : vector<1x15x15xf32>
    %c0_75 = arith.constant 0 : index
    %c2_76 = arith.constant 2 : index
    %c0_77 = arith.constant 0 : index
    %c0_78 = arith.constant 0 : index
    %328 = vector.load %arg1[%c0_75, %c2_76, %c0_77, %c0_78] : memref<1x4x17x17xf32, #tpu.memory_space<vmem>>, vector<1x1x15x15xf32>
    %329 = vector.shape_cast %328 : vector<1x1x15x15xf32> to vector<1x15x15xf32>
    %c8 = arith.constant 8 : index
    %330 = memref.load %arg2[%c8] : memref<144xf32, #tpu.memory_space<smem>>
    %331 = vector.broadcast %330 : f32 to vector<1x15x15xf32>
    %332 = arith.mulf %331, %329 : vector<1x15x15xf32>
    %333 = arith.addf %315, %332 : vector<1x15x15xf32>
    %c9 = arith.constant 9 : index
    %334 = memref.load %arg2[%c9] : memref<144xf32, #tpu.memory_space<smem>>
    %335 = vector.broadcast %334 : f32 to vector<1x15x15xf32>
    %336 = arith.mulf %335, %329 : vector<1x15x15xf32>
    %337 = arith.addf %319, %336 : vector<1x15x15xf32>
    %c10 = arith.constant 10 : index
    %338 = memref.load %arg2[%c10] : memref<144xf32, #tpu.memory_space<smem>>
    %339 = vector.broadcast %338 : f32 to vector<1x15x15xf32>
    %340 = arith.mulf %339, %329 : vector<1x15x15xf32>
    %341 = arith.addf %323, %340 : vector<1x15x15xf32>
    %c11 = arith.constant 11 : index
    %342 = memref.load %arg2[%c11] : memref<144xf32, #tpu.memory_space<smem>>
    %343 = vector.broadcast %342 : f32 to vector<1x15x15xf32>
    %344 = arith.mulf %343, %329 : vector<1x15x15xf32>
    %345 = arith.addf %327, %344 : vector<1x15x15xf32>
    %c0_79 = arith.constant 0 : index
    %c2_80 = arith.constant 2 : index
    %c0_81 = arith.constant 0 : index
    %c1_82 = arith.constant 1 : index
    %346 = vector.load %arg1[%c0_79, %c2_80, %c0_81, %c1_82] : memref<1x4x17x17xf32, #tpu.memory_space<vmem>>, vector<1x1x15x15xf32>
    %347 = vector.shape_cast %346 : vector<1x1x15x15xf32> to vector<1x15x15xf32>
    %c24 = arith.constant 24 : index
    %348 = memref.load %arg2[%c24] : memref<144xf32, #tpu.memory_space<smem>>
    %349 = vector.broadcast %348 : f32 to vector<1x15x15xf32>
    %350 = arith.mulf %349, %347 : vector<1x15x15xf32>
    %351 = arith.addf %333, %350 : vector<1x15x15xf32>
    %c25 = arith.constant 25 : index
    %352 = memref.load %arg2[%c25] : memref<144xf32, #tpu.memory_space<smem>>
    %353 = vector.broadcast %352 : f32 to vector<1x15x15xf32>
    %354 = arith.mulf %353, %347 : vector<1x15x15xf32>
    %355 = arith.addf %337, %354 : vector<1x15x15xf32>
    %c26 = arith.constant 26 : index
    %356 = memref.load %arg2[%c26] : memref<144xf32, #tpu.memory_space<smem>>
    %357 = vector.broadcast %356 : f32 to vector<1x15x15xf32>
    %358 = arith.mulf %357, %347 : vector<1x15x15xf32>
    %359 = arith.addf %341, %358 : vector<1x15x15xf32>
    %c27 = arith.constant 27 : index
    %360 = memref.load %arg2[%c27] : memref<144xf32, #tpu.memory_space<smem>>
    %361 = vector.broadcast %360 : f32 to vector<1x15x15xf32>
    %362 = arith.mulf %361, %347 : vector<1x15x15xf32>
    %363 = arith.addf %345, %362 : vector<1x15x15xf32>
    %c0_83 = arith.constant 0 : index
    %c2_84 = arith.constant 2 : index
    %c0_85 = arith.constant 0 : index
    %c2_86 = arith.constant 2 : index
    %364 = vector.load %arg1[%c0_83, %c2_84, %c0_85, %c2_86] : memref<1x4x17x17xf32, #tpu.memory_space<vmem>>, vector<1x1x15x15xf32>
    %365 = vector.shape_cast %364 : vector<1x1x15x15xf32> to vector<1x15x15xf32>
    %c40 = arith.constant 40 : index
    %366 = memref.load %arg2[%c40] : memref<144xf32, #tpu.memory_space<smem>>
    %367 = vector.broadcast %366 : f32 to vector<1x15x15xf32>
    %368 = arith.mulf %367, %365 : vector<1x15x15xf32>
    %369 = arith.addf %351, %368 : vector<1x15x15xf32>
    %c41 = arith.constant 41 : index
    %370 = memref.load %arg2[%c41] : memref<144xf32, #tpu.memory_space<smem>>
    %371 = vector.broadcast %370 : f32 to vector<1x15x15xf32>
    %372 = arith.mulf %371, %365 : vector<1x15x15xf32>
    %373 = arith.addf %355, %372 : vector<1x15x15xf32>
    %c42 = arith.constant 42 : index
    %374 = memref.load %arg2[%c42] : memref<144xf32, #tpu.memory_space<smem>>
    %375 = vector.broadcast %374 : f32 to vector<1x15x15xf32>
    %376 = arith.mulf %375, %365 : vector<1x15x15xf32>
    %377 = arith.addf %359, %376 : vector<1x15x15xf32>
    %c43 = arith.constant 43 : index
    %378 = memref.load %arg2[%c43] : memref<144xf32, #tpu.memory_space<smem>>
    %379 = vector.broadcast %378 : f32 to vector<1x15x15xf32>
    %380 = arith.mulf %379, %365 : vector<1x15x15xf32>
    %381 = arith.addf %363, %380 : vector<1x15x15xf32>
    %c0_87 = arith.constant 0 : index
    %c2_88 = arith.constant 2 : index
    %c1_89 = arith.constant 1 : index
    %c0_90 = arith.constant 0 : index
    %382 = vector.load %arg1[%c0_87, %c2_88, %c1_89, %c0_90] : memref<1x4x17x17xf32, #tpu.memory_space<vmem>>, vector<1x1x15x15xf32>
    %383 = vector.shape_cast %382 : vector<1x1x15x15xf32> to vector<1x15x15xf32>
    %c56 = arith.constant 56 : index
    %384 = memref.load %arg2[%c56] : memref<144xf32, #tpu.memory_space<smem>>
    %385 = vector.broadcast %384 : f32 to vector<1x15x15xf32>
    %386 = arith.mulf %385, %383 : vector<1x15x15xf32>
    %387 = arith.addf %369, %386 : vector<1x15x15xf32>
    %c57 = arith.constant 57 : index
    %388 = memref.load %arg2[%c57] : memref<144xf32, #tpu.memory_space<smem>>
    %389 = vector.broadcast %388 : f32 to vector<1x15x15xf32>
    %390 = arith.mulf %389, %383 : vector<1x15x15xf32>
    %391 = arith.addf %373, %390 : vector<1x15x15xf32>
    %c58 = arith.constant 58 : index
    %392 = memref.load %arg2[%c58] : memref<144xf32, #tpu.memory_space<smem>>
    %393 = vector.broadcast %392 : f32 to vector<1x15x15xf32>
    %394 = arith.mulf %393, %383 : vector<1x15x15xf32>
    %395 = arith.addf %377, %394 : vector<1x15x15xf32>
    %c59 = arith.constant 59 : index
    %396 = memref.load %arg2[%c59] : memref<144xf32, #tpu.memory_space<smem>>
    %397 = vector.broadcast %396 : f32 to vector<1x15x15xf32>
    %398 = arith.mulf %397, %383 : vector<1x15x15xf32>
    %399 = arith.addf %381, %398 : vector<1x15x15xf32>
    %c0_91 = arith.constant 0 : index
    %c2_92 = arith.constant 2 : index
    %c1_93 = arith.constant 1 : index
    %c1_94 = arith.constant 1 : index
    %400 = vector.load %arg1[%c0_91, %c2_92, %c1_93, %c1_94] : memref<1x4x17x17xf32, #tpu.memory_space<vmem>>, vector<1x1x15x15xf32>
    %401 = vector.shape_cast %400 : vector<1x1x15x15xf32> to vector<1x15x15xf32>
    %c72 = arith.constant 72 : index
    %402 = memref.load %arg2[%c72] : memref<144xf32, #tpu.memory_space<smem>>
    %403 = vector.broadcast %402 : f32 to vector<1x15x15xf32>
    %404 = arith.mulf %403, %401 : vector<1x15x15xf32>
    %405 = arith.addf %387, %404 : vector<1x15x15xf32>
    %c73 = arith.constant 73 : index
    %406 = memref.load %arg2[%c73] : memref<144xf32, #tpu.memory_space<smem>>
    %407 = vector.broadcast %406 : f32 to vector<1x15x15xf32>
    %408 = arith.mulf %407, %401 : vector<1x15x15xf32>
    %409 = arith.addf %391, %408 : vector<1x15x15xf32>
    %c74 = arith.constant 74 : index
    %410 = memref.load %arg2[%c74] : memref<144xf32, #tpu.memory_space<smem>>
    %411 = vector.broadcast %410 : f32 to vector<1x15x15xf32>
    %412 = arith.mulf %411, %401 : vector<1x15x15xf32>
    %413 = arith.addf %395, %412 : vector<1x15x15xf32>
    %c75 = arith.constant 75 : index
    %414 = memref.load %arg2[%c75] : memref<144xf32, #tpu.memory_space<smem>>
    %415 = vector.broadcast %414 : f32 to vector<1x15x15xf32>
    %416 = arith.mulf %415, %401 : vector<1x15x15xf32>
    %417 = arith.addf %399, %416 : vector<1x15x15xf32>
    %c0_95 = arith.constant 0 : index
    %c2_96 = arith.constant 2 : index
    %c1_97 = arith.constant 1 : index
    %c2_98 = arith.constant 2 : index
    %418 = vector.load %arg1[%c0_95, %c2_96, %c1_97, %c2_98] : memref<1x4x17x17xf32, #tpu.memory_space<vmem>>, vector<1x1x15x15xf32>
    %419 = vector.shape_cast %418 : vector<1x1x15x15xf32> to vector<1x15x15xf32>
    %c88 = arith.constant 88 : index
    %420 = memref.load %arg2[%c88] : memref<144xf32, #tpu.memory_space<smem>>
    %421 = vector.broadcast %420 : f32 to vector<1x15x15xf32>
    %422 = arith.mulf %421, %419 : vector<1x15x15xf32>
    %423 = arith.addf %405, %422 : vector<1x15x15xf32>
    %c89 = arith.constant 89 : index
    %424 = memref.load %arg2[%c89] : memref<144xf32, #tpu.memory_space<smem>>
    %425 = vector.broadcast %424 : f32 to vector<1x15x15xf32>
    %426 = arith.mulf %425, %419 : vector<1x15x15xf32>
    %427 = arith.addf %409, %426 : vector<1x15x15xf32>
    %c90 = arith.constant 90 : index
    %428 = memref.load %arg2[%c90] : memref<144xf32, #tpu.memory_space<smem>>
    %429 = vector.broadcast %428 : f32 to vector<1x15x15xf32>
    %430 = arith.mulf %429, %419 : vector<1x15x15xf32>
    %431 = arith.addf %413, %430 : vector<1x15x15xf32>
    %c91 = arith.constant 91 : index
    %432 = memref.load %arg2[%c91] : memref<144xf32, #tpu.memory_space<smem>>
    %433 = vector.broadcast %432 : f32 to vector<1x15x15xf32>
    %434 = arith.mulf %433, %419 : vector<1x15x15xf32>
    %435 = arith.addf %417, %434 : vector<1x15x15xf32>
    %c0_99 = arith.constant 0 : index
    %c2_100 = arith.constant 2 : index
    %c2_101 = arith.constant 2 : index
    %c0_102 = arith.constant 0 : index
    %436 = vector.load %arg1[%c0_99, %c2_100, %c2_101, %c0_102] : memref<1x4x17x17xf32, #tpu.memory_space<vmem>>, vector<1x1x15x15xf32>
    %437 = vector.shape_cast %436 : vector<1x1x15x15xf32> to vector<1x15x15xf32>
    %c104 = arith.constant 104 : index
    %438 = memref.load %arg2[%c104] : memref<144xf32, #tpu.memory_space<smem>>
    %439 = vector.broadcast %438 : f32 to vector<1x15x15xf32>
    %440 = arith.mulf %439, %437 : vector<1x15x15xf32>
    %441 = arith.addf %423, %440 : vector<1x15x15xf32>
    %c105 = arith.constant 105 : index
    %442 = memref.load %arg2[%c105] : memref<144xf32, #tpu.memory_space<smem>>
    %443 = vector.broadcast %442 : f32 to vector<1x15x15xf32>
    %444 = arith.mulf %443, %437 : vector<1x15x15xf32>
    %445 = arith.addf %427, %444 : vector<1x15x15xf32>
    %c106 = arith.constant 106 : index
    %446 = memref.load %arg2[%c106] : memref<144xf32, #tpu.memory_space<smem>>
    %447 = vector.broadcast %446 : f32 to vector<1x15x15xf32>
    %448 = arith.mulf %447, %437 : vector<1x15x15xf32>
    %449 = arith.addf %431, %448 : vector<1x15x15xf32>
    %c107 = arith.constant 107 : index
    %450 = memref.load %arg2[%c107] : memref<144xf32, #tpu.memory_space<smem>>
    %451 = vector.broadcast %450 : f32 to vector<1x15x15xf32>
    %452 = arith.mulf %451, %437 : vector<1x15x15xf32>
    %453 = arith.addf %435, %452 : vector<1x15x15xf32>
    %c0_103 = arith.constant 0 : index
    %c2_104 = arith.constant 2 : index
    %c2_105 = arith.constant 2 : index
    %c1_106 = arith.constant 1 : index
    %454 = vector.load %arg1[%c0_103, %c2_104, %c2_105, %c1_106] : memref<1x4x17x17xf32, #tpu.memory_space<vmem>>, vector<1x1x15x15xf32>
    %455 = vector.shape_cast %454 : vector<1x1x15x15xf32> to vector<1x15x15xf32>
    %c120 = arith.constant 120 : index
    %456 = memref.load %arg2[%c120] : memref<144xf32, #tpu.memory_space<smem>>
    %457 = vector.broadcast %456 : f32 to vector<1x15x15xf32>
    %458 = arith.mulf %457, %455 : vector<1x15x15xf32>
    %459 = arith.addf %441, %458 : vector<1x15x15xf32>
    %c121 = arith.constant 121 : index
    %460 = memref.load %arg2[%c121] : memref<144xf32, #tpu.memory_space<smem>>
    %461 = vector.broadcast %460 : f32 to vector<1x15x15xf32>
    %462 = arith.mulf %461, %455 : vector<1x15x15xf32>
    %463 = arith.addf %445, %462 : vector<1x15x15xf32>
    %c122 = arith.constant 122 : index
    %464 = memref.load %arg2[%c122] : memref<144xf32, #tpu.memory_space<smem>>
    %465 = vector.broadcast %464 : f32 to vector<1x15x15xf32>
    %466 = arith.mulf %465, %455 : vector<1x15x15xf32>
    %467 = arith.addf %449, %466 : vector<1x15x15xf32>
    %c123 = arith.constant 123 : index
    %468 = memref.load %arg2[%c123] : memref<144xf32, #tpu.memory_space<smem>>
    %469 = vector.broadcast %468 : f32 to vector<1x15x15xf32>
    %470 = arith.mulf %469, %455 : vector<1x15x15xf32>
    %471 = arith.addf %453, %470 : vector<1x15x15xf32>
    %c0_107 = arith.constant 0 : index
    %c2_108 = arith.constant 2 : index
    %c2_109 = arith.constant 2 : index
    %c2_110 = arith.constant 2 : index
    %472 = vector.load %arg1[%c0_107, %c2_108, %c2_109, %c2_110] : memref<1x4x17x17xf32, #tpu.memory_space<vmem>>, vector<1x1x15x15xf32>
    %473 = vector.shape_cast %472 : vector<1x1x15x15xf32> to vector<1x15x15xf32>
    %c136 = arith.constant 136 : index
    %474 = memref.load %arg2[%c136] : memref<144xf32, #tpu.memory_space<smem>>
    %475 = vector.broadcast %474 : f32 to vector<1x15x15xf32>
    %476 = arith.mulf %475, %473 : vector<1x15x15xf32>
    %477 = arith.addf %459, %476 : vector<1x15x15xf32>
    %c137 = arith.constant 137 : index
    %478 = memref.load %arg2[%c137] : memref<144xf32, #tpu.memory_space<smem>>
    %479 = vector.broadcast %478 : f32 to vector<1x15x15xf32>
    %480 = arith.mulf %479, %473 : vector<1x15x15xf32>
    %481 = arith.addf %463, %480 : vector<1x15x15xf32>
    %c138 = arith.constant 138 : index
    %482 = memref.load %arg2[%c138] : memref<144xf32, #tpu.memory_space<smem>>
    %483 = vector.broadcast %482 : f32 to vector<1x15x15xf32>
    %484 = arith.mulf %483, %473 : vector<1x15x15xf32>
    %485 = arith.addf %467, %484 : vector<1x15x15xf32>
    %c139 = arith.constant 139 : index
    %486 = memref.load %arg2[%c139] : memref<144xf32, #tpu.memory_space<smem>>
    %487 = vector.broadcast %486 : f32 to vector<1x15x15xf32>
    %488 = arith.mulf %487, %473 : vector<1x15x15xf32>
    %489 = arith.addf %471, %488 : vector<1x15x15xf32>
    %c0_111 = arith.constant 0 : index
    %c3_112 = arith.constant 3 : index
    %c0_113 = arith.constant 0 : index
    %c0_114 = arith.constant 0 : index
    %490 = vector.load %arg1[%c0_111, %c3_112, %c0_113, %c0_114] : memref<1x4x17x17xf32, #tpu.memory_space<vmem>>, vector<1x1x15x15xf32>
    %491 = vector.shape_cast %490 : vector<1x1x15x15xf32> to vector<1x15x15xf32>
    %c12 = arith.constant 12 : index
    %492 = memref.load %arg2[%c12] : memref<144xf32, #tpu.memory_space<smem>>
    %493 = vector.broadcast %492 : f32 to vector<1x15x15xf32>
    %494 = arith.mulf %493, %491 : vector<1x15x15xf32>
    %495 = arith.addf %477, %494 : vector<1x15x15xf32>
    %c13 = arith.constant 13 : index
    %496 = memref.load %arg2[%c13] : memref<144xf32, #tpu.memory_space<smem>>
    %497 = vector.broadcast %496 : f32 to vector<1x15x15xf32>
    %498 = arith.mulf %497, %491 : vector<1x15x15xf32>
    %499 = arith.addf %481, %498 : vector<1x15x15xf32>
    %c14 = arith.constant 14 : index
    %500 = memref.load %arg2[%c14] : memref<144xf32, #tpu.memory_space<smem>>
    %501 = vector.broadcast %500 : f32 to vector<1x15x15xf32>
    %502 = arith.mulf %501, %491 : vector<1x15x15xf32>
    %503 = arith.addf %485, %502 : vector<1x15x15xf32>
    %c15 = arith.constant 15 : index
    %504 = memref.load %arg2[%c15] : memref<144xf32, #tpu.memory_space<smem>>
    %505 = vector.broadcast %504 : f32 to vector<1x15x15xf32>
    %506 = arith.mulf %505, %491 : vector<1x15x15xf32>
    %507 = arith.addf %489, %506 : vector<1x15x15xf32>
    %c0_115 = arith.constant 0 : index
    %c3_116 = arith.constant 3 : index
    %c0_117 = arith.constant 0 : index
    %c1_118 = arith.constant 1 : index
    %508 = vector.load %arg1[%c0_115, %c3_116, %c0_117, %c1_118] : memref<1x4x17x17xf32, #tpu.memory_space<vmem>>, vector<1x1x15x15xf32>
    %509 = vector.shape_cast %508 : vector<1x1x15x15xf32> to vector<1x15x15xf32>
    %c28 = arith.constant 28 : index
    %510 = memref.load %arg2[%c28] : memref<144xf32, #tpu.memory_space<smem>>
    %511 = vector.broadcast %510 : f32 to vector<1x15x15xf32>
    %512 = arith.mulf %511, %509 : vector<1x15x15xf32>
    %513 = arith.addf %495, %512 : vector<1x15x15xf32>
    %c29 = arith.constant 29 : index
    %514 = memref.load %arg2[%c29] : memref<144xf32, #tpu.memory_space<smem>>
    %515 = vector.broadcast %514 : f32 to vector<1x15x15xf32>
    %516 = arith.mulf %515, %509 : vector<1x15x15xf32>
    %517 = arith.addf %499, %516 : vector<1x15x15xf32>
    %c30 = arith.constant 30 : index
    %518 = memref.load %arg2[%c30] : memref<144xf32, #tpu.memory_space<smem>>
    %519 = vector.broadcast %518 : f32 to vector<1x15x15xf32>
    %520 = arith.mulf %519, %509 : vector<1x15x15xf32>
    %521 = arith.addf %503, %520 : vector<1x15x15xf32>
    %c31 = arith.constant 31 : index
    %522 = memref.load %arg2[%c31] : memref<144xf32, #tpu.memory_space<smem>>
    %523 = vector.broadcast %522 : f32 to vector<1x15x15xf32>
    %524 = arith.mulf %523, %509 : vector<1x15x15xf32>
    %525 = arith.addf %507, %524 : vector<1x15x15xf32>
    %c0_119 = arith.constant 0 : index
    %c3_120 = arith.constant 3 : index
    %c0_121 = arith.constant 0 : index
    %c2_122 = arith.constant 2 : index
    %526 = vector.load %arg1[%c0_119, %c3_120, %c0_121, %c2_122] : memref<1x4x17x17xf32, #tpu.memory_space<vmem>>, vector<1x1x15x15xf32>
    %527 = vector.shape_cast %526 : vector<1x1x15x15xf32> to vector<1x15x15xf32>
    %c44 = arith.constant 44 : index
    %528 = memref.load %arg2[%c44] : memref<144xf32, #tpu.memory_space<smem>>
    %529 = vector.broadcast %528 : f32 to vector<1x15x15xf32>
    %530 = arith.mulf %529, %527 : vector<1x15x15xf32>
    %531 = arith.addf %513, %530 : vector<1x15x15xf32>
    %c45 = arith.constant 45 : index
    %532 = memref.load %arg2[%c45] : memref<144xf32, #tpu.memory_space<smem>>
    %533 = vector.broadcast %532 : f32 to vector<1x15x15xf32>
    %534 = arith.mulf %533, %527 : vector<1x15x15xf32>
    %535 = arith.addf %517, %534 : vector<1x15x15xf32>
    %c46 = arith.constant 46 : index
    %536 = memref.load %arg2[%c46] : memref<144xf32, #tpu.memory_space<smem>>
    %537 = vector.broadcast %536 : f32 to vector<1x15x15xf32>
    %538 = arith.mulf %537, %527 : vector<1x15x15xf32>
    %539 = arith.addf %521, %538 : vector<1x15x15xf32>
    %c47 = arith.constant 47 : index
    %540 = memref.load %arg2[%c47] : memref<144xf32, #tpu.memory_space<smem>>
    %541 = vector.broadcast %540 : f32 to vector<1x15x15xf32>
    %542 = arith.mulf %541, %527 : vector<1x15x15xf32>
    %543 = arith.addf %525, %542 : vector<1x15x15xf32>
    %c0_123 = arith.constant 0 : index
    %c3_124 = arith.constant 3 : index
    %c1_125 = arith.constant 1 : index
    %c0_126 = arith.constant 0 : index
    %544 = vector.load %arg1[%c0_123, %c3_124, %c1_125, %c0_126] : memref<1x4x17x17xf32, #tpu.memory_space<vmem>>, vector<1x1x15x15xf32>
    %545 = vector.shape_cast %544 : vector<1x1x15x15xf32> to vector<1x15x15xf32>
    %c60 = arith.constant 60 : index
    %546 = memref.load %arg2[%c60] : memref<144xf32, #tpu.memory_space<smem>>
    %547 = vector.broadcast %546 : f32 to vector<1x15x15xf32>
    %548 = arith.mulf %547, %545 : vector<1x15x15xf32>
    %549 = arith.addf %531, %548 : vector<1x15x15xf32>
    %c61 = arith.constant 61 : index
    %550 = memref.load %arg2[%c61] : memref<144xf32, #tpu.memory_space<smem>>
    %551 = vector.broadcast %550 : f32 to vector<1x15x15xf32>
    %552 = arith.mulf %551, %545 : vector<1x15x15xf32>
    %553 = arith.addf %535, %552 : vector<1x15x15xf32>
    %c62 = arith.constant 62 : index
    %554 = memref.load %arg2[%c62] : memref<144xf32, #tpu.memory_space<smem>>
    %555 = vector.broadcast %554 : f32 to vector<1x15x15xf32>
    %556 = arith.mulf %555, %545 : vector<1x15x15xf32>
    %557 = arith.addf %539, %556 : vector<1x15x15xf32>
    %c63 = arith.constant 63 : index
    %558 = memref.load %arg2[%c63] : memref<144xf32, #tpu.memory_space<smem>>
    %559 = vector.broadcast %558 : f32 to vector<1x15x15xf32>
    %560 = arith.mulf %559, %545 : vector<1x15x15xf32>
    %561 = arith.addf %543, %560 : vector<1x15x15xf32>
    %c0_127 = arith.constant 0 : index
    %c3_128 = arith.constant 3 : index
    %c1_129 = arith.constant 1 : index
    %c1_130 = arith.constant 1 : index
    %562 = vector.load %arg1[%c0_127, %c3_128, %c1_129, %c1_130] : memref<1x4x17x17xf32, #tpu.memory_space<vmem>>, vector<1x1x15x15xf32>
    %563 = vector.shape_cast %562 : vector<1x1x15x15xf32> to vector<1x15x15xf32>
    %c76 = arith.constant 76 : index
    %564 = memref.load %arg2[%c76] : memref<144xf32, #tpu.memory_space<smem>>
    %565 = vector.broadcast %564 : f32 to vector<1x15x15xf32>
    %566 = arith.mulf %565, %563 : vector<1x15x15xf32>
    %567 = arith.addf %549, %566 : vector<1x15x15xf32>
    %c77 = arith.constant 77 : index
    %568 = memref.load %arg2[%c77] : memref<144xf32, #tpu.memory_space<smem>>
    %569 = vector.broadcast %568 : f32 to vector<1x15x15xf32>
    %570 = arith.mulf %569, %563 : vector<1x15x15xf32>
    %571 = arith.addf %553, %570 : vector<1x15x15xf32>
    %c78 = arith.constant 78 : index
    %572 = memref.load %arg2[%c78] : memref<144xf32, #tpu.memory_space<smem>>
    %573 = vector.broadcast %572 : f32 to vector<1x15x15xf32>
    %574 = arith.mulf %573, %563 : vector<1x15x15xf32>
    %575 = arith.addf %557, %574 : vector<1x15x15xf32>
    %c79 = arith.constant 79 : index
    %576 = memref.load %arg2[%c79] : memref<144xf32, #tpu.memory_space<smem>>
    %577 = vector.broadcast %576 : f32 to vector<1x15x15xf32>
    %578 = arith.mulf %577, %563 : vector<1x15x15xf32>
    %579 = arith.addf %561, %578 : vector<1x15x15xf32>
    %c0_131 = arith.constant 0 : index
    %c3_132 = arith.constant 3 : index
    %c1_133 = arith.constant 1 : index
    %c2_134 = arith.constant 2 : index
    %580 = vector.load %arg1[%c0_131, %c3_132, %c1_133, %c2_134] : memref<1x4x17x17xf32, #tpu.memory_space<vmem>>, vector<1x1x15x15xf32>
    %581 = vector.shape_cast %580 : vector<1x1x15x15xf32> to vector<1x15x15xf32>
    %c92 = arith.constant 92 : index
    %582 = memref.load %arg2[%c92] : memref<144xf32, #tpu.memory_space<smem>>
    %583 = vector.broadcast %582 : f32 to vector<1x15x15xf32>
    %584 = arith.mulf %583, %581 : vector<1x15x15xf32>
    %585 = arith.addf %567, %584 : vector<1x15x15xf32>
    %c93 = arith.constant 93 : index
    %586 = memref.load %arg2[%c93] : memref<144xf32, #tpu.memory_space<smem>>
    %587 = vector.broadcast %586 : f32 to vector<1x15x15xf32>
    %588 = arith.mulf %587, %581 : vector<1x15x15xf32>
    %589 = arith.addf %571, %588 : vector<1x15x15xf32>
    %c94 = arith.constant 94 : index
    %590 = memref.load %arg2[%c94] : memref<144xf32, #tpu.memory_space<smem>>
    %591 = vector.broadcast %590 : f32 to vector<1x15x15xf32>
    %592 = arith.mulf %591, %581 : vector<1x15x15xf32>
    %593 = arith.addf %575, %592 : vector<1x15x15xf32>
    %c95 = arith.constant 95 : index
    %594 = memref.load %arg2[%c95] : memref<144xf32, #tpu.memory_space<smem>>
    %595 = vector.broadcast %594 : f32 to vector<1x15x15xf32>
    %596 = arith.mulf %595, %581 : vector<1x15x15xf32>
    %597 = arith.addf %579, %596 : vector<1x15x15xf32>
    %c0_135 = arith.constant 0 : index
    %c3_136 = arith.constant 3 : index
    %c2_137 = arith.constant 2 : index
    %c0_138 = arith.constant 0 : index
    %598 = vector.load %arg1[%c0_135, %c3_136, %c2_137, %c0_138] : memref<1x4x17x17xf32, #tpu.memory_space<vmem>>, vector<1x1x15x15xf32>
    %599 = vector.shape_cast %598 : vector<1x1x15x15xf32> to vector<1x15x15xf32>
    %c108 = arith.constant 108 : index
    %600 = memref.load %arg2[%c108] : memref<144xf32, #tpu.memory_space<smem>>
    %601 = vector.broadcast %600 : f32 to vector<1x15x15xf32>
    %602 = arith.mulf %601, %599 : vector<1x15x15xf32>
    %603 = arith.addf %585, %602 : vector<1x15x15xf32>
    %c109 = arith.constant 109 : index
    %604 = memref.load %arg2[%c109] : memref<144xf32, #tpu.memory_space<smem>>
    %605 = vector.broadcast %604 : f32 to vector<1x15x15xf32>
    %606 = arith.mulf %605, %599 : vector<1x15x15xf32>
    %607 = arith.addf %589, %606 : vector<1x15x15xf32>
    %c110 = arith.constant 110 : index
    %608 = memref.load %arg2[%c110] : memref<144xf32, #tpu.memory_space<smem>>
    %609 = vector.broadcast %608 : f32 to vector<1x15x15xf32>
    %610 = arith.mulf %609, %599 : vector<1x15x15xf32>
    %611 = arith.addf %593, %610 : vector<1x15x15xf32>
    %c111 = arith.constant 111 : index
    %612 = memref.load %arg2[%c111] : memref<144xf32, #tpu.memory_space<smem>>
    %613 = vector.broadcast %612 : f32 to vector<1x15x15xf32>
    %614 = arith.mulf %613, %599 : vector<1x15x15xf32>
    %615 = arith.addf %597, %614 : vector<1x15x15xf32>
    %c0_139 = arith.constant 0 : index
    %c3_140 = arith.constant 3 : index
    %c2_141 = arith.constant 2 : index
    %c1_142 = arith.constant 1 : index
    %616 = vector.load %arg1[%c0_139, %c3_140, %c2_141, %c1_142] : memref<1x4x17x17xf32, #tpu.memory_space<vmem>>, vector<1x1x15x15xf32>
    %617 = vector.shape_cast %616 : vector<1x1x15x15xf32> to vector<1x15x15xf32>
    %c124 = arith.constant 124 : index
    %618 = memref.load %arg2[%c124] : memref<144xf32, #tpu.memory_space<smem>>
    %619 = vector.broadcast %618 : f32 to vector<1x15x15xf32>
    %620 = arith.mulf %619, %617 : vector<1x15x15xf32>
    %621 = arith.addf %603, %620 : vector<1x15x15xf32>
    %c125 = arith.constant 125 : index
    %622 = memref.load %arg2[%c125] : memref<144xf32, #tpu.memory_space<smem>>
    %623 = vector.broadcast %622 : f32 to vector<1x15x15xf32>
    %624 = arith.mulf %623, %617 : vector<1x15x15xf32>
    %625 = arith.addf %607, %624 : vector<1x15x15xf32>
    %c126 = arith.constant 126 : index
    %626 = memref.load %arg2[%c126] : memref<144xf32, #tpu.memory_space<smem>>
    %627 = vector.broadcast %626 : f32 to vector<1x15x15xf32>
    %628 = arith.mulf %627, %617 : vector<1x15x15xf32>
    %629 = arith.addf %611, %628 : vector<1x15x15xf32>
    %c127 = arith.constant 127 : index
    %630 = memref.load %arg2[%c127] : memref<144xf32, #tpu.memory_space<smem>>
    %631 = vector.broadcast %630 : f32 to vector<1x15x15xf32>
    %632 = arith.mulf %631, %617 : vector<1x15x15xf32>
    %633 = arith.addf %615, %632 : vector<1x15x15xf32>
    %c0_143 = arith.constant 0 : index
    %c3_144 = arith.constant 3 : index
    %c2_145 = arith.constant 2 : index
    %c2_146 = arith.constant 2 : index
    %634 = vector.load %arg1[%c0_143, %c3_144, %c2_145, %c2_146] : memref<1x4x17x17xf32, #tpu.memory_space<vmem>>, vector<1x1x15x15xf32>
    %635 = vector.shape_cast %634 : vector<1x1x15x15xf32> to vector<1x15x15xf32>
    %c140 = arith.constant 140 : index
    %636 = memref.load %arg2[%c140] : memref<144xf32, #tpu.memory_space<smem>>
    %637 = vector.broadcast %636 : f32 to vector<1x15x15xf32>
    %638 = arith.mulf %637, %635 : vector<1x15x15xf32>
    %639 = arith.addf %621, %638 : vector<1x15x15xf32>
    %c141 = arith.constant 141 : index
    %640 = memref.load %arg2[%c141] : memref<144xf32, #tpu.memory_space<smem>>
    %641 = vector.broadcast %640 : f32 to vector<1x15x15xf32>
    %642 = arith.mulf %641, %635 : vector<1x15x15xf32>
    %643 = arith.addf %625, %642 : vector<1x15x15xf32>
    %c142 = arith.constant 142 : index
    %644 = memref.load %arg2[%c142] : memref<144xf32, #tpu.memory_space<smem>>
    %645 = vector.broadcast %644 : f32 to vector<1x15x15xf32>
    %646 = arith.mulf %645, %635 : vector<1x15x15xf32>
    %647 = arith.addf %629, %646 : vector<1x15x15xf32>
    %c143 = arith.constant 143 : index
    %648 = memref.load %arg2[%c143] : memref<144xf32, #tpu.memory_space<smem>>
    %649 = vector.broadcast %648 : f32 to vector<1x15x15xf32>
    %650 = arith.mulf %649, %635 : vector<1x15x15xf32>
    %651 = arith.addf %633, %650 : vector<1x15x15xf32>
    %c0_147 = arith.constant 0 : index
    %652 = memref.load %arg3[%c0_147] : memref<4xf32, #tpu.memory_space<smem>>
    %653 = vector.broadcast %652 : f32 to vector<1x15x15xf32>
    %654 = arith.addf %639, %653 : vector<1x15x15xf32>
    %cst_148 = arith.constant 0.000000e+00 : f32
    %655 = vector.broadcast %cst_148 : f32 to vector<1x15x15xf32>
    %656 = arith.cmpf oge, %654, %655 : vector<1x15x15xf32>
    %cst_149 = arith.constant 0.00999999977 : f32
    %657 = vector.broadcast %cst_149 : f32 to vector<1x15x15xf32>
    %658 = arith.mulf %657, %654 : vector<1x15x15xf32>
    %659 = arith.select %656, %654, %658 : vector<1x15x15xi1>, vector<1x15x15xf32>
    %c0_150 = arith.constant 0 : index
    %c0_151 = arith.constant 0 : index
    %c0_152 = arith.constant 0 : index
    %c0_153 = arith.constant 0 : index
    %660 = vector.load %arg4[%c0_150, %c0_151, %c0_152, %c0_153] : memref<1x4x15x15xf32, #tpu.memory_space<vmem>>, vector<1x1x15x15xf32>
    %661 = vector.shape_cast %660 : vector<1x1x15x15xf32> to vector<1x15x15xf32>
    %662 = vector.shape_cast %659 : vector<1x15x15xf32> to vector<1x1x15x15xf32>
    tpu.vector_store %arg4[%c0_150, %c0_151, %c0_152, %c0_153], %662 {strides = array<i32>} : memref<1x4x15x15xf32, #tpu.memory_space<vmem>>, vector<1x1x15x15xf32>,
    %c1_154 = arith.constant 1 : index
    %663 = memref.load %arg3[%c1_154] : memref<4xf32, #tpu.memory_space<smem>>
    %664 = vector.broadcast %663 : f32 to vector<1x15x15xf32>
    %665 = arith.addf %643, %664 : vector<1x15x15xf32>
    %cst_155 = arith.constant 0.000000e+00 : f32
    %666 = vector.broadcast %cst_155 : f32 to vector<1x15x15xf32>
    %667 = arith.cmpf oge, %665, %666 : vector<1x15x15xf32>
    %cst_156 = arith.constant 0.00999999977 : f32
    %668 = vector.broadcast %cst_156 : f32 to vector<1x15x15xf32>
    %669 = arith.mulf %668, %665 : vector<1x15x15xf32>
    %670 = arith.select %667, %665, %669 : vector<1x15x15xi1>, vector<1x15x15xf32>
    %c0_157 = arith.constant 0 : index
    %c1_158 = arith.constant 1 : index
    %c0_159 = arith.constant 0 : index
    %c0_160 = arith.constant 0 : index
    %671 = vector.load %arg4[%c0_157, %c1_158, %c0_159, %c0_160] : memref<1x4x15x15xf32, #tpu.memory_space<vmem>>, vector<1x1x15x15xf32>
    %672 = vector.shape_cast %671 : vector<1x1x15x15xf32> to vector<1x15x15xf32>
    %673 = vector.shape_cast %670 : vector<1x15x15xf32> to vector<1x1x15x15xf32>
    tpu.vector_store %arg4[%c0_157, %c1_158, %c0_159, %c0_160], %673 {strides = array<i32>} : memref<1x4x15x15xf32, #tpu.memory_space<vmem>>, vector<1x1x15x15xf32>,
    %c2_161 = arith.constant 2 : index
    %674 = memref.load %arg3[%c2_161] : memref<4xf32, #tpu.memory_space<smem>>
    %675 = vector.broadcast %674 : f32 to vector<1x15x15xf32>
    %676 = arith.addf %647, %675 : vector<1x15x15xf32>
    %cst_162 = arith.constant 0.000000e+00 : f32
    %677 = vector.broadcast %cst_162 : f32 to vector<1x15x15xf32>
    %678 = arith.cmpf oge, %676, %677 : vector<1x15x15xf32>
    %cst_163 = arith.constant 0.00999999977 : f32
    %679 = vector.broadcast %cst_163 : f32 to vector<1x15x15xf32>
    %680 = arith.mulf %679, %676 : vector<1x15x15xf32>
    %681 = arith.select %678, %676, %680 : vector<1x15x15xi1>, vector<1x15x15xf32>
    %c0_164 = arith.constant 0 : index
    %c2_165 = arith.constant 2 : index
    %c0_166 = arith.constant 0 : index
    %c0_167 = arith.constant 0 : index
    %682 = vector.load %arg4[%c0_164, %c2_165, %c0_166, %c0_167] : memref<1x4x15x15xf32, #tpu.memory_space<vmem>>, vector<1x1x15x15xf32>
    %683 = vector.shape_cast %682 : vector<1x1x15x15xf32> to vector<1x15x15xf32>
    %684 = vector.shape_cast %681 : vector<1x15x15xf32> to vector<1x1x15x15xf32>
    tpu.vector_store %arg4[%c0_164, %c2_165, %c0_166, %c0_167], %684 {strides = array<i32>} : memref<1x4x15x15xf32, #tpu.memory_space<vmem>>, vector<1x1x15x15xf32>,
    %c3_168 = arith.constant 3 : index
    %685 = memref.load %arg3[%c3_168] : memref<4xf32, #tpu.memory_space<smem>>
    %686 = vector.broadcast %685 : f32 to vector<1x15x15xf32>
    %687 = arith.addf %651, %686 : vector<1x15x15xf32>
    %cst_169 = arith.constant 0.000000e+00 : f32
    %688 = vector.broadcast %cst_169 : f32 to vector<1x15x15xf32>
    %689 = arith.cmpf oge, %687, %688 : vector<1x15x15xf32>
    %cst_170 = arith.constant 0.00999999977 : f32
    %690 = vector.broadcast %cst_170 : f32 to vector<1x15x15xf32>
    %691 = arith.mulf %690, %687 : vector<1x15x15xf32>
    %692 = arith.select %689, %687, %691 : vector<1x15x15xi1>, vector<1x15x15xf32>
    %c0_171 = arith.constant 0 : index
    %c3_172 = arith.constant 3 : index
    %c0_173 = arith.constant 0 : index
    %c0_174 = arith.constant 0 : index
    %693 = vector.load %arg4[%c0_171, %c3_172, %c0_173, %c0_174] : memref<1x4x15x15xf32, #tpu.memory_space<vmem>>, vector<1x1x15x15xf32>
    %694 = vector.shape_cast %693 : vector<1x1x15x15xf32> to vector<1x15x15xf32>
    %695 = vector.shape_cast %692 : vector<1x15x15xf32> to vector<1x1x15x15xf32>
    tpu.vector_store %arg4[%c0_171, %c3_172, %c0_173, %c0_174], %695 {strides = array<i32>} : memref<1x4x15x15xf32, #tpu.memory_space<vmem>>, vector<1x1x15x15xf32>,
    return
  }
  func.func @transform_0(%arg0: i32) -> (i32, i32, i32, i32) {
    %c0_i32 = arith.constant 0 : i32
    %c0_i32_0 = arith.constant 0 : i32
    %c0_i32_1 = arith.constant 0 : i32
    %c0_i32_2 = arith.constant 0 : i32
    return %arg0, %c0_i32, %c0_i32_0, %c0_i32_1 : i32, i32, i32, i32
  }
  func.func @transform_1(%arg0: i32) -> i32 {
    %c0_i32 = arith.constant 0 : i32
    %c0_i32_0 = arith.constant 0 : i32
    return %c0_i32 : i32
  }
  func.func @transform_2(%arg0: i32) -> i32 {
    %c0_i32 = arith.constant 0 : i32
    %c0_i32_0 = arith.constant 0 : i32
    return %c0_i32 : i32
  }
  func.func @transform_3(%arg0: i32) -> (i32, i32, i32, i32) {
    %c0_i32 = arith.constant 0 : i32
    %c0_i32_0 = arith.constant 0 : i32
    %c0_i32_1 = arith.constant 0 : i32
    %c0_i32_2 = arith.constant 0 : i32
    return %arg0, %c0_i32, %c0_i32_0, %c0_i32_1 : i32, i32, i32, i32
  }
}

module attributes {stable_mosaic.version = 11 : i64} {
  func.func @_convt_kernel(%arg0: i32, %arg1: memref<1x4x17x17xf32, #tpu.memory_space<vmem>>, %arg2: memref<144xf32, #tpu.memory_space<smem>>, %arg3: memref<4xf32, #tpu.memory_space<smem>>, %arg4: memref<1x4x15x15xf32, #tpu.memory_space<vmem>>) attributes {dimension_semantics = [#tpu.dimension_semantics<parallel>], iteration_bounds = array<i64: 2>, scalar_prefetch = 0 : i64, scratch_operands = 0 : i64, tpu.core_type = #tpu.core_type<tc>, window_params = [{transform_indices = @transform_0, window_bounds = array<i64: 1, 4, 17, 17>}, {transform_indices = @transform_1, window_bounds = array<i64: 144>}, {transform_indices = @transform_2, window_bounds = array<i64: 4>}, {transform_indices = @transform_3, window_bounds = array<i64: 1, 4, 15, 15>}]} {
    %cst = arith.constant 0.000000e+00 : f32
    %0 = vector.broadcast %cst : f32 to vector<1x15x15xf32>
    %cst_0 = arith.constant 0.000000e+00 : f32
    %1 = vector.broadcast %cst_0 : f32 to vector<1x15x15xf32>
    %cst_1 = arith.constant 0.000000e+00 : f32
    %2 = vector.broadcast %cst_1 : f32 to vector<1x15x15xf32>
    %cst_2 = arith.constant 0.000000e+00 : f32
    %3 = vector.broadcast %cst_2 : f32 to vector<1x15x15xf32>
    %c0 = arith.constant 0 : index
    %c0_3 = arith.constant 0 : index
    %c0_4 = arith.constant 0 : index
    %c0_5 = arith.constant 0 : index
    %4 = vector.load %arg1[%c0, %c0_3, %c0_4, %c0_5] : memref<1x4x17x17xf32, #tpu.memory_space<vmem>>, vector<1x1x15x15xf32>
    %5 = vector.shape_cast %4 : vector<1x1x15x15xf32> to vector<1x15x15xf32>
    %c0_6 = arith.constant 0 : index
    %6 = memref.load %arg2[%c0_6] : memref<144xf32, #tpu.memory_space<smem>>
    %7 = vector.broadcast %6 : f32 to vector<1x15x15xf32>
    %8 = arith.mulf %7, %5 : vector<1x15x15xf32>
    %9 = arith.addf %0, %8 : vector<1x15x15xf32>
    %c1 = arith.constant 1 : index
    %10 = memref.load %arg2[%c1] : memref<144xf32, #tpu.memory_space<smem>>
    %11 = vector.broadcast %10 : f32 to vector<1x15x15xf32>
    %12 = arith.mulf %11, %5 : vector<1x15x15xf32>
    %13 = arith.addf %1, %12 : vector<1x15x15xf32>
    %c2 = arith.constant 2 : index
    %14 = memref.load %arg2[%c2] : memref<144xf32, #tpu.memory_space<smem>>
    %15 = vector.broadcast %14 : f32 to vector<1x15x15xf32>
    %16 = arith.mulf %15, %5 : vector<1x15x15xf32>
    %17 = arith.addf %2, %16 : vector<1x15x15xf32>
    %c3 = arith.constant 3 : index
    %18 = memref.load %arg2[%c3] : memref<144xf32, #tpu.memory_space<smem>>
    %19 = vector.broadcast %18 : f32 to vector<1x15x15xf32>
    %20 = arith.mulf %19, %5 : vector<1x15x15xf32>
    %21 = arith.addf %3, %20 : vector<1x15x15xf32>
    %c0_7 = arith.constant 0 : index
    %c0_8 = arith.constant 0 : index
    %c0_9 = arith.constant 0 : index
    %c1_10 = arith.constant 1 : index
    %22 = vector.load %arg1[%c0_7, %c0_8, %c0_9, %c1_10] : memref<1x4x17x17xf32, #tpu.memory_space<vmem>>, vector<1x1x15x15xf32>
    %23 = vector.shape_cast %22 : vector<1x1x15x15xf32> to vector<1x15x15xf32>
    %c16 = arith.constant 16 : index
    %24 = memref.load %arg2[%c16] : memref<144xf32, #tpu.memory_space<smem>>
    %25 = vector.broadcast %24 : f32 to vector<1x15x15xf32>
    %26 = arith.mulf %25, %23 : vector<1x15x15xf32>
    %27 = arith.addf %9, %26 : vector<1x15x15xf32>
    %c17 = arith.constant 17 : index
    %28 = memref.load %arg2[%c17] : memref<144xf32, #tpu.memory_space<smem>>
    %29 = vector.broadcast %28 : f32 to vector<1x15x15xf32>
    %30 = arith.mulf %29, %23 : vector<1x15x15xf32>
    %31 = arith.addf %13, %30 : vector<1x15x15xf32>
    %c18 = arith.constant 18 : index
    %32 = memref.load %arg2[%c18] : memref<144xf32, #tpu.memory_space<smem>>
    %33 = vector.broadcast %32 : f32 to vector<1x15x15xf32>
    %34 = arith.mulf %33, %23 : vector<1x15x15xf32>
    %35 = arith.addf %17, %34 : vector<1x15x15xf32>
    %c19 = arith.constant 19 : index
    %36 = memref.load %arg2[%c19] : memref<144xf32, #tpu.memory_space<smem>>
    %37 = vector.broadcast %36 : f32 to vector<1x15x15xf32>
    %38 = arith.mulf %37, %23 : vector<1x15x15xf32>
    %39 = arith.addf %21, %38 : vector<1x15x15xf32>
    %c0_11 = arith.constant 0 : index
    %c0_12 = arith.constant 0 : index
    %c0_13 = arith.constant 0 : index
    %c2_14 = arith.constant 2 : index
    %40 = vector.load %arg1[%c0_11, %c0_12, %c0_13, %c2_14] : memref<1x4x17x17xf32, #tpu.memory_space<vmem>>, vector<1x1x15x15xf32>
    %41 = vector.shape_cast %40 : vector<1x1x15x15xf32> to vector<1x15x15xf32>
    %c32 = arith.constant 32 : index
    %42 = memref.load %arg2[%c32] : memref<144xf32, #tpu.memory_space<smem>>
    %43 = vector.broadcast %42 : f32 to vector<1x15x15xf32>
    %44 = arith.mulf %43, %41 : vector<1x15x15xf32>
    %45 = arith.addf %27, %44 : vector<1x15x15xf32>
    %c33 = arith.constant 33 : index
    %46 = memref.load %arg2[%c33] : memref<144xf32, #tpu.memory_space<smem>>
    %47 = vector.broadcast %46 : f32 to vector<1x15x15xf32>
    %48 = arith.mulf %47, %41 : vector<1x15x15xf32>
    %49 = arith.addf %31, %48 : vector<1x15x15xf32>
    %c34 = arith.constant 34 : index
    %50 = memref.load %arg2[%c34] : memref<144xf32, #tpu.memory_space<smem>>
    %51 = vector.broadcast %50 : f32 to vector<1x15x15xf32>
    %52 = arith.mulf %51, %41 : vector<1x15x15xf32>
    %53 = arith.addf %35, %52 : vector<1x15x15xf32>
    %c35 = arith.constant 35 : index
    %54 = memref.load %arg2[%c35] : memref<144xf32, #tpu.memory_space<smem>>
    %55 = vector.broadcast %54 : f32 to vector<1x15x15xf32>
    %56 = arith.mulf %55, %41 : vector<1x15x15xf32>
    %57 = arith.addf %39, %56 : vector<1x15x15xf32>
    %c0_15 = arith.constant 0 : index
    %c0_16 = arith.constant 0 : index
    %c1_17 = arith.constant 1 : index
    %c0_18 = arith.constant 0 : index
    %58 = vector.load %arg1[%c0_15, %c0_16, %c1_17, %c0_18] : memref<1x4x17x17xf32, #tpu.memory_space<vmem>>, vector<1x1x15x15xf32>
    %59 = vector.shape_cast %58 : vector<1x1x15x15xf32> to vector<1x15x15xf32>
    %c48 = arith.constant 48 : index
    %60 = memref.load %arg2[%c48] : memref<144xf32, #tpu.memory_space<smem>>
    %61 = vector.broadcast %60 : f32 to vector<1x15x15xf32>
    %62 = arith.mulf %61, %59 : vector<1x15x15xf32>
    %63 = arith.addf %45, %62 : vector<1x15x15xf32>
    %c49 = arith.constant 49 : index
    %64 = memref.load %arg2[%c49] : memref<144xf32, #tpu.memory_space<smem>>
    %65 = vector.broadcast %64 : f32 to vector<1x15x15xf32>
    %66 = arith.mulf %65, %59 : vector<1x15x15xf32>
    %67 = arith.addf %49, %66 : vector<1x15x15xf32>
    %c50 = arith.constant 50 : index
    %68 = memref.load %arg2[%c50] : memref<144xf32, #tpu.memory_space<smem>>
    %69 = vector.broadcast %68 : f32 to vector<1x15x15xf32>
    %70 = arith.mulf %69, %59 : vector<1x15x15xf32>
    %71 = arith.addf %53, %70 : vector<1x15x15xf32>
    %c51 = arith.constant 51 : index
    %72 = memref.load %arg2[%c51] : memref<144xf32, #tpu.memory_space<smem>>
    %73 = vector.broadcast %72 : f32 to vector<1x15x15xf32>
    %74 = arith.mulf %73, %59 : vector<1x15x15xf32>
    %75 = arith.addf %57, %74 : vector<1x15x15xf32>
    %c0_19 = arith.constant 0 : index
    %c0_20 = arith.constant 0 : index
    %c1_21 = arith.constant 1 : index
    %c1_22 = arith.constant 1 : index
    %76 = vector.load %arg1[%c0_19, %c0_20, %c1_21, %c1_22] : memref<1x4x17x17xf32, #tpu.memory_space<vmem>>, vector<1x1x15x15xf32>
    %77 = vector.shape_cast %76 : vector<1x1x15x15xf32> to vector<1x15x15xf32>
    %c64 = arith.constant 64 : index
    %78 = memref.load %arg2[%c64] : memref<144xf32, #tpu.memory_space<smem>>
    %79 = vector.broadcast %78 : f32 to vector<1x15x15xf32>
    %80 = arith.mulf %79, %77 : vector<1x15x15xf32>
    %81 = arith.addf %63, %80 : vector<1x15x15xf32>
    %c65 = arith.constant 65 : index
    %82 = memref.load %arg2[%c65] : memref<144xf32, #tpu.memory_space<smem>>
    %83 = vector.broadcast %82 : f32 to vector<1x15x15xf32>
    %84 = arith.mulf %83, %77 : vector<1x15x15xf32>
    %85 = arith.addf %67, %84 : vector<1x15x15xf32>
    %c66 = arith.constant 66 : index
    %86 = memref.load %arg2[%c66] : memref<144xf32, #tpu.memory_space<smem>>
    %87 = vector.broadcast %86 : f32 to vector<1x15x15xf32>
    %88 = arith.mulf %87, %77 : vector<1x15x15xf32>
    %89 = arith.addf %71, %88 : vector<1x15x15xf32>
    %c67 = arith.constant 67 : index
    %90 = memref.load %arg2[%c67] : memref<144xf32, #tpu.memory_space<smem>>
    %91 = vector.broadcast %90 : f32 to vector<1x15x15xf32>
    %92 = arith.mulf %91, %77 : vector<1x15x15xf32>
    %93 = arith.addf %75, %92 : vector<1x15x15xf32>
    %c0_23 = arith.constant 0 : index
    %c0_24 = arith.constant 0 : index
    %c1_25 = arith.constant 1 : index
    %c2_26 = arith.constant 2 : index
    %94 = vector.load %arg1[%c0_23, %c0_24, %c1_25, %c2_26] : memref<1x4x17x17xf32, #tpu.memory_space<vmem>>, vector<1x1x15x15xf32>
    %95 = vector.shape_cast %94 : vector<1x1x15x15xf32> to vector<1x15x15xf32>
    %c80 = arith.constant 80 : index
    %96 = memref.load %arg2[%c80] : memref<144xf32, #tpu.memory_space<smem>>
    %97 = vector.broadcast %96 : f32 to vector<1x15x15xf32>
    %98 = arith.mulf %97, %95 : vector<1x15x15xf32>
    %99 = arith.addf %81, %98 : vector<1x15x15xf32>
    %c81 = arith.constant 81 : index
    %100 = memref.load %arg2[%c81] : memref<144xf32, #tpu.memory_space<smem>>
    %101 = vector.broadcast %100 : f32 to vector<1x15x15xf32>
    %102 = arith.mulf %101, %95 : vector<1x15x15xf32>
    %103 = arith.addf %85, %102 : vector<1x15x15xf32>
    %c82 = arith.constant 82 : index
    %104 = memref.load %arg2[%c82] : memref<144xf32, #tpu.memory_space<smem>>
    %105 = vector.broadcast %104 : f32 to vector<1x15x15xf32>
    %106 = arith.mulf %105, %95 : vector<1x15x15xf32>
    %107 = arith.addf %89, %106 : vector<1x15x15xf32>
    %c83 = arith.constant 83 : index
    %108 = memref.load %arg2[%c83] : memref<144xf32, #tpu.memory_space<smem>>
    %109 = vector.broadcast %108 : f32 to vector<1x15x15xf32>
    %110 = arith.mulf %109, %95 : vector<1x15x15xf32>
    %111 = arith.addf %93, %110 : vector<1x15x15xf32>
    %c0_27 = arith.constant 0 : index
    %c0_28 = arith.constant 0 : index
    %c2_29 = arith.constant 2 : index
    %c0_30 = arith.constant 0 : index
    %112 = vector.load %arg1[%c0_27, %c0_28, %c2_29, %c0_30] : memref<1x4x17x17xf32, #tpu.memory_space<vmem>>, vector<1x1x15x15xf32>
    %113 = vector.shape_cast %112 : vector<1x1x15x15xf32> to vector<1x15x15xf32>
    %c96 = arith.constant 96 : index
    %114 = memref.load %arg2[%c96] : memref<144xf32, #tpu.memory_space<smem>>
    %115 = vector.broadcast %114 : f32 to vector<1x15x15xf32>
    %116 = arith.mulf %115, %113 : vector<1x15x15xf32>
    %117 = arith.addf %99, %116 : vector<1x15x15xf32>
    %c97 = arith.constant 97 : index
    %118 = memref.load %arg2[%c97] : memref<144xf32, #tpu.memory_space<smem>>
    %119 = vector.broadcast %118 : f32 to vector<1x15x15xf32>
    %120 = arith.mulf %119, %113 : vector<1x15x15xf32>
    %121 = arith.addf %103, %120 : vector<1x15x15xf32>
    %c98 = arith.constant 98 : index
    %122 = memref.load %arg2[%c98] : memref<144xf32, #tpu.memory_space<smem>>
    %123 = vector.broadcast %122 : f32 to vector<1x15x15xf32>
    %124 = arith.mulf %123, %113 : vector<1x15x15xf32>
    %125 = arith.addf %107, %124 : vector<1x15x15xf32>
    %c99 = arith.constant 99 : index
    %126 = memref.load %arg2[%c99] : memref<144xf32, #tpu.memory_space<smem>>
    %127 = vector.broadcast %126 : f32 to vector<1x15x15xf32>
    %128 = arith.mulf %127, %113 : vector<1x15x15xf32>
    %129 = arith.addf %111, %128 : vector<1x15x15xf32>
    %c0_31 = arith.constant 0 : index
    %c0_32 = arith.constant 0 : index
    %c2_33 = arith.constant 2 : index
    %c1_34 = arith.constant 1 : index
    %130 = vector.load %arg1[%c0_31, %c0_32, %c2_33, %c1_34] : memref<1x4x17x17xf32, #tpu.memory_space<vmem>>, vector<1x1x15x15xf32>
    %131 = vector.shape_cast %130 : vector<1x1x15x15xf32> to vector<1x15x15xf32>
    %c112 = arith.constant 112 : index
    %132 = memref.load %arg2[%c112] : memref<144xf32, #tpu.memory_space<smem>>
    %133 = vector.broadcast %132 : f32 to vector<1x15x15xf32>
    %134 = arith.mulf %133, %131 : vector<1x15x15xf32>
    %135 = arith.addf %117, %134 : vector<1x15x15xf32>
    %c113 = arith.constant 113 : index
    %136 = memref.load %arg2[%c113] : memref<144xf32, #tpu.memory_space<smem>>
    %137 = vector.broadcast %136 : f32 to vector<1x15x15xf32>
    %138 = arith.mulf %137, %131 : vector<1x15x15xf32>
    %139 = arith.addf %121, %138 : vector<1x15x15xf32>
    %c114 = arith.constant 114 : index
    %140 = memref.load %arg2[%c114] : memref<144xf32, #tpu.memory_space<smem>>
    %141 = vector.broadcast %140 : f32 to vector<1x15x15xf32>
    %142 = arith.mulf %141, %131 : vector<1x15x15xf32>
    %143 = arith.addf %125, %142 : vector<1x15x15xf32>
    %c115 = arith.constant 115 : index
    %144 = memref.load %arg2[%c115] : memref<144xf32, #tpu.memory_space<smem>>
    %145 = vector.broadcast %144 : f32 to vector<1x15x15xf32>
    %146 = arith.mulf %145, %131 : vector<1x15x15xf32>
    %147 = arith.addf %129, %146 : vector<1x15x15xf32>
    %c0_35 = arith.constant 0 : index
    %c0_36 = arith.constant 0 : index
    %c2_37 = arith.constant 2 : index
    %c2_38 = arith.constant 2 : index
    %148 = vector.load %arg1[%c0_35, %c0_36, %c2_37, %c2_38] : memref<1x4x17x17xf32, #tpu.memory_space<vmem>>, vector<1x1x15x15xf32>
    %149 = vector.shape_cast %148 : vector<1x1x15x15xf32> to vector<1x15x15xf32>
    %c128 = arith.constant 128 : index
    %150 = memref.load %arg2[%c128] : memref<144xf32, #tpu.memory_space<smem>>
    %151 = vector.broadcast %150 : f32 to vector<1x15x15xf32>
    %152 = arith.mulf %151, %149 : vector<1x15x15xf32>
    %153 = arith.addf %135, %152 : vector<1x15x15xf32>
    %c129 = arith.constant 129 : index
    %154 = memref.load %arg2[%c129] : memref<144xf32, #tpu.memory_space<smem>>
    %155 = vector.broadcast %154 : f32 to vector<1x15x15xf32>
    %156 = arith.mulf %155, %149 : vector<1x15x15xf32>
    %157 = arith.addf %139, %156 : vector<1x15x15xf32>
    %c130 = arith.constant 130 : index
    %158 = memref.load %arg2[%c130] : memref<144xf32, #tpu.memory_space<smem>>
    %159 = vector.broadcast %158 : f32 to vector<1x15x15xf32>
    %160 = arith.mulf %159, %149 : vector<1x15x15xf32>
    %161 = arith.addf %143, %160 : vector<1x15x15xf32>
    %c131 = arith.constant 131 : index
    %162 = memref.load %arg2[%c131] : memref<144xf32, #tpu.memory_space<smem>>
    %163 = vector.broadcast %162 : f32 to vector<1x15x15xf32>
    %164 = arith.mulf %163, %149 : vector<1x15x15xf32>
    %165 = arith.addf %147, %164 : vector<1x15x15xf32>
    %c0_39 = arith.constant 0 : index
    %c1_40 = arith.constant 1 : index
    %c0_41 = arith.constant 0 : index
    %c0_42 = arith.constant 0 : index
    %166 = vector.load %arg1[%c0_39, %c1_40, %c0_41, %c0_42] : memref<1x4x17x17xf32, #tpu.memory_space<vmem>>, vector<1x1x15x15xf32>
    %167 = vector.shape_cast %166 : vector<1x1x15x15xf32> to vector<1x15x15xf32>
    %c4 = arith.constant 4 : index
    %168 = memref.load %arg2[%c4] : memref<144xf32, #tpu.memory_space<smem>>
    %169 = vector.broadcast %168 : f32 to vector<1x15x15xf32>
    %170 = arith.mulf %169, %167 : vector<1x15x15xf32>
    %171 = arith.addf %153, %170 : vector<1x15x15xf32>
    %c5 = arith.constant 5 : index
    %172 = memref.load %arg2[%c5] : memref<144xf32, #tpu.memory_space<smem>>
    %173 = vector.broadcast %172 : f32 to vector<1x15x15xf32>
    %174 = arith.mulf %173, %167 : vector<1x15x15xf32>
    %175 = arith.addf %157, %174 : vector<1x15x15xf32>
    %c6 = arith.constant 6 : index
    %176 = memref.load %arg2[%c6] : memref<144xf32, #tpu.memory_space<smem>>
    %177 = vector.broadcast %176 : f32 to vector<1x15x15xf32>
    %178 = arith.mulf %177, %167 : vector<1x15x15xf32>
    %179 = arith.addf %161, %178 : vector<1x15x15xf32>
    %c7 = arith.constant 7 : index
    %180 = memref.load %arg2[%c7] : memref<144xf32, #tpu.memory_space<smem>>
    %181 = vector.broadcast %180 : f32 to vector<1x15x15xf32>
    %182 = arith.mulf %181, %167 : vector<1x15x15xf32>
    %183 = arith.addf %165, %182 : vector<1x15x15xf32>
    %c0_43 = arith.constant 0 : index
    %c1_44 = arith.constant 1 : index
    %c0_45 = arith.constant 0 : index
    %c1_46 = arith.constant 1 : index
    %184 = vector.load %arg1[%c0_43, %c1_44, %c0_45, %c1_46] : memref<1x4x17x17xf32, #tpu.memory_space<vmem>>, vector<1x1x15x15xf32>
    %185 = vector.shape_cast %184 : vector<1x1x15x15xf32> to vector<1x15x15xf32>
    %c20 = arith.constant 20 : index
    %186 = memref.load %arg2[%c20] : memref<144xf32, #tpu.memory_space<smem>>
    %187 = vector.broadcast %186 : f32 to vector<1x15x15xf32>
    %188 = arith.mulf %187, %185 : vector<1x15x15xf32>
    %189 = arith.addf %171, %188 : vector<1x15x15xf32>
    %c21 = arith.constant 21 : index
    %190 = memref.load %arg2[%c21] : memref<144xf32, #tpu.memory_space<smem>>
    %191 = vector.broadcast %190 : f32 to vector<1x15x15xf32>
    %192 = arith.mulf %191, %185 : vector<1x15x15xf32>
    %193 = arith.addf %175, %192 : vector<1x15x15xf32>
    %c22 = arith.constant 22 : index
    %194 = memref.load %arg2[%c22] : memref<144xf32, #tpu.memory_space<smem>>
    %195 = vector.broadcast %194 : f32 to vector<1x15x15xf32>
    %196 = arith.mulf %195, %185 : vector<1x15x15xf32>
    %197 = arith.addf %179, %196 : vector<1x15x15xf32>
    %c23 = arith.constant 23 : index
    %198 = memref.load %arg2[%c23] : memref<144xf32, #tpu.memory_space<smem>>
    %199 = vector.broadcast %198 : f32 to vector<1x15x15xf32>
    %200 = arith.mulf %199, %185 : vector<1x15x15xf32>
    %201 = arith.addf %183, %200 : vector<1x15x15xf32>
    %c0_47 = arith.constant 0 : index
    %c1_48 = arith.constant 1 : index
    %c0_49 = arith.constant 0 : index
    %c2_50 = arith.constant 2 : index
    %202 = vector.load %arg1[%c0_47, %c1_48, %c0_49, %c2_50] : memref<1x4x17x17xf32, #tpu.memory_space<vmem>>, vector<1x1x15x15xf32>
    %203 = vector.shape_cast %202 : vector<1x1x15x15xf32> to vector<1x15x15xf32>
    %c36 = arith.constant 36 : index
    %204 = memref.load %arg2[%c36] : memref<144xf32, #tpu.memory_space<smem>>
    %205 = vector.broadcast %204 : f32 to vector<1x15x15xf32>
    %206 = arith.mulf %205, %203 : vector<1x15x15xf32>
    %207 = arith.addf %189, %206 : vector<1x15x15xf32>
    %c37 = arith.constant 37 : index
    %208 = memref.load %arg2[%c37] : memref<144xf32, #tpu.memory_space<smem>>
    %209 = vector.broadcast %208 : f32 to vector<1x15x15xf32>
    %210 = arith.mulf %209, %203 : vector<1x15x15xf32>
    %211 = arith.addf %193, %210 : vector<1x15x15xf32>
    %c38 = arith.constant 38 : index
    %212 = memref.load %arg2[%c38] : memref<144xf32, #tpu.memory_space<smem>>
    %213 = vector.broadcast %212 : f32 to vector<1x15x15xf32>
    %214 = arith.mulf %213, %203 : vector<1x15x15xf32>
    %215 = arith.addf %197, %214 : vector<1x15x15xf32>
    %c39 = arith.constant 39 : index
    %216 = memref.load %arg2[%c39] : memref<144xf32, #tpu.memory_space<smem>>
    %217 = vector.broadcast %216 : f32 to vector<1x15x15xf32>
    %218 = arith.mulf %217, %203 : vector<1x15x15xf32>
    %219 = arith.addf %201, %218 : vector<1x15x15xf32>
    %c0_51 = arith.constant 0 : index
    %c1_52 = arith.constant 1 : index
    %c1_53 = arith.constant 1 : index
    %c0_54 = arith.constant 0 : index
    %220 = vector.load %arg1[%c0_51, %c1_52, %c1_53, %c0_54] : memref<1x4x17x17xf32, #tpu.memory_space<vmem>>, vector<1x1x15x15xf32>
    %221 = vector.shape_cast %220 : vector<1x1x15x15xf32> to vector<1x15x15xf32>
    %c52 = arith.constant 52 : index
    %222 = memref.load %arg2[%c52] : memref<144xf32, #tpu.memory_space<smem>>
    %223 = vector.broadcast %222 : f32 to vector<1x15x15xf32>
    %224 = arith.mulf %223, %221 : vector<1x15x15xf32>
    %225 = arith.addf %207, %224 : vector<1x15x15xf32>
    %c53 = arith.constant 53 : index
    %226 = memref.load %arg2[%c53] : memref<144xf32, #tpu.memory_space<smem>>
    %227 = vector.broadcast %226 : f32 to vector<1x15x15xf32>
    %228 = arith.mulf %227, %221 : vector<1x15x15xf32>
    %229 = arith.addf %211, %228 : vector<1x15x15xf32>
    %c54 = arith.constant 54 : index
    %230 = memref.load %arg2[%c54] : memref<144xf32, #tpu.memory_space<smem>>
    %231 = vector.broadcast %230 : f32 to vector<1x15x15xf32>
    %232 = arith.mulf %231, %221 : vector<1x15x15xf32>
    %233 = arith.addf %215, %232 : vector<1x15x15xf32>
    %c55 = arith.constant 55 : index
    %234 = memref.load %arg2[%c55] : memref<144xf32, #tpu.memory_space<smem>>
    %235 = vector.broadcast %234 : f32 to vector<1x15x15xf32>
    %236 = arith.mulf %235, %221 : vector<1x15x15xf32>
    %237 = arith.addf %219, %236 : vector<1x15x15xf32>
    %c0_55 = arith.constant 0 : index
    %c1_56 = arith.constant 1 : index
    %c1_57 = arith.constant 1 : index
    %c1_58 = arith.constant 1 : index
    %238 = vector.load %arg1[%c0_55, %c1_56, %c1_57, %c1_58] : memref<1x4x17x17xf32, #tpu.memory_space<vmem>>, vector<1x1x15x15xf32>
    %239 = vector.shape_cast %238 : vector<1x1x15x15xf32> to vector<1x15x15xf32>
    %c68 = arith.constant 68 : index
    %240 = memref.load %arg2[%c68] : memref<144xf32, #tpu.memory_space<smem>>
    %241 = vector.broadcast %240 : f32 to vector<1x15x15xf32>
    %242 = arith.mulf %241, %239 : vector<1x15x15xf32>
    %243 = arith.addf %225, %242 : vector<1x15x15xf32>
    %c69 = arith.constant 69 : index
    %244 = memref.load %arg2[%c69] : memref<144xf32, #tpu.memory_space<smem>>
    %245 = vector.broadcast %244 : f32 to vector<1x15x15xf32>
    %246 = arith.mulf %245, %239 : vector<1x15x15xf32>
    %247 = arith.addf %229, %246 : vector<1x15x15xf32>
    %c70 = arith.constant 70 : index
    %248 = memref.load %arg2[%c70] : memref<144xf32, #tpu.memory_space<smem>>
    %249 = vector.broadcast %248 : f32 to vector<1x15x15xf32>
    %250 = arith.mulf %249, %239 : vector<1x15x15xf32>
    %251 = arith.addf %233, %250 : vector<1x15x15xf32>
    %c71 = arith.constant 71 : index
    %252 = memref.load %arg2[%c71] : memref<144xf32, #tpu.memory_space<smem>>
    %253 = vector.broadcast %252 : f32 to vector<1x15x15xf32>
    %254 = arith.mulf %253, %239 : vector<1x15x15xf32>
    %255 = arith.addf %237, %254 : vector<1x15x15xf32>
    %c0_59 = arith.constant 0 : index
    %c1_60 = arith.constant 1 : index
    %c1_61 = arith.constant 1 : index
    %c2_62 = arith.constant 2 : index
    %256 = vector.load %arg1[%c0_59, %c1_60, %c1_61, %c2_62] : memref<1x4x17x17xf32, #tpu.memory_space<vmem>>, vector<1x1x15x15xf32>
    %257 = vector.shape_cast %256 : vector<1x1x15x15xf32> to vector<1x15x15xf32>
    %c84 = arith.constant 84 : index
    %258 = memref.load %arg2[%c84] : memref<144xf32, #tpu.memory_space<smem>>
    %259 = vector.broadcast %258 : f32 to vector<1x15x15xf32>
    %260 = arith.mulf %259, %257 : vector<1x15x15xf32>
    %261 = arith.addf %243, %260 : vector<1x15x15xf32>
    %c85 = arith.constant 85 : index
    %262 = memref.load %arg2[%c85] : memref<144xf32, #tpu.memory_space<smem>>
    %263 = vector.broadcast %262 : f32 to vector<1x15x15xf32>
    %264 = arith.mulf %263, %257 : vector<1x15x15xf32>
    %265 = arith.addf %247, %264 : vector<1x15x15xf32>
    %c86 = arith.constant 86 : index
    %266 = memref.load %arg2[%c86] : memref<144xf32, #tpu.memory_space<smem>>
    %267 = vector.broadcast %266 : f32 to vector<1x15x15xf32>
    %268 = arith.mulf %267, %257 : vector<1x15x15xf32>
    %269 = arith.addf %251, %268 : vector<1x15x15xf32>
    %c87 = arith.constant 87 : index
    %270 = memref.load %arg2[%c87] : memref<144xf32, #tpu.memory_space<smem>>
    %271 = vector.broadcast %270 : f32 to vector<1x15x15xf32>
    %272 = arith.mulf %271, %257 : vector<1x15x15xf32>
    %273 = arith.addf %255, %272 : vector<1x15x15xf32>
    %c0_63 = arith.constant 0 : index
    %c1_64 = arith.constant 1 : index
    %c2_65 = arith.constant 2 : index
    %c0_66 = arith.constant 0 : index
    %274 = vector.load %arg1[%c0_63, %c1_64, %c2_65, %c0_66] : memref<1x4x17x17xf32, #tpu.memory_space<vmem>>, vector<1x1x15x15xf32>
    %275 = vector.shape_cast %274 : vector<1x1x15x15xf32> to vector<1x15x15xf32>
    %c100 = arith.constant 100 : index
    %276 = memref.load %arg2[%c100] : memref<144xf32, #tpu.memory_space<smem>>
    %277 = vector.broadcast %276 : f32 to vector<1x15x15xf32>
    %278 = arith.mulf %277, %275 : vector<1x15x15xf32>
    %279 = arith.addf %261, %278 : vector<1x15x15xf32>
    %c101 = arith.constant 101 : index
    %280 = memref.load %arg2[%c101] : memref<144xf32, #tpu.memory_space<smem>>
    %281 = vector.broadcast %280 : f32 to vector<1x15x15xf32>
    %282 = arith.mulf %281, %275 : vector<1x15x15xf32>
    %283 = arith.addf %265, %282 : vector<1x15x15xf32>
    %c102 = arith.constant 102 : index
    %284 = memref.load %arg2[%c102] : memref<144xf32, #tpu.memory_space<smem>>
    %285 = vector.broadcast %284 : f32 to vector<1x15x15xf32>
    %286 = arith.mulf %285, %275 : vector<1x15x15xf32>
    %287 = arith.addf %269, %286 : vector<1x15x15xf32>
    %c103 = arith.constant 103 : index
    %288 = memref.load %arg2[%c103] : memref<144xf32, #tpu.memory_space<smem>>
    %289 = vector.broadcast %288 : f32 to vector<1x15x15xf32>
    %290 = arith.mulf %289, %275 : vector<1x15x15xf32>
    %291 = arith.addf %273, %290 : vector<1x15x15xf32>
    %c0_67 = arith.constant 0 : index
    %c1_68 = arith.constant 1 : index
    %c2_69 = arith.constant 2 : index
    %c1_70 = arith.constant 1 : index
    %292 = vector.load %arg1[%c0_67, %c1_68, %c2_69, %c1_70] : memref<1x4x17x17xf32, #tpu.memory_space<vmem>>, vector<1x1x15x15xf32>
    %293 = vector.shape_cast %292 : vector<1x1x15x15xf32> to vector<1x15x15xf32>
    %c116 = arith.constant 116 : index
    %294 = memref.load %arg2[%c116] : memref<144xf32, #tpu.memory_space<smem>>
    %295 = vector.broadcast %294 : f32 to vector<1x15x15xf32>
    %296 = arith.mulf %295, %293 : vector<1x15x15xf32>
    %297 = arith.addf %279, %296 : vector<1x15x15xf32>
    %c117 = arith.constant 117 : index
    %298 = memref.load %arg2[%c117] : memref<144xf32, #tpu.memory_space<smem>>
    %299 = vector.broadcast %298 : f32 to vector<1x15x15xf32>
    %300 = arith.mulf %299, %293 : vector<1x15x15xf32>
    %301 = arith.addf %283, %300 : vector<1x15x15xf32>
    %c118 = arith.constant 118 : index
    %302 = memref.load %arg2[%c118] : memref<144xf32, #tpu.memory_space<smem>>
    %303 = vector.broadcast %302 : f32 to vector<1x15x15xf32>
    %304 = arith.mulf %303, %293 : vector<1x15x15xf32>
    %305 = arith.addf %287, %304 : vector<1x15x15xf32>
    %c119 = arith.constant 119 : index
    %306 = memref.load %arg2[%c119] : memref<144xf32, #tpu.memory_space<smem>>
    %307 = vector.broadcast %306 : f32 to vector<1x15x15xf32>
    %308 = arith.mulf %307, %293 : vector<1x15x15xf32>
    %309 = arith.addf %291, %308 : vector<1x15x15xf32>
    %c0_71 = arith.constant 0 : index
    %c1_72 = arith.constant 1 : index
    %c2_73 = arith.constant 2 : index
    %c2_74 = arith.constant 2 : index
    %310 = vector.load %arg1[%c0_71, %c1_72, %c2_73, %c2_74] : memref<1x4x17x17xf32, #tpu.memory_space<vmem>>, vector<1x1x15x15xf32>
    %311 = vector.shape_cast %310 : vector<1x1x15x15xf32> to vector<1x15x15xf32>
    %c132 = arith.constant 132 : index
    %312 = memref.load %arg2[%c132] : memref<144xf32, #tpu.memory_space<smem>>
    %313 = vector.broadcast %312 : f32 to vector<1x15x15xf32>
    %314 = arith.mulf %313, %311 : vector<1x15x15xf32>
    %315 = arith.addf %297, %314 : vector<1x15x15xf32>
    %c133 = arith.constant 133 : index
    %316 = memref.load %arg2[%c133] : memref<144xf32, #tpu.memory_space<smem>>
    %317 = vector.broadcast %316 : f32 to vector<1x15x15xf32>
    %318 = arith.mulf %317, %311 : vector<1x15x15xf32>
    %319 = arith.addf %301, %318 : vector<1x15x15xf32>
    %c134 = arith.constant 134 : index
    %320 = memref.load %arg2[%c134] : memref<144xf32, #tpu.memory_space<smem>>
    %321 = vector.broadcast %320 : f32 to vector<1x15x15xf32>
    %322 = arith.mulf %321, %311 : vector<1x15x15xf32>
    %323 = arith.addf %305, %322 : vector<1x15x15xf32>
    %c135 = arith.constant 135 : index
    %324 = memref.load %arg2[%c135] : memref<144xf32, #tpu.memory_space<smem>>
    %325 = vector.broadcast %324 : f32 to vector<1x15x15xf32>
    %326 = arith.mulf %325, %311 : vector<1x15x15xf32>
    %327 = arith.addf %309, %326 : vector<1x15x15xf32>
    %c0_75 = arith.constant 0 : index
    %c2_76 = arith.constant 2 : index
    %c0_77 = arith.constant 0 : index
    %c0_78 = arith.constant 0 : index
    %328 = vector.load %arg1[%c0_75, %c2_76, %c0_77, %c0_78] : memref<1x4x17x17xf32, #tpu.memory_space<vmem>>, vector<1x1x15x15xf32>
    %329 = vector.shape_cast %328 : vector<1x1x15x15xf32> to vector<1x15x15xf32>
    %c8 = arith.constant 8 : index
    %330 = memref.load %arg2[%c8] : memref<144xf32, #tpu.memory_space<smem>>
    %331 = vector.broadcast %330 : f32 to vector<1x15x15xf32>
    %332 = arith.mulf %331, %329 : vector<1x15x15xf32>
    %333 = arith.addf %315, %332 : vector<1x15x15xf32>
    %c9 = arith.constant 9 : index
    %334 = memref.load %arg2[%c9] : memref<144xf32, #tpu.memory_space<smem>>
    %335 = vector.broadcast %334 : f32 to vector<1x15x15xf32>
    %336 = arith.mulf %335, %329 : vector<1x15x15xf32>
    %337 = arith.addf %319, %336 : vector<1x15x15xf32>
    %c10 = arith.constant 10 : index
    %338 = memref.load %arg2[%c10] : memref<144xf32, #tpu.memory_space<smem>>
    %339 = vector.broadcast %338 : f32 to vector<1x15x15xf32>
    %340 = arith.mulf %339, %329 : vector<1x15x15xf32>
    %341 = arith.addf %323, %340 : vector<1x15x15xf32>
    %c11 = arith.constant 11 : index
    %342 = memref.load %arg2[%c11] : memref<144xf32, #tpu.memory_space<smem>>
    %343 = vector.broadcast %342 : f32 to vector<1x15x15xf32>
    %344 = arith.mulf %343, %329 : vector<1x15x15xf32>
    %345 = arith.addf %327, %344 : vector<1x15x15xf32>
    %c0_79 = arith.constant 0 : index
    %c2_80 = arith.constant 2 : index
    %c0_81 = arith.constant 0 : index
    %c1_82 = arith.constant 1 : index
    %346 = vector.load %arg1[%c0_79, %c2_80, %c0_81, %c1_82] : memref<1x4x17x17xf32, #tpu.memory_space<vmem>>, vector<1x1x15x15xf32>
    %347 = vector.shape_cast %346 : vector<1x1x15x15xf32> to vector<1x15x15xf32>
    %c24 = arith.constant 24 : index
    %348 = memref.load %arg2[%c24] : memref<144xf32, #tpu.memory_space<smem>>
    %349 = vector.broadcast %348 : f32 to vector<1x15x15xf32>
    %350 = arith.mulf %349, %347 : vector<1x15x15xf32>
    %351 = arith.addf %333, %350 : vector<1x15x15xf32>
    %c25 = arith.constant 25 : index
    %352 = memref.load %arg2[%c25] : memref<144xf32, #tpu.memory_space<smem>>
    %353 = vector.broadcast %352 : f32 to vector<1x15x15xf32>
    %354 = arith.mulf %353, %347 : vector<1x15x15xf32>
    %355 = arith.addf %337, %354 : vector<1x15x15xf32>
    %c26 = arith.constant 26 : index
    %356 = memref.load %arg2[%c26] : memref<144xf32, #tpu.memory_space<smem>>
    %357 = vector.broadcast %356 : f32 to vector<1x15x15xf32>
    %358 = arith.mulf %357, %347 : vector<1x15x15xf32>
    %359 = arith.addf %341, %358 : vector<1x15x15xf32>
    %c27 = arith.constant 27 : index
    %360 = memref.load %arg2[%c27] : memref<144xf32, #tpu.memory_space<smem>>
    %361 = vector.broadcast %360 : f32 to vector<1x15x15xf32>
    %362 = arith.mulf %361, %347 : vector<1x15x15xf32>
    %363 = arith.addf %345, %362 : vector<1x15x15xf32>
    %c0_83 = arith.constant 0 : index
    %c2_84 = arith.constant 2 : index
    %c0_85 = arith.constant 0 : index
    %c2_86 = arith.constant 2 : index
    %364 = vector.load %arg1[%c0_83, %c2_84, %c0_85, %c2_86] : memref<1x4x17x17xf32, #tpu.memory_space<vmem>>, vector<1x1x15x15xf32>
    %365 = vector.shape_cast %364 : vector<1x1x15x15xf32> to vector<1x15x15xf32>
    %c40 = arith.constant 40 : index
    %366 = memref.load %arg2[%c40] : memref<144xf32, #tpu.memory_space<smem>>
    %367 = vector.broadcast %366 : f32 to vector<1x15x15xf32>
    %368 = arith.mulf %367, %365 : vector<1x15x15xf32>
    %369 = arith.addf %351, %368 : vector<1x15x15xf32>
    %c41 = arith.constant 41 : index
    %370 = memref.load %arg2[%c41] : memref<144xf32, #tpu.memory_space<smem>>
    %371 = vector.broadcast %370 : f32 to vector<1x15x15xf32>
    %372 = arith.mulf %371, %365 : vector<1x15x15xf32>
    %373 = arith.addf %355, %372 : vector<1x15x15xf32>
    %c42 = arith.constant 42 : index
    %374 = memref.load %arg2[%c42] : memref<144xf32, #tpu.memory_space<smem>>
    %375 = vector.broadcast %374 : f32 to vector<1x15x15xf32>
    %376 = arith.mulf %375, %365 : vector<1x15x15xf32>
    %377 = arith.addf %359, %376 : vector<1x15x15xf32>
    %c43 = arith.constant 43 : index
    %378 = memref.load %arg2[%c43] : memref<144xf32, #tpu.memory_space<smem>>
    %379 = vector.broadcast %378 : f32 to vector<1x15x15xf32>
    %380 = arith.mulf %379, %365 : vector<1x15x15xf32>
    %381 = arith.addf %363, %380 : vector<1x15x15xf32>
    %c0_87 = arith.constant 0 : index
    %c2_88 = arith.constant 2 : index
    %c1_89 = arith.constant 1 : index
    %c0_90 = arith.constant 0 : index
    %382 = vector.load %arg1[%c0_87, %c2_88, %c1_89, %c0_90] : memref<1x4x17x17xf32, #tpu.memory_space<vmem>>, vector<1x1x15x15xf32>
    %383 = vector.shape_cast %382 : vector<1x1x15x15xf32> to vector<1x15x15xf32>
    %c56 = arith.constant 56 : index
    %384 = memref.load %arg2[%c56] : memref<144xf32, #tpu.memory_space<smem>>
    %385 = vector.broadcast %384 : f32 to vector<1x15x15xf32>
    %386 = arith.mulf %385, %383 : vector<1x15x15xf32>
    %387 = arith.addf %369, %386 : vector<1x15x15xf32>
    %c57 = arith.constant 57 : index
    %388 = memref.load %arg2[%c57] : memref<144xf32, #tpu.memory_space<smem>>
    %389 = vector.broadcast %388 : f32 to vector<1x15x15xf32>
    %390 = arith.mulf %389, %383 : vector<1x15x15xf32>
    %391 = arith.addf %373, %390 : vector<1x15x15xf32>
    %c58 = arith.constant 58 : index
    %392 = memref.load %arg2[%c58] : memref<144xf32, #tpu.memory_space<smem>>
    %393 = vector.broadcast %392 : f32 to vector<1x15x15xf32>
    %394 = arith.mulf %393, %383 : vector<1x15x15xf32>
    %395 = arith.addf %377, %394 : vector<1x15x15xf32>
    %c59 = arith.constant 59 : index
    %396 = memref.load %arg2[%c59] : memref<144xf32, #tpu.memory_space<smem>>
    %397 = vector.broadcast %396 : f32 to vector<1x15x15xf32>
    %398 = arith.mulf %397, %383 : vector<1x15x15xf32>
    %399 = arith.addf %381, %398 : vector<1x15x15xf32>
    %c0_91 = arith.constant 0 : index
    %c2_92 = arith.constant 2 : index
    %c1_93 = arith.constant 1 : index
    %c1_94 = arith.constant 1 : index
    %400 = vector.load %arg1[%c0_91, %c2_92, %c1_93, %c1_94] : memref<1x4x17x17xf32, #tpu.memory_space<vmem>>, vector<1x1x15x15xf32>
    %401 = vector.shape_cast %400 : vector<1x1x15x15xf32> to vector<1x15x15xf32>
    %c72 = arith.constant 72 : index
    %402 = memref.load %arg2[%c72] : memref<144xf32, #tpu.memory_space<smem>>
    %403 = vector.broadcast %402 : f32 to vector<1x15x15xf32>
    %404 = arith.mulf %403, %401 : vector<1x15x15xf32>
    %405 = arith.addf %387, %404 : vector<1x15x15xf32>
    %c73 = arith.constant 73 : index
    %406 = memref.load %arg2[%c73] : memref<144xf32, #tpu.memory_space<smem>>
    %407 = vector.broadcast %406 : f32 to vector<1x15x15xf32>
    %408 = arith.mulf %407, %401 : vector<1x15x15xf32>
    %409 = arith.addf %391, %408 : vector<1x15x15xf32>
    %c74 = arith.constant 74 : index
    %410 = memref.load %arg2[%c74] : memref<144xf32, #tpu.memory_space<smem>>
    %411 = vector.broadcast %410 : f32 to vector<1x15x15xf32>
    %412 = arith.mulf %411, %401 : vector<1x15x15xf32>
    %413 = arith.addf %395, %412 : vector<1x15x15xf32>
    %c75 = arith.constant 75 : index
    %414 = memref.load %arg2[%c75] : memref<144xf32, #tpu.memory_space<smem>>
    %415 = vector.broadcast %414 : f32 to vector<1x15x15xf32>
    %416 = arith.mulf %415, %401 : vector<1x15x15xf32>
    %417 = arith.addf %399, %416 : vector<1x15x15xf32>
    %c0_95 = arith.constant 0 : index
    %c2_96 = arith.constant 2 : index
    %c1_97 = arith.constant 1 : index
    %c2_98 = arith.constant 2 : index
    %418 = vector.load %arg1[%c0_95, %c2_96, %c1_97, %c2_98] : memref<1x4x17x17xf32, #tpu.memory_space<vmem>>, vector<1x1x15x15xf32>
    %419 = vector.shape_cast %418 : vector<1x1x15x15xf32> to vector<1x15x15xf32>
    %c88 = arith.constant 88 : index
    %420 = memref.load %arg2[%c88] : memref<144xf32, #tpu.memory_space<smem>>
    %421 = vector.broadcast %420 : f32 to vector<1x15x15xf32>
    %422 = arith.mulf %421, %419 : vector<1x15x15xf32>
    %423 = arith.addf %405, %422 : vector<1x15x15xf32>
    %c89 = arith.constant 89 : index
    %424 = memref.load %arg2[%c89] : memref<144xf32, #tpu.memory_space<smem>>
    %425 = vector.broadcast %424 : f32 to vector<1x15x15xf32>
    %426 = arith.mulf %425, %419 : vector<1x15x15xf32>
    %427 = arith.addf %409, %426 : vector<1x15x15xf32>
    %c90 = arith.constant 90 : index
    %428 = memref.load %arg2[%c90] : memref<144xf32, #tpu.memory_space<smem>>
    %429 = vector.broadcast %428 : f32 to vector<1x15x15xf32>
    %430 = arith.mulf %429, %419 : vector<1x15x15xf32>
    %431 = arith.addf %413, %430 : vector<1x15x15xf32>
    %c91 = arith.constant 91 : index
    %432 = memref.load %arg2[%c91] : memref<144xf32, #tpu.memory_space<smem>>
    %433 = vector.broadcast %432 : f32 to vector<1x15x15xf32>
    %434 = arith.mulf %433, %419 : vector<1x15x15xf32>
    %435 = arith.addf %417, %434 : vector<1x15x15xf32>
    %c0_99 = arith.constant 0 : index
    %c2_100 = arith.constant 2 : index
    %c2_101 = arith.constant 2 : index
    %c0_102 = arith.constant 0 : index
    %436 = vector.load %arg1[%c0_99, %c2_100, %c2_101, %c0_102] : memref<1x4x17x17xf32, #tpu.memory_space<vmem>>, vector<1x1x15x15xf32>
    %437 = vector.shape_cast %436 : vector<1x1x15x15xf32> to vector<1x15x15xf32>
    %c104 = arith.constant 104 : index
    %438 = memref.load %arg2[%c104] : memref<144xf32, #tpu.memory_space<smem>>
    %439 = vector.broadcast %438 : f32 to vector<1x15x15xf32>
    %440 = arith.mulf %439, %437 : vector<1x15x15xf32>
    %441 = arith.addf %423, %440 : vector<1x15x15xf32>
    %c105 = arith.constant 105 : index
    %442 = memref.load %arg2[%c105] : memref<144xf32, #tpu.memory_space<smem>>
    %443 = vector.broadcast %442 : f32 to vector<1x15x15xf32>
    %444 = arith.mulf %443, %437 : vector<1x15x15xf32>
    %445 = arith.addf %427, %444 : vector<1x15x15xf32>
    %c106 = arith.constant 106 : index
    %446 = memref.load %arg2[%c106] : memref<144xf32, #tpu.memory_space<smem>>
    %447 = vector.broadcast %446 : f32 to vector<1x15x15xf32>
    %448 = arith.mulf %447, %437 : vector<1x15x15xf32>
    %449 = arith.addf %431, %448 : vector<1x15x15xf32>
    %c107 = arith.constant 107 : index
    %450 = memref.load %arg2[%c107] : memref<144xf32, #tpu.memory_space<smem>>
    %451 = vector.broadcast %450 : f32 to vector<1x15x15xf32>
    %452 = arith.mulf %451, %437 : vector<1x15x15xf32>
    %453 = arith.addf %435, %452 : vector<1x15x15xf32>
    %c0_103 = arith.constant 0 : index
    %c2_104 = arith.constant 2 : index
    %c2_105 = arith.constant 2 : index
    %c1_106 = arith.constant 1 : index
    %454 = vector.load %arg1[%c0_103, %c2_104, %c2_105, %c1_106] : memref<1x4x17x17xf32, #tpu.memory_space<vmem>>, vector<1x1x15x15xf32>
    %455 = vector.shape_cast %454 : vector<1x1x15x15xf32> to vector<1x15x15xf32>
    %c120 = arith.constant 120 : index
    %456 = memref.load %arg2[%c120] : memref<144xf32, #tpu.memory_space<smem>>
    %457 = vector.broadcast %456 : f32 to vector<1x15x15xf32>
    %458 = arith.mulf %457, %455 : vector<1x15x15xf32>
    %459 = arith.addf %441, %458 : vector<1x15x15xf32>
    %c121 = arith.constant 121 : index
    %460 = memref.load %arg2[%c121] : memref<144xf32, #tpu.memory_space<smem>>
    %461 = vector.broadcast %460 : f32 to vector<1x15x15xf32>
    %462 = arith.mulf %461, %455 : vector<1x15x15xf32>
    %463 = arith.addf %445, %462 : vector<1x15x15xf32>
    %c122 = arith.constant 122 : index
    %464 = memref.load %arg2[%c122] : memref<144xf32, #tpu.memory_space<smem>>
    %465 = vector.broadcast %464 : f32 to vector<1x15x15xf32>
    %466 = arith.mulf %465, %455 : vector<1x15x15xf32>
    %467 = arith.addf %449, %466 : vector<1x15x15xf32>
    %c123 = arith.constant 123 : index
    %468 = memref.load %arg2[%c123] : memref<144xf32, #tpu.memory_space<smem>>
    %469 = vector.broadcast %468 : f32 to vector<1x15x15xf32>
    %470 = arith.mulf %469, %455 : vector<1x15x15xf32>
    %471 = arith.addf %453, %470 : vector<1x15x15xf32>
    %c0_107 = arith.constant 0 : index
    %c2_108 = arith.constant 2 : index
    %c2_109 = arith.constant 2 : index
    %c2_110 = arith.constant 2 : index
    %472 = vector.load %arg1[%c0_107, %c2_108, %c2_109, %c2_110] : memref<1x4x17x17xf32, #tpu.memory_space<vmem>>, vector<1x1x15x15xf32>
    %473 = vector.shape_cast %472 : vector<1x1x15x15xf32> to vector<1x15x15xf32>
    %c136 = arith.constant 136 : index
    %474 = memref.load %arg2[%c136] : memref<144xf32, #tpu.memory_space<smem>>
    %475 = vector.broadcast %474 : f32 to vector<1x15x15xf32>
    %476 = arith.mulf %475, %473 : vector<1x15x15xf32>
    %477 = arith.addf %459, %476 : vector<1x15x15xf32>
    %c137 = arith.constant 137 : index
    %478 = memref.load %arg2[%c137] : memref<144xf32, #tpu.memory_space<smem>>
    %479 = vector.broadcast %478 : f32 to vector<1x15x15xf32>
    %480 = arith.mulf %479, %473 : vector<1x15x15xf32>
    %481 = arith.addf %463, %480 : vector<1x15x15xf32>
    %c138 = arith.constant 138 : index
    %482 = memref.load %arg2[%c138] : memref<144xf32, #tpu.memory_space<smem>>
    %483 = vector.broadcast %482 : f32 to vector<1x15x15xf32>
    %484 = arith.mulf %483, %473 : vector<1x15x15xf32>
    %485 = arith.addf %467, %484 : vector<1x15x15xf32>
    %c139 = arith.constant 139 : index
    %486 = memref.load %arg2[%c139] : memref<144xf32, #tpu.memory_space<smem>>
    %487 = vector.broadcast %486 : f32 to vector<1x15x15xf32>
    %488 = arith.mulf %487, %473 : vector<1x15x15xf32>
    %489 = arith.addf %471, %488 : vector<1x15x15xf32>
    %c0_111 = arith.constant 0 : index
    %c3_112 = arith.constant 3 : index
    %c0_113 = arith.constant 0 : index
    %c0_114 = arith.constant 0 : index
    %490 = vector.load %arg1[%c0_111, %c3_112, %c0_113, %c0_114] : memref<1x4x17x17xf32, #tpu.memory_space<vmem>>, vector<1x1x15x15xf32>
    %491 = vector.shape_cast %490 : vector<1x1x15x15xf32> to vector<1x15x15xf32>
    %c12 = arith.constant 12 : index
    %492 = memref.load %arg2[%c12] : memref<144xf32, #tpu.memory_space<smem>>
    %493 = vector.broadcast %492 : f32 to vector<1x15x15xf32>
    %494 = arith.mulf %493, %491 : vector<1x15x15xf32>
    %495 = arith.addf %477, %494 : vector<1x15x15xf32>
    %c13 = arith.constant 13 : index
    %496 = memref.load %arg2[%c13] : memref<144xf32, #tpu.memory_space<smem>>
    %497 = vector.broadcast %496 : f32 to vector<1x15x15xf32>
    %498 = arith.mulf %497, %491 : vector<1x15x15xf32>
    %499 = arith.addf %481, %498 : vector<1x15x15xf32>
    %c14 = arith.constant 14 : index
    %500 = memref.load %arg2[%c14] : memref<144xf32, #tpu.memory_space<smem>>
    %501 = vector.broadcast %500 : f32 to vector<1x15x15xf32>
    %502 = arith.mulf %501, %491 : vector<1x15x15xf32>
    %503 = arith.addf %485, %502 : vector<1x15x15xf32>
    %c15 = arith.constant 15 : index
    %504 = memref.load %arg2[%c15] : memref<144xf32, #tpu.memory_space<smem>>
    %505 = vector.broadcast %504 : f32 to vector<1x15x15xf32>
    %506 = arith.mulf %505, %491 : vector<1x15x15xf32>
    %507 = arith.addf %489, %506 : vector<1x15x15xf32>
    %c0_115 = arith.constant 0 : index
    %c3_116 = arith.constant 3 : index
    %c0_117 = arith.constant 0 : index
    %c1_118 = arith.constant 1 : index
    %508 = vector.load %arg1[%c0_115, %c3_116, %c0_117, %c1_118] : memref<1x4x17x17xf32, #tpu.memory_space<vmem>>, vector<1x1x15x15xf32>
    %509 = vector.shape_cast %508 : vector<1x1x15x15xf32> to vector<1x15x15xf32>
    %c28 = arith.constant 28 : index
    %510 = memref.load %arg2[%c28] : memref<144xf32, #tpu.memory_space<smem>>
    %511 = vector.broadcast %510 : f32 to vector<1x15x15xf32>
    %512 = arith.mulf %511, %509 : vector<1x15x15xf32>
    %513 = arith.addf %495, %512 : vector<1x15x15xf32>
    %c29 = arith.constant 29 : index
    %514 = memref.load %arg2[%c29] : memref<144xf32, #tpu.memory_space<smem>>
    %515 = vector.broadcast %514 : f32 to vector<1x15x15xf32>
    %516 = arith.mulf %515, %509 : vector<1x15x15xf32>
    %517 = arith.addf %499, %516 : vector<1x15x15xf32>
    %c30 = arith.constant 30 : index
    %518 = memref.load %arg2[%c30] : memref<144xf32, #tpu.memory_space<smem>>
    %519 = vector.broadcast %518 : f32 to vector<1x15x15xf32>
    %520 = arith.mulf %519, %509 : vector<1x15x15xf32>
    %521 = arith.addf %503, %520 : vector<1x15x15xf32>
    %c31 = arith.constant 31 : index
    %522 = memref.load %arg2[%c31] : memref<144xf32, #tpu.memory_space<smem>>
    %523 = vector.broadcast %522 : f32 to vector<1x15x15xf32>
    %524 = arith.mulf %523, %509 : vector<1x15x15xf32>
    %525 = arith.addf %507, %524 : vector<1x15x15xf32>
    %c0_119 = arith.constant 0 : index
    %c3_120 = arith.constant 3 : index
    %c0_121 = arith.constant 0 : index
    %c2_122 = arith.constant 2 : index
    %526 = vector.load %arg1[%c0_119, %c3_120, %c0_121, %c2_122] : memref<1x4x17x17xf32, #tpu.memory_space<vmem>>, vector<1x1x15x15xf32>
    %527 = vector.shape_cast %526 : vector<1x1x15x15xf32> to vector<1x15x15xf32>
    %c44 = arith.constant 44 : index
    %528 = memref.load %arg2[%c44] : memref<144xf32, #tpu.memory_space<smem>>
    %529 = vector.broadcast %528 : f32 to vector<1x15x15xf32>
    %530 = arith.mulf %529, %527 : vector<1x15x15xf32>
    %531 = arith.addf %513, %530 : vector<1x15x15xf32>
    %c45 = arith.constant 45 : index
    %532 = memref.load %arg2[%c45] : memref<144xf32, #tpu.memory_space<smem>>
    %533 = vector.broadcast %532 : f32 to vector<1x15x15xf32>
    %534 = arith.mulf %533, %527 : vector<1x15x15xf32>
    %535 = arith.addf %517, %534 : vector<1x15x15xf32>
    %c46 = arith.constant 46 : index
    %536 = memref.load %arg2[%c46] : memref<144xf32, #tpu.memory_space<smem>>
    %537 = vector.broadcast %536 : f32 to vector<1x15x15xf32>
    %538 = arith.mulf %537, %527 : vector<1x15x15xf32>
    %539 = arith.addf %521, %538 : vector<1x15x15xf32>
    %c47 = arith.constant 47 : index
    %540 = memref.load %arg2[%c47] : memref<144xf32, #tpu.memory_space<smem>>
    %541 = vector.broadcast %540 : f32 to vector<1x15x15xf32>
    %542 = arith.mulf %541, %527 : vector<1x15x15xf32>
    %543 = arith.addf %525, %542 : vector<1x15x15xf32>
    %c0_123 = arith.constant 0 : index
    %c3_124 = arith.constant 3 : index
    %c1_125 = arith.constant 1 : index
    %c0_126 = arith.constant 0 : index
    %544 = vector.load %arg1[%c0_123, %c3_124, %c1_125, %c0_126] : memref<1x4x17x17xf32, #tpu.memory_space<vmem>>, vector<1x1x15x15xf32>
    %545 = vector.shape_cast %544 : vector<1x1x15x15xf32> to vector<1x15x15xf32>
    %c60 = arith.constant 60 : index
    %546 = memref.load %arg2[%c60] : memref<144xf32, #tpu.memory_space<smem>>
    %547 = vector.broadcast %546 : f32 to vector<1x15x15xf32>
    %548 = arith.mulf %547, %545 : vector<1x15x15xf32>
    %549 = arith.addf %531, %548 : vector<1x15x15xf32>
    %c61 = arith.constant 61 : index
    %550 = memref.load %arg2[%c61] : memref<144xf32, #tpu.memory_space<smem>>
    %551 = vector.broadcast %550 : f32 to vector<1x15x15xf32>
    %552 = arith.mulf %551, %545 : vector<1x15x15xf32>
    %553 = arith.addf %535, %552 : vector<1x15x15xf32>
    %c62 = arith.constant 62 : index
    %554 = memref.load %arg2[%c62] : memref<144xf32, #tpu.memory_space<smem>>
    %555 = vector.broadcast %554 : f32 to vector<1x15x15xf32>
    %556 = arith.mulf %555, %545 : vector<1x15x15xf32>
    %557 = arith.addf %539, %556 : vector<1x15x15xf32>
    %c63 = arith.constant 63 : index
    %558 = memref.load %arg2[%c63] : memref<144xf32, #tpu.memory_space<smem>>
    %559 = vector.broadcast %558 : f32 to vector<1x15x15xf32>
    %560 = arith.mulf %559, %545 : vector<1x15x15xf32>
    %561 = arith.addf %543, %560 : vector<1x15x15xf32>
    %c0_127 = arith.constant 0 : index
    %c3_128 = arith.constant 3 : index
    %c1_129 = arith.constant 1 : index
    %c1_130 = arith.constant 1 : index
    %562 = vector.load %arg1[%c0_127, %c3_128, %c1_129, %c1_130] : memref<1x4x17x17xf32, #tpu.memory_space<vmem>>, vector<1x1x15x15xf32>
    %563 = vector.shape_cast %562 : vector<1x1x15x15xf32> to vector<1x15x15xf32>
    %c76 = arith.constant 76 : index
    %564 = memref.load %arg2[%c76] : memref<144xf32, #tpu.memory_space<smem>>
    %565 = vector.broadcast %564 : f32 to vector<1x15x15xf32>
    %566 = arith.mulf %565, %563 : vector<1x15x15xf32>
    %567 = arith.addf %549, %566 : vector<1x15x15xf32>
    %c77 = arith.constant 77 : index
    %568 = memref.load %arg2[%c77] : memref<144xf32, #tpu.memory_space<smem>>
    %569 = vector.broadcast %568 : f32 to vector<1x15x15xf32>
    %570 = arith.mulf %569, %563 : vector<1x15x15xf32>
    %571 = arith.addf %553, %570 : vector<1x15x15xf32>
    %c78 = arith.constant 78 : index
    %572 = memref.load %arg2[%c78] : memref<144xf32, #tpu.memory_space<smem>>
    %573 = vector.broadcast %572 : f32 to vector<1x15x15xf32>
    %574 = arith.mulf %573, %563 : vector<1x15x15xf32>
    %575 = arith.addf %557, %574 : vector<1x15x15xf32>
    %c79 = arith.constant 79 : index
    %576 = memref.load %arg2[%c79] : memref<144xf32, #tpu.memory_space<smem>>
    %577 = vector.broadcast %576 : f32 to vector<1x15x15xf32>
    %578 = arith.mulf %577, %563 : vector<1x15x15xf32>
    %579 = arith.addf %561, %578 : vector<1x15x15xf32>
    %c0_131 = arith.constant 0 : index
    %c3_132 = arith.constant 3 : index
    %c1_133 = arith.constant 1 : index
    %c2_134 = arith.constant 2 : index
    %580 = vector.load %arg1[%c0_131, %c3_132, %c1_133, %c2_134] : memref<1x4x17x17xf32, #tpu.memory_space<vmem>>, vector<1x1x15x15xf32>
    %581 = vector.shape_cast %580 : vector<1x1x15x15xf32> to vector<1x15x15xf32>
    %c92 = arith.constant 92 : index
    %582 = memref.load %arg2[%c92] : memref<144xf32, #tpu.memory_space<smem>>
    %583 = vector.broadcast %582 : f32 to vector<1x15x15xf32>
    %584 = arith.mulf %583, %581 : vector<1x15x15xf32>
    %585 = arith.addf %567, %584 : vector<1x15x15xf32>
    %c93 = arith.constant 93 : index
    %586 = memref.load %arg2[%c93] : memref<144xf32, #tpu.memory_space<smem>>
    %587 = vector.broadcast %586 : f32 to vector<1x15x15xf32>
    %588 = arith.mulf %587, %581 : vector<1x15x15xf32>
    %589 = arith.addf %571, %588 : vector<1x15x15xf32>
    %c94 = arith.constant 94 : index
    %590 = memref.load %arg2[%c94] : memref<144xf32, #tpu.memory_space<smem>>
    %591 = vector.broadcast %590 : f32 to vector<1x15x15xf32>
    %592 = arith.mulf %591, %581 : vector<1x15x15xf32>
    %593 = arith.addf %575, %592 : vector<1x15x15xf32>
    %c95 = arith.constant 95 : index
    %594 = memref.load %arg2[%c95] : memref<144xf32, #tpu.memory_space<smem>>
    %595 = vector.broadcast %594 : f32 to vector<1x15x15xf32>
    %596 = arith.mulf %595, %581 : vector<1x15x15xf32>
    %597 = arith.addf %579, %596 : vector<1x15x15xf32>
    %c0_135 = arith.constant 0 : index
    %c3_136 = arith.constant 3 : index
    %c2_137 = arith.constant 2 : index
    %c0_138 = arith.constant 0 : index
    %598 = vector.load %arg1[%c0_135, %c3_136, %c2_137, %c0_138] : memref<1x4x17x17xf32, #tpu.memory_space<vmem>>, vector<1x1x15x15xf32>
    %599 = vector.shape_cast %598 : vector<1x1x15x15xf32> to vector<1x15x15xf32>
    %c108 = arith.constant 108 : index
    %600 = memref.load %arg2[%c108] : memref<144xf32, #tpu.memory_space<smem>>
    %601 = vector.broadcast %600 : f32 to vector<1x15x15xf32>
    %602 = arith.mulf %601, %599 : vector<1x15x15xf32>
    %603 = arith.addf %585, %602 : vector<1x15x15xf32>
    %c109 = arith.constant 109 : index
    %604 = memref.load %arg2[%c109] : memref<144xf32, #tpu.memory_space<smem>>
    %605 = vector.broadcast %604 : f32 to vector<1x15x15xf32>
    %606 = arith.mulf %605, %599 : vector<1x15x15xf32>
    %607 = arith.addf %589, %606 : vector<1x15x15xf32>
    %c110 = arith.constant 110 : index
    %608 = memref.load %arg2[%c110] : memref<144xf32, #tpu.memory_space<smem>>
    %609 = vector.broadcast %608 : f32 to vector<1x15x15xf32>
    %610 = arith.mulf %609, %599 : vector<1x15x15xf32>
    %611 = arith.addf %593, %610 : vector<1x15x15xf32>
    %c111 = arith.constant 111 : index
    %612 = memref.load %arg2[%c111] : memref<144xf32, #tpu.memory_space<smem>>
    %613 = vector.broadcast %612 : f32 to vector<1x15x15xf32>
    %614 = arith.mulf %613, %599 : vector<1x15x15xf32>
    %615 = arith.addf %597, %614 : vector<1x15x15xf32>
    %c0_139 = arith.constant 0 : index
    %c3_140 = arith.constant 3 : index
    %c2_141 = arith.constant 2 : index
    %c1_142 = arith.constant 1 : index
    %616 = vector.load %arg1[%c0_139, %c3_140, %c2_141, %c1_142] : memref<1x4x17x17xf32, #tpu.memory_space<vmem>>, vector<1x1x15x15xf32>
    %617 = vector.shape_cast %616 : vector<1x1x15x15xf32> to vector<1x15x15xf32>
    %c124 = arith.constant 124 : index
    %618 = memref.load %arg2[%c124] : memref<144xf32, #tpu.memory_space<smem>>
    %619 = vector.broadcast %618 : f32 to vector<1x15x15xf32>
    %620 = arith.mulf %619, %617 : vector<1x15x15xf32>
    %621 = arith.addf %603, %620 : vector<1x15x15xf32>
    %c125 = arith.constant 125 : index
    %622 = memref.load %arg2[%c125] : memref<144xf32, #tpu.memory_space<smem>>
    %623 = vector.broadcast %622 : f32 to vector<1x15x15xf32>
    %624 = arith.mulf %623, %617 : vector<1x15x15xf32>
    %625 = arith.addf %607, %624 : vector<1x15x15xf32>
    %c126 = arith.constant 126 : index
    %626 = memref.load %arg2[%c126] : memref<144xf32, #tpu.memory_space<smem>>
    %627 = vector.broadcast %626 : f32 to vector<1x15x15xf32>
    %628 = arith.mulf %627, %617 : vector<1x15x15xf32>
    %629 = arith.addf %611, %628 : vector<1x15x15xf32>
    %c127 = arith.constant 127 : index
    %630 = memref.load %arg2[%c127] : memref<144xf32, #tpu.memory_space<smem>>
    %631 = vector.broadcast %630 : f32 to vector<1x15x15xf32>
    %632 = arith.mulf %631, %617 : vector<1x15x15xf32>
    %633 = arith.addf %615, %632 : vector<1x15x15xf32>
    %c0_143 = arith.constant 0 : index
    %c3_144 = arith.constant 3 : index
    %c2_145 = arith.constant 2 : index
    %c2_146 = arith.constant 2 : index
    %634 = vector.load %arg1[%c0_143, %c3_144, %c2_145, %c2_146] : memref<1x4x17x17xf32, #tpu.memory_space<vmem>>, vector<1x1x15x15xf32>
    %635 = vector.shape_cast %634 : vector<1x1x15x15xf32> to vector<1x15x15xf32>
    %c140 = arith.constant 140 : index
    %636 = memref.load %arg2[%c140] : memref<144xf32, #tpu.memory_space<smem>>
    %637 = vector.broadcast %636 : f32 to vector<1x15x15xf32>
    %638 = arith.mulf %637, %635 : vector<1x15x15xf32>
    %639 = arith.addf %621, %638 : vector<1x15x15xf32>
    %c141 = arith.constant 141 : index
    %640 = memref.load %arg2[%c141] : memref<144xf32, #tpu.memory_space<smem>>
    %641 = vector.broadcast %640 : f32 to vector<1x15x15xf32>
    %642 = arith.mulf %641, %635 : vector<1x15x15xf32>
    %643 = arith.addf %625, %642 : vector<1x15x15xf32>
    %c142 = arith.constant 142 : index
    %644 = memref.load %arg2[%c142] : memref<144xf32, #tpu.memory_space<smem>>
    %645 = vector.broadcast %644 : f32 to vector<1x15x15xf32>
    %646 = arith.mulf %645, %635 : vector<1x15x15xf32>
    %647 = arith.addf %629, %646 : vector<1x15x15xf32>
    %c143 = arith.constant 143 : index
    %648 = memref.load %arg2[%c143] : memref<144xf32, #tpu.memory_space<smem>>
    %649 = vector.broadcast %648 : f32 to vector<1x15x15xf32>
    %650 = arith.mulf %649, %635 : vector<1x15x15xf32>
    %651 = arith.addf %633, %650 : vector<1x15x15xf32>
    %c0_147 = arith.constant 0 : index
    %652 = memref.load %arg3[%c0_147] : memref<4xf32, #tpu.memory_space<smem>>
    %653 = vector.broadcast %652 : f32 to vector<1x15x15xf32>
    %654 = arith.addf %639, %653 : vector<1x15x15xf32>
    %cst_148 = arith.constant 0.000000e+00 : f32
    %655 = vector.broadcast %cst_148 : f32 to vector<1x15x15xf32>
    %656 = arith.cmpf oge, %654, %655 : vector<1x15x15xf32>
    %cst_149 = arith.constant 0.00999999977 : f32
    %657 = vector.broadcast %cst_149 : f32 to vector<1x15x15xf32>
    %658 = arith.mulf %657, %654 : vector<1x15x15xf32>
    %659 = arith.select %656, %654, %658 : vector<1x15x15xi1>, vector<1x15x15xf32>
    %cst_150 = arith.constant 0.000000e+00 : f32
    %660 = vector.broadcast %cst_150 : f32 to vector<1x15x15xf32>
    %661 = arith.subf %660, %659 : vector<1x15x15xf32>
    %662 = math.exp %661 : vector<1x15x15xf32>
    %cst_151 = arith.constant 1.000000e+00 : f32
    %663 = vector.broadcast %cst_151 : f32 to vector<1x15x15xf32>
    %664 = arith.addf %663, %662 : vector<1x15x15xf32>
    %665 = tpu.reciprocal %664 {approx = true} : vector<1x15x15xf32> -> vector<1x15x15xf32>
    %c0_152 = arith.constant 0 : index
    %c0_153 = arith.constant 0 : index
    %c0_154 = arith.constant 0 : index
    %c0_155 = arith.constant 0 : index
    %666 = vector.load %arg4[%c0_152, %c0_153, %c0_154, %c0_155] : memref<1x4x15x15xf32, #tpu.memory_space<vmem>>, vector<1x1x15x15xf32>
    %667 = vector.shape_cast %666 : vector<1x1x15x15xf32> to vector<1x15x15xf32>
    %668 = vector.shape_cast %665 : vector<1x15x15xf32> to vector<1x1x15x15xf32>
    tpu.vector_store %arg4[%c0_152, %c0_153, %c0_154, %c0_155], %668 {strides = array<i32>} : memref<1x4x15x15xf32, #tpu.memory_space<vmem>>, vector<1x1x15x15xf32>,
    %c1_156 = arith.constant 1 : index
    %669 = memref.load %arg3[%c1_156] : memref<4xf32, #tpu.memory_space<smem>>
    %670 = vector.broadcast %669 : f32 to vector<1x15x15xf32>
    %671 = arith.addf %643, %670 : vector<1x15x15xf32>
    %cst_157 = arith.constant 0.000000e+00 : f32
    %672 = vector.broadcast %cst_157 : f32 to vector<1x15x15xf32>
    %673 = arith.cmpf oge, %671, %672 : vector<1x15x15xf32>
    %cst_158 = arith.constant 0.00999999977 : f32
    %674 = vector.broadcast %cst_158 : f32 to vector<1x15x15xf32>
    %675 = arith.mulf %674, %671 : vector<1x15x15xf32>
    %676 = arith.select %673, %671, %675 : vector<1x15x15xi1>, vector<1x15x15xf32>
    %cst_159 = arith.constant 0.000000e+00 : f32
    %677 = vector.broadcast %cst_159 : f32 to vector<1x15x15xf32>
    %678 = arith.subf %677, %676 : vector<1x15x15xf32>
    %679 = math.exp %678 : vector<1x15x15xf32>
    %cst_160 = arith.constant 1.000000e+00 : f32
    %680 = vector.broadcast %cst_160 : f32 to vector<1x15x15xf32>
    %681 = arith.addf %680, %679 : vector<1x15x15xf32>
    %682 = tpu.reciprocal %681 {approx = true} : vector<1x15x15xf32> -> vector<1x15x15xf32>
    %c0_161 = arith.constant 0 : index
    %c1_162 = arith.constant 1 : index
    %c0_163 = arith.constant 0 : index
    %c0_164 = arith.constant 0 : index
    %683 = vector.load %arg4[%c0_161, %c1_162, %c0_163, %c0_164] : memref<1x4x15x15xf32, #tpu.memory_space<vmem>>, vector<1x1x15x15xf32>
    %684 = vector.shape_cast %683 : vector<1x1x15x15xf32> to vector<1x15x15xf32>
    %685 = vector.shape_cast %682 : vector<1x15x15xf32> to vector<1x1x15x15xf32>
    tpu.vector_store %arg4[%c0_161, %c1_162, %c0_163, %c0_164], %685 {strides = array<i32>} : memref<1x4x15x15xf32, #tpu.memory_space<vmem>>, vector<1x1x15x15xf32>,
    %c2_165 = arith.constant 2 : index
    %686 = memref.load %arg3[%c2_165] : memref<4xf32, #tpu.memory_space<smem>>
    %687 = vector.broadcast %686 : f32 to vector<1x15x15xf32>
    %688 = arith.addf %647, %687 : vector<1x15x15xf32>
    %cst_166 = arith.constant 0.000000e+00 : f32
    %689 = vector.broadcast %cst_166 : f32 to vector<1x15x15xf32>
    %690 = arith.cmpf oge, %688, %689 : vector<1x15x15xf32>
    %cst_167 = arith.constant 0.00999999977 : f32
    %691 = vector.broadcast %cst_167 : f32 to vector<1x15x15xf32>
    %692 = arith.mulf %691, %688 : vector<1x15x15xf32>
    %693 = arith.select %690, %688, %692 : vector<1x15x15xi1>, vector<1x15x15xf32>
    %cst_168 = arith.constant 0.000000e+00 : f32
    %694 = vector.broadcast %cst_168 : f32 to vector<1x15x15xf32>
    %695 = arith.subf %694, %693 : vector<1x15x15xf32>
    %696 = math.exp %695 : vector<1x15x15xf32>
    %cst_169 = arith.constant 1.000000e+00 : f32
    %697 = vector.broadcast %cst_169 : f32 to vector<1x15x15xf32>
    %698 = arith.addf %697, %696 : vector<1x15x15xf32>
    %699 = tpu.reciprocal %698 {approx = true} : vector<1x15x15xf32> -> vector<1x15x15xf32>
    %c0_170 = arith.constant 0 : index
    %c2_171 = arith.constant 2 : index
    %c0_172 = arith.constant 0 : index
    %c0_173 = arith.constant 0 : index
    %700 = vector.load %arg4[%c0_170, %c2_171, %c0_172, %c0_173] : memref<1x4x15x15xf32, #tpu.memory_space<vmem>>, vector<1x1x15x15xf32>
    %701 = vector.shape_cast %700 : vector<1x1x15x15xf32> to vector<1x15x15xf32>
    %702 = vector.shape_cast %699 : vector<1x15x15xf32> to vector<1x1x15x15xf32>
    tpu.vector_store %arg4[%c0_170, %c2_171, %c0_172, %c0_173], %702 {strides = array<i32>} : memref<1x4x15x15xf32, #tpu.memory_space<vmem>>, vector<1x1x15x15xf32>,
    %c3_174 = arith.constant 3 : index
    %703 = memref.load %arg3[%c3_174] : memref<4xf32, #tpu.memory_space<smem>>
    %704 = vector.broadcast %703 : f32 to vector<1x15x15xf32>
    %705 = arith.addf %651, %704 : vector<1x15x15xf32>
    %cst_175 = arith.constant 0.000000e+00 : f32
    %706 = vector.broadcast %cst_175 : f32 to vector<1x15x15xf32>
    %707 = arith.cmpf oge, %705, %706 : vector<1x15x15xf32>
    %cst_176 = arith.constant 0.00999999977 : f32
    %708 = vector.broadcast %cst_176 : f32 to vector<1x15x15xf32>
    %709 = arith.mulf %708, %705 : vector<1x15x15xf32>
    %710 = arith.select %707, %705, %709 : vector<1x15x15xi1>, vector<1x15x15xf32>
    %cst_177 = arith.constant 0.000000e+00 : f32
    %711 = vector.broadcast %cst_177 : f32 to vector<1x15x15xf32>
    %712 = arith.subf %711, %710 : vector<1x15x15xf32>
    %713 = math.exp %712 : vector<1x15x15xf32>
    %cst_178 = arith.constant 1.000000e+00 : f32
    %714 = vector.broadcast %cst_178 : f32 to vector<1x15x15xf32>
    %715 = arith.addf %714, %713 : vector<1x15x15xf32>
    %716 = tpu.reciprocal %715 {approx = true} : vector<1x15x15xf32> -> vector<1x15x15xf32>
    %c0_179 = arith.constant 0 : index
    %c3_180 = arith.constant 3 : index
    %c0_181 = arith.constant 0 : index
    %c0_182 = arith.constant 0 : index
    %717 = vector.load %arg4[%c0_179, %c3_180, %c0_181, %c0_182] : memref<1x4x15x15xf32, #tpu.memory_space<vmem>>, vector<1x1x15x15xf32>
    %718 = vector.shape_cast %717 : vector<1x1x15x15xf32> to vector<1x15x15xf32>
    %719 = vector.shape_cast %716 : vector<1x15x15xf32> to vector<1x1x15x15xf32>
    tpu.vector_store %arg4[%c0_179, %c3_180, %c0_181, %c0_182], %719 {strides = array<i32>} : memref<1x4x15x15xf32, #tpu.memory_space<vmem>>, vector<1x1x15x15xf32>,
    return
  }
  func.func @transform_0(%arg0: i32) -> (i32, i32, i32, i32) {
    %c0_i32 = arith.constant 0 : i32
    %c0_i32_0 = arith.constant 0 : i32
    %c0_i32_1 = arith.constant 0 : i32
    %c0_i32_2 = arith.constant 0 : i32
    return %arg0, %c0_i32, %c0_i32_0, %c0_i32_1 : i32, i32, i32, i32
  }
  func.func @transform_1(%arg0: i32) -> i32 {
    %c0_i32 = arith.constant 0 : i32
    %c0_i32_0 = arith.constant 0 : i32
    return %c0_i32 : i32
  }
  func.func @transform_2(%arg0: i32) -> i32 {
    %c0_i32 = arith.constant 0 : i32
    %c0_i32_0 = arith.constant 0 : i32
    return %c0_i32 : i32
  }
  func.func @transform_3(%arg0: i32) -> (i32, i32, i32, i32) {
    %c0_i32 = arith.constant 0 : i32
    %c0_i32_0 = arith.constant 0 : i32
    %c0_i32_1 = arith.constant 0 : i32
    %c0_i32_2 = arith.constant 0 : i32
    return %arg0, %c0_i32, %c0_i32_0, %c0_i32_1 : i32, i32, i32, i32
  }
}

</mosaic_0001>

<llo_original>
// kernel: _lambda_.3
$region0: #{_lambda_.3}
  #allocation0 [shape = 'u32[]', space=smem, size = 0x4, offset = 0x4, fixed_abs, tag = 'smem constant byte address 0x4 - core index']
  #allocation1 [shape = 'u32[144,128]{1,0:T(1,128)}', space=vmem, size = 0x12000, scoped, tag = 'internal scratch']
  #allocation2 [shape = 'f32[16,256]{1,0:T(8,128)}', space=vmem, size = 0x4000, scoped, tag = 'scratch operand']
  %s0 = inlined_call_operand.vmem [shape: bf16[16,128], index: 0, kind: input, shape index: {}]
  %s1 = inlined_call_operand.vmem [shape: bf16[128,256], index: 1, kind: input, shape index: {}]
  %s2 = inlined_call_operand.vmem [shape: f32[1,256], index: 2, kind: input, shape index: {}]
  %s3 = inlined_call_operand.vmem [shape: f32[16,256], index: 3, kind: output, shape index: {}]
  %s4 = sld [smem:[#allocation0]]
  $region30: #{_lambda_.3} parent=0
    _
  %s6 = ssub.s32 1, %s4
  %s7 = scalar_select 0, %s6, %s4
  // Predicated region
  $region2: #{_lambda_.3} parent=0 // pred_check
    _
  $region3: #{_lambda_.3} parent=0 // pred_check_branch
    %9 = sbr.rel (0) target = $region5
  $region4: #{_lambda_.3} parent=0 // pred_region
    _
  $region5: #{_lambda_.3} parent=0 // pred_fallthru
    _
  // Predicated region
  $region6: #{_lambda_.3} parent=0 // pred_check
    _
  $region7: #{_lambda_.3} parent=0 // pred_check_branch
    %11 = sbr.rel (0) target = $region9
  $region8: #{_lambda_.3} parent=0 // pred_region
    _
  $region9: #{_lambda_.3} parent=0 // pred_fallthru
    _
  // Predicated region
  $region10: #{_lambda_.3} parent=0 // pred_check
    _
  $region11: #{_lambda_.3} parent=0 // pred_check_branch
    %13 = sbr.rel (0) target = $region13
  $region12: #{_lambda_.3} parent=0 // pred_region
    _
  $region13: #{_lambda_.3} parent=0 // pred_fallthru
    _
  %p15 = scmp.eq.s32.totalorder 0, 0
  // Predicated region
  $region14: #{_lambda_.3} parent=0 // pred_check
    %p16 = pneg %p15
  $region15: #{_lambda_.3} parent=0 // pred_check_branch
    %18 = sbr.rel (%p16) target = $region17
  $region16: #{_lambda_.3} parent=0 // pred_region
    %19 = vst [vmem:[#allocation2] sm:$0xff] 0.0
    %20 = vst [vmem:[#allocation2 + $0x8] sm:$0xff] 0.0
    %21 = vst [vmem:[#allocation2 + $0x10] sm:$0xff] 0.0
    %22 = vst [vmem:[#allocation2 + $0x18] sm:$0xff] 0.0
  $region17: #{_lambda_.3} parent=0 // pred_fallthru
    _
  %v23 = vld [vmem:[#allocation2] sm:$0xff]
  %v24 = vld [vmem:[#allocation2 + $0x8] sm:$0xff]
  %v25 = vld [vmem:[#allocation2 + $0x10] sm:$0xff]
  %v26 = vld [vmem:[#allocation2 + $0x18] sm:$0xff]
  %v27 = vld [vmem:[%s0] sm:$0xf]
  %v28 = vld [vmem:[%s0 + $0x4] sm:$0xf]
  %v29 = vld [vmem:[%s1] sm:$0xff]
  %v30 = vld [vmem:[%s1 + $0x8] sm:$0xff]
  %v31 = vld [vmem:[%s1 + $0x10] sm:$0xff]
  %v32 = vld [vmem:[%s1 + $0x18] sm:$0xff]
  %v33 = vld [vmem:[%s1 + $0x20] sm:$0xff]
  %v34 = vld [vmem:[%s1 + $0x28] sm:$0xff]
  %v35 = vld [vmem:[%s1 + $0x30] sm:$0xff]
  %v36 = vld [vmem:[%s1 + $0x38] sm:$0xff]
  %v37 = vld [vmem:[%s1 + $0x40] sm:$0xff]
  %v38 = vld [vmem:[%s1 + $0x48] sm:$0xff]
  %v39 = vld [vmem:[%s1 + $0x50] sm:$0xff]
  %v40 = vld [vmem:[%s1 + $0x58] sm:$0xff]
  %v41 = vld [vmem:[%s1 + $0x60] sm:$0xff]
  %v42 = vld [vmem:[%s1 + $0x68] sm:$0xff]
  %v43 = vld [vmem:[%s1 + $0x70] sm:$0xff]
  %v44 = vld [vmem:[%s1 + $0x78] sm:$0xff]
  %v47 = vunpack.c.l.b16 %v27
  %v48 = vunpack.c.l.b16 %v28
  %v49 = vpack.c.b16 %v48, %v47
  %v67 = vunpack.c.l.b16 %v29
  %v68 = vunpack.c.h.b16 %v29
  %v69 = vunpack.c.l.b16 %v30
  %v70 = vunpack.c.h.b16 %v30
  %v71 = vunpack.c.l.b16 %v31
  %v72 = vunpack.c.h.b16 %v31
  %v73 = vunpack.c.l.b16 %v32
  %v74 = vunpack.c.h.b16 %v32
  %v75 = vunpack.c.l.b16 %v33
  %v76 = vunpack.c.h.b16 %v33
  %v77 = vunpack.c.l.b16 %v34
  %v78 = vunpack.c.h.b16 %v34
  %v79 = vunpack.c.l.b16 %v35
  %v80 = vunpack.c.h.b16 %v35
  %v81 = vunpack.c.l.b16 %v36
  %v82 = vunpack.c.h.b16 %v36
  %v83 = vunpack.c.l.b16 %v37
  %v84 = vunpack.c.h.b16 %v37
  %v85 = vunpack.c.l.b16 %v38
  %v86 = vunpack.c.h.b16 %v38
  %v87 = vunpack.c.l.b16 %v39
  %v88 = vunpack.c.h.b16 %v39
  %v89 = vunpack.c.l.b16 %v40
  %v90 = vunpack.c.h.b16 %v40
  %v91 = vunpack.c.l.b16 %v41
  %v92 = vunpack.c.h.b16 %v41
  %v93 = vunpack.c.l.b16 %v42
  %v94 = vunpack.c.h.b16 %v42
  %v95 = vunpack.c.l.b16 %v43
  %v96 = vunpack.c.h.b16 %v43
  %v97 = vunpack.c.l.b16 %v44
  %v98 = vunpack.c.h.b16 %v44
  %v99 = vpack.c.b16 %v69, %v67
  %v100 = vpack.c.b16 %v70, %v68
  %v101 = vpack.c.b16 %v73, %v71
  %v102 = vpack.c.b16 %v74, %v72
  %v103 = vpack.c.b16 %v77, %v75
  %v104 = vpack.c.b16 %v78, %v76
  %v105 = vpack.c.b16 %v81, %v79
  %v106 = vpack.c.b16 %v82, %v80
  %v107 = vpack.c.b16 %v85, %v83
  %v108 = vpack.c.b16 %v86, %v84
  %v109 = vpack.c.b16 %v89, %v87
  %v110 = vpack.c.b16 %v90, %v88
  %v111 = vpack.c.b16 %v93, %v91
  %v112 = vpack.c.b16 %v94, %v92
  %v113 = vpack.c.b16 %v97, %v95
  %v114 = vpack.c.b16 %v98, %v96
  %131 = vmatprep.subr.bf16.mxu0 %v100
  %132 = vmatpush1.bf16.msra.mxu0 %v99
  %133 = vmatprep.subr.bf16.mxu0 %v102
  %134 = vmatpush1.bf16.msra.mxu0 %v101
  %135 = vmatprep.subr.bf16.mxu0 %v104
  %136 = vmatpush1.bf16.msra.mxu0 %v103
  %137 = vmatprep.subr.bf16.mxu0 %v106
  %138 = vmatpush1.bf16.msra.mxu0 %v105
  %139 = vmatprep.subr.bf16.mxu0 %v108
  %140 = vmatpush1.bf16.msra.mxu0 %v107
  %141 = vmatprep.subr.bf16.mxu0 %v110
  %142 = vmatpush1.bf16.msra.mxu0 %v109
  %143 = vmatprep.subr.bf16.mxu0 %v112
  %144 = vmatpush1.bf16.msra.mxu0 %v111
  %145 = vmatprep.subr.bf16.mxu0 %v114
  %146 = vmatpush1.bf16.msra.mxu0 %v113
  %147 = vmatprep.subr.bf16.mxu0 0
  %148 = vmatpush1.bf16.msra.mxu0 0
  %149 = vmatprep.subr.bf16.mxu0 0
  %150 = vmatpush1.bf16.msra.mxu0 0
  %151 = vmatprep.subr.bf16.mxu0 0
  %152 = vmatpush1.bf16.msra.mxu0 0
  %153 = vmatprep.subr.bf16.mxu0 0
  %154 = vmatpush1.bf16.msra.mxu0 0
  %155 = vmatprep.subr.bf16.mxu0 0
  %156 = vmatpush1.bf16.msra.mxu0 0
  %157 = vmatprep.subr.bf16.mxu0 0
  %158 = vmatpush1.bf16.msra.mxu0 0
  %159 = vmatprep.subr.bf16.mxu0 0
  %160 = vmatpush1.bf16.msra.mxu0 0
  %161 = vmatprep.subr.bf16.mxu0 0
  %162 = vmatpush1.bf16.msra.mxu0 0
  %163 = vmatprep.mubr.bf16.mxu0 0
  %164 = vmatmul.mubr.bf16.gmra.mrb[0].mxu0 %v49
  %v165 = vpop.f32.mrb[0].mxu0
  %v166 = vadd.f32 0.0, %v165
  %v167 = vpop.f32.mrb[0].mxu0
  %v168 = vadd.f32 0.0, %v167
  %v169 = vpop.f32.mrb[0].mxu0
  %v170 = vadd.f32 0.0, %v169
  %v171 = vpop.f32.mrb[0].mxu0
  %v172 = vadd.f32 0.0, %v171
  %173 = vdwg.mxu0
  %v174 = vadd.f32 %v23, %v166
  %v175 = vadd.f32 %v24, %v168
  %v176 = vadd.f32 %v25, %v170
  %v177 = vadd.f32 %v26, %v172
  %178 = vst [vmem:[#allocation2] sm:$0xff] %v174
  %179 = vst [vmem:[#allocation2 + $0x8] sm:$0xff] %v175
  %180 = vst [vmem:[#allocation2 + $0x10] sm:$0xff] %v176
  %181 = vst [vmem:[#allocation2 + $0x18] sm:$0xff] %v177
  // Predicated region
  $region18: #{_lambda_.3} parent=0 // pred_check
    %p182 = pneg %p15
  $region19: #{_lambda_.3} parent=0 // pred_check_branch
    %184 = sbr.rel (%p182) target = $region21
  $region20: #{_lambda_.3} parent=0 // pred_region
    %v185 = vld [vmem:[#allocation2] sm:$0xff]
    %v186 = vld [vmem:[#allocation2 + $0x8] sm:$0xff]
    %v187 = vld [vmem:[#allocation2 + $0x10] sm:$0xff]
    %v188 = vld [vmem:[#allocation2 + $0x18] sm:$0xff]
    %v189 = vld [vmem:[%s2] sm:$0x3]
    %v191 = vlaneseq
    %v192 = vshrl.u32 %v191, 7
    %v193 = vsub.s32 0, %v192
    %v194 = vrot.slane %v189, %v193
    %v195 = vlaneseq
    %v196 = vshrl.u32 %v195, 7
    %v197 = vsub.s32 1, %v196
    %v198 = vrot.slane %v189, %v197
    %v201 = vadd.f32 %v185, %v194
    %v202 = vadd.f32 %v186, %v198
    %v203 = vadd.f32 %v187, %v194
    %v204 = vadd.f32 %v188, %v198
    %205 = vst [vmem:[%s3] sm:$0xff] %v201
    %206 = vst [vmem:[%s3 + $0x8] sm:$0xff] %v202
    %207 = vst [vmem:[%s3 + $0x10] sm:$0xff] %v203
    %208 = vst [vmem:[%s3 + $0x18] sm:$0xff] %v204
  $region21: #{_lambda_.3} parent=0 // pred_fallthru
    _
  // Predicated region
  $region22: #{_lambda_.3} parent=0 // pred_check
    _
  $region23: #{_lambda_.3} parent=0 // pred_check_branch
    %210 = sbr.rel (0) target = $region25
  $region24: #{_lambda_.3} parent=0 // pred_region
    _
  $region25: #{_lambda_.3} parent=0 // pred_fallthru
    _
  // Predicated region
  $region26: #{_lambda_.3} parent=0 // pred_check
    _
  $region27: #{_lambda_.3} parent=0 // pred_check_branch
    %212 = sbr.rel (0) target = $region29
  $region28: #{_lambda_.3} parent=0 // pred_region
    _
  $region29: #{_lambda_.3} parent=0 // pred_fallthru
    _

// kernel: _lambda_.4
$region0: #{_lambda_.4}
  #allocation0 [shape = 'u32[]', space=smem, size = 0x4, offset = 0x4, fixed_abs, tag = 'smem constant byte address 0x4 - core index']
  #allocation1 [shape = 'u32[144,128]{1,0:T(1,128)}', space=vmem, size = 0x12000, scoped, tag = 'internal scratch']
  %s0 = inlined_call_operand.vmem [shape: f32[2,4,17,17], index: 0, kind: input, shape index: {}]
  %s1 = inlined_call_operand.vmem [shape: f32[144], index: 1, kind: input, shape index: {}]
  %s2 = inlined_call_operand.vmem [shape: f32[4], index: 2, kind: input, shape index: {}]
  %s3 = inlined_call_operand.vmem [shape: f32[2,4,15,15], index: 3, kind: output, shape index: {}]
  %s4 = sld [smem:[#allocation0]]
  $region53: #{_lambda_.4} parent=0
    _
  %s6 = ssub.s32 1, %s4
  %s7 = scalar_select 0, %s6, %s4
  $region1: #{_lambda_.4} parent=0
    #allocation2 [shape = 'u8[1024]{0}', space=smem, size = 0x400, scoped, tag = 'input window, operand 1, single buffered']
    #allocation3 [shape = 's32[2]{0}', space=sflag, size = 0x8, scoped, tag = 'scoped memory for _lambda_.4']
    #allocation4 [shape = 'u8[512]{0}', space=smem, size = 0x200, scoped, tag = 'input window, operand 2, single buffered']
    #allocation5 [shape = 's32[1]{0}', space=sflag, size = 0x4, scoped, tag = 'scoped memory for _lambda_.4']
    %8 = vsyncpa [#allocation3], 0
    %9 = vsyncpa [#allocation5], 0
    loop: start=0, step=1, limit=4
    $region2: #{_lambda_.4} parent=1 // loop_pre_header
      _
    $region3: #{_lambda_.4} parent=1 // loop_header
      %s11 = sphi 0, %s15
      %p12 = scmp.ge.s32.totalorder %s11, 4
      %s21 = sphi 0, %s23
      %s24 = sphi 0, %s21
      %s25 = sphi 0, %s24
      %s41 = sphi 0, %s25
      %s45 = sphi 0, %s45
      %s47 = sphi 0, %s45
      %s48 = sphi 0, %s47
      %s62 = sphi 0, %s48
      %s66 = sphi 0, %s66
      %s68 = sphi 0, %s66
      %s69 = sphi 0, %s68
      %s83 = sphi 0, %s69
      %s89 = sphi 0, %s91
      %s92 = sphi 0, %s89
      %s93 = sphi 0, %s92
      %s109 = sphi 0, %s93
    $region4: #{_lambda_.4} parent=1 // loop_header_branch
      %14 = sbr.rel (%p12) target = $region8
    $region5: #{_lambda_.4} parent=1 // loop_body
      %s16 = ssub.s32 %s11, 1
      %s17 = ssub.s32 %s11, 2
      %s18 = sadd.s32 %s11, 1
      %s19 = ssub.s32 %s11, %s18
      %p20 = scmp.eq.s32.totalorder %s19, 0
      %s22 = sadd.s32 %s21, 1
      %s23 = scalar_select %p20, %s21, %s22
      %p26 = pneg %p20
      %p27 = scmp.eq.s32.totalorder %s11, 1
      %p28 = por %p26, %p27
      %p29 = scmp.ne.s32.totalorder %s21, %s24
      %p30 = scmp.eq.s32.totalorder %s11, 0
      %p31 = por %p29, %p30
      %p32 = scmp.ne.s32.totalorder %s21, %s24
      %p33 = scmp.eq.s32.totalorder %s16, 1
      %p34 = por %p32, %p33
      %p35 = scmp.ne.s32.totalorder %s24, %s25
      %p36 = scmp.eq.s32.totalorder %s16, 0
      %p37 = por %p35, %p36
      %p38 = scmp.ne.s32.totalorder %s24, %s25
      %p39 = scmp.eq.s32.totalorder %s17, 1
      %p40 = por %p38, %p39
      %p42 = scmp.ne.s32.totalorder %s25, %s41
      %p43 = scmp.eq.s32.totalorder %s17, 0
      %p44 = por %p42, %p43
      %s46 = sadd.s32 %s45, 1
      %p49 = scmp.eq.s32.totalorder %s11, 1
      %p50 = scmp.ne.s32.totalorder %s45, %s47
      %p51 = scmp.eq.s32.totalorder %s11, 0
      %p52 = por %p50, %p51
      %p53 = scmp.ne.s32.totalorder %s45, %s47
      %p54 = scmp.eq.s32.totalorder %s16, 1
      %p55 = por %p53, %p54
      %p56 = scmp.ne.s32.totalorder %s47, %s48
      %p57 = scmp.eq.s32.totalorder %s16, 0
      %p58 = por %p56, %p57
      %p59 = scmp.ne.s32.totalorder %s47, %s48
      %p60 = scmp.eq.s32.totalorder %s17, 1
      %p61 = por %p59, %p60
      %p63 = scmp.ne.s32.totalorder %s48, %s62
      %p64 = scmp.eq.s32.totalorder %s17, 0
      %p65 = por %p63, %p64
      %s67 = sadd.s32 %s66, 1
      %p70 = scmp.eq.s32.totalorder %s11, 1
      %p71 = scmp.ne.s32.totalorder %s66, %s68
      %p72 = scmp.eq.s32.totalorder %s11, 0
      %p73 = por %p71, %p72
      %p74 = scmp.ne.s32.totalorder %s66, %s68
      %p75 = scmp.eq.s32.totalorder %s16, 1
      %p76 = por %p74, %p75
      %p77 = scmp.ne.s32.totalorder %s68, %s69
      %p78 = scmp.eq.s32.totalorder %s16, 0
      %p79 = por %p77, %p78
      %p80 = scmp.ne.s32.totalorder %s68, %s69
      %p81 = scmp.eq.s32.totalorder %s17, 1
      %p82 = por %p80, %p81
      %p84 = scmp.ne.s32.totalorder %s69, %s83
      %p85 = scmp.eq.s32.totalorder %s17, 0
      %p86 = por %p84, %p85
      %s87 = ssub.s32 %s11, %s18
      %p88 = scmp.eq.s32.totalorder %s87, 0
      %s90 = sadd.s32 %s89, 1
      %s91 = scalar_select %p88, %s89, %s90
      %p94 = pneg %p88
      %p95 = scmp.eq.s32.totalorder %s11, 1
      %p96 = por %p94, %p95
      %p97 = scmp.ne.s32.totalorder %s89, %s92
      %p98 = scmp.eq.s32.totalorder %s11, 0
      %p99 = por %p97, %p98
      %p100 = scmp.ne.s32.totalorder %s89, %s92
      %p101 = scmp.eq.s32.totalorder %s16, 1
      %p102 = por %p100, %p101
      %p103 = scmp.ne.s32.totalorder %s92, %s93
      %p104 = scmp.eq.s32.totalorder %s16, 0
      %p105 = por %p103, %p104
      %p106 = scmp.ne.s32.totalorder %s92, %s93
      %p107 = scmp.eq.s32.totalorder %s17, 1
      %p108 = por %p106, %p107
      %p110 = scmp.ne.s32.totalorder %s93, %s109
      %p111 = scmp.eq.s32.totalorder %s17, 0
      %p112 = por %p110, %p111
      %p113 = scmp.le.s32.totalorder 1, %s11
      %p114 = scmp.lt.s32.totalorder %s11, 3
      %p115 = pnand %p113, %p114
      %p116 = pneg %p115
      // Predicated region
      $region9: #{_lambda_.4} parent=5 // pred_check
        _
      $region10: #{_lambda_.4} parent=5 // pred_check_branch
        %118 = sbr.rel (%p115) target = $region12
      $region11: #{_lambda_.4} parent=5 // pred_region
        %s119 = ssub.s32 %s11, 1
        // Predicated region
        $region13: #{_lambda_.4} parent=11 // pred_check
          %p120 = pneg %p58
        $region14: #{_lambda_.4} parent=11 // pred_check_branch
          %122 = sbr.rel (%p120) target = $region16
        $region15: #{_lambda_.4} parent=11 // pred_region
          %s124 = ssub.s32 32, 32
          %125 = vsyncadd [#allocation3], %s124
          %s127 = sshll.u32 %s1, 4
          %s128 = int_to_ptr.vmem [resolvable:$true] %s127
          %130 = dma.vmem_to_smem %s128, 32, [#allocation2], [#allocation3]
        $region16: #{_lambda_.4} parent=11 // pred_fallthru
          _
        // Predicated region
        $region17: #{_lambda_.4} parent=11 // pred_check
          %p131 = pneg %p79
        $region18: #{_lambda_.4} parent=11 // pred_check_branch
          %133 = sbr.rel (%p131) target = $region20
        $region19: #{_lambda_.4} parent=11 // pred_region
          %s135 = ssub.s32 16, 16
          %136 = vsyncadd [#allocation5], %s135
          %s138 = sshll.u32 %s2, 4
          %s139 = int_to_ptr.vmem [resolvable:$true] %s138
          %141 = dma.vmem_to_smem %s139, 16, [#allocation4], [#allocation5]
        $region20: #{_lambda_.4} parent=11 // pred_fallthru
          _
      $region12: #{_lambda_.4} parent=5 // pred_fallthru
        _
      %p142 = scmp.lt.s32.totalorder %s11, 2
      // Predicated region
      $region21: #{_lambda_.4} parent=5 // pred_check
        %p143 = pneg %p142
      $region22: #{_lambda_.4} parent=5 // pred_check_branch
        %145 = sbr.rel (%p143) target = $region24
      $region23: #{_lambda_.4} parent=5 // pred_region
        // Predicated region
        $region25: #{_lambda_.4} parent=23 // pred_check
          %p146 = pneg %p31
        $region26: #{_lambda_.4} parent=23 // pred_check_branch
          %148 = sbr.rel (%p146) target = $region28
        $region27: #{_lambda_.4} parent=23 // pred_region
          %p149 = scmp.lt.s32.totalorder %s11, 1
          %s150 = scalar_select %p149, %s11, 1
          %s151 = smul.addr %s150, 12
          %s152 = smul.addr %s151, 8
          %s153 = scalar_lea.vmem %s0, %s152
        $region28: #{_lambda_.4} parent=23 // pred_fallthru
          _
      $region24: #{_lambda_.4} parent=5 // pred_fallthru
        _
      %p154 = scmp.le.s32.totalorder 1, %s11
      %p155 = scmp.lt.s32.totalorder %s11, 3
      %p156 = pnand %p154, %p155
      %p157 = pneg %p156
      // Predicated region
      $region29: #{_lambda_.4} parent=5 // pred_check
        _
      $region30: #{_lambda_.4} parent=5 // pred_check_branch
        %159 = sbr.rel (%p156) target = $region32
      $region31: #{_lambda_.4} parent=5 // pred_region
        %s160 = ssub.s32 %s11, 1
        // Predicated region
        $region33: #{_lambda_.4} parent=31 // pred_check
          %p161 = pneg %p58
        $region34: #{_lambda_.4} parent=31 // pred_check_branch
          %163 = sbr.rel (%p161) target = $region36
        $region35: #{_lambda_.4} parent=31 // pred_region
          %164 = dma.done [#allocation3], 32
        $region36: #{_lambda_.4} parent=31 // pred_fallthru
          _
        // Predicated region
        $region37: #{_lambda_.4} parent=31 // pred_check
          %p165 = pneg %p79
        $region38: #{_lambda_.4} parent=31 // pred_check_branch
          %167 = sbr.rel (%p165) target = $region40
        $region39: #{_lambda_.4} parent=31 // pred_region
          %168 = dma.done [#allocation5], 16
        $region40: #{_lambda_.4} parent=31 // pred_fallthru
          _
        %169 = sfence
        %p170 = scmp.lt.s32.totalorder %s16, 1
        %s171 = scalar_select %p170, %s16, 1
        %s172 = smul.addr %s171, 12
        %s173 = smul.addr %s172, 8
        %s174 = scalar_lea.vmem %s0, %s173
        %p175 = pneg %p37
        %p176 = pneg %p34
        %p177 = pneg %p58
        %p178 = pneg %p55
        %p179 = pneg %p79
        %p180 = pneg %p76
        %p181 = pneg %p105
        %p182 = pneg %p102
        %p183 = scmp.lt.s32.totalorder %s16, 1
        %s184 = scalar_select %p183, %s16, 1
        %s185 = smul.addr %s184, 8
        %s186 = smul.addr %s185, 8
        %s187 = scalar_lea.vmem %s3, %s186
        %p188 = scmp.lt.s32.totalorder %s16, 1
        %s189 = scalar_select %p188, %s16, 1
        %s190 = smul.addr %s189, 12
        %s191 = smul.addr %s190, 8
        %s192 = scalar_lea.vmem %s0, %s191
        %p193 = scmp.lt.s32.totalorder %s16, 1
        %s194 = scalar_select %p193, %s16, 1
        %s195 = smul.addr %s194, 8
        %s196 = smul.addr %s195, 8
        %s197 = scalar_lea.vmem %s3, %s196
        %v198 = vld [vmem:[%s192] sm:$0xff]
        %v199 = vld [vmem:[%s192 + $0x8] sm:$0x7f]
        %s200 = sld [smem:[#allocation2]]
        %v201 = vstv %s200
        %v202 = vmul.f32 %v201, %v198
        %v203 = vmul.f32 %v201, %v199
        %v204 = vadd.f32 %v202, 0.0
        %v205 = vadd.f32 %v203, 0.0
        %s206 = sld [smem:[#allocation2 + $0x1]]
        %v207 = vstv %s206
        %v208 = vmul.f32 %v207, %v198
        %v209 = vmul.f32 %v207, %v199
        %v210 = vadd.f32 %v208, 0.0
        %v211 = vadd.f32 %v209, 0.0
        %s212 = sld [smem:[#allocation2 + $0x2]]
        %v213 = vstv %s212
        %v214 = vmul.f32 %v213, %v198
        %v215 = vmul.f32 %v213, %v199
        %v216 = vadd.f32 %v214, 0.0
        %v217 = vadd.f32 %v215, 0.0
        %s218 = sld [smem:[#allocation2 + $0x3]]
        %v219 = vstv %s218
        %v220 = vmul.f32 %v219, %v198
        %v221 = vmul.f32 %v219, %v199
        %v222 = vadd.f32 %v220, 0.0
        %v223 = vadd.f32 %v221, 0.0
        %s224 = sld [smem:[#allocation2 + $0x10]]
        %v225 = vstv %s224
        %v226 = vmul.f32 %v225, %v198
        %v227 = vmul.f32 %v225, %v199
        %230 = vrot.lane.b32.xlu0 %v226, 127
        %v231 = vpop.permute.xlu0 %230
        %232 = vrot.lane.b32.xlu0 %v227, 127
        %v233 = vpop.permute.xlu0 %232
        %v236 = vadd.f32 %v204, %v231
        %v237 = vadd.f32 %v205, %v233
        %s238 = sld [smem:[#allocation2 + $0x11]]
        %v239 = vstv %s238
        %v240 = vmul.f32 %v239, %v198
        %v241 = vmul.f32 %v239, %v199
        %244 = vrot.lane.b32.xlu0 %v240, 127
        %v245 = vpop.permute.xlu0 %244
        %246 = vrot.lane.b32.xlu0 %v241, 127
        %v247 = vpop.permute.xlu0 %246
        %v250 = vadd.f32 %v210, %v245
        %v251 = vadd.f32 %v211, %v247
        %s252 = sld [smem:[#allocation2 + $0x12]]
        %v253 = vstv %s252
        %v254 = vmul.f32 %v253, %v198
        %v255 = vmul.f32 %v253, %v199
        %258 = vrot.lane.b32.xlu0 %v254, 127
        %v259 = vpop.permute.xlu0 %258
        %260 = vrot.lane.b32.xlu0 %v255, 127
        %v261 = vpop.permute.xlu0 %260
        %v264 = vadd.f32 %v216, %v259
        %v265 = vadd.f32 %v217, %v261
        %s266 = sld [smem:[#allocation2 + $0x13]]
        %v267 = vstv %s266
        %v268 = vmul.f32 %v267, %v198
        %v269 = vmul.f32 %v267, %v199
        %272 = vrot.lane.b32.xlu0 %v268, 127
        %v273 = vpop.permute.xlu0 %272
        %274 = vrot.lane.b32.xlu0 %v269, 127
        %v275 = vpop.permute.xlu0 %274
        %v278 = vadd.f32 %v222, %v273
        %v279 = vadd.f32 %v223, %v275
        %s280 = sld [smem:[#allocation2 + $0x20]]
        %v281 = vstv %s280
        %v282 = vmul.f32 %v281, %v198
        %v283 = vmul.f32 %v281, %v199
        %286 = vrot.lane.b32.xlu0 %v282, 126
        %v287 = vpop.permute.xlu0 %286
        %288 = vrot.lane.b32.xlu0 %v283, 126
        %v289 = vpop.permute.xlu0 %288
        %v292 = vadd.f32 %v236, %v287
        %v293 = vadd.f32 %v237, %v289
        %s294 = sld [smem:[#allocation2 + $0x21]]
        %v295 = vstv %s294
        %v296 = vmul.f32 %v295, %v198
        %v297 = vmul.f32 %v295, %v199
        %300 = vrot.lane.b32.xlu0 %v296, 126
        %v301 = vpop.permute.xlu0 %300
        %302 = vrot.lane.b32.xlu0 %v297, 126
        %v303 = vpop.permute.xlu0 %302
        %v306 = vadd.f32 %v250, %v301
        %v307 = vadd.f32 %v251, %v303
        %s308 = sld [smem:[#allocation2 + $0x22]]
        %v309 = vstv %s308
        %v310 = vmul.f32 %v309, %v198
        %v311 = vmul.f32 %v309, %v199
        %314 = vrot.lane.b32.xlu0 %v310, 126
        %v315 = vpop.permute.xlu0 %314
        %316 = vrot.lane.b32.xlu0 %v311, 126
        %v317 = vpop.permute.xlu0 %316
        %v320 = vadd.f32 %v264, %v315
        %v321 = vadd.f32 %v265, %v317
        %s322 = sld [smem:[#allocation2 + $0x23]]
        %v323 = vstv %s322
        %v324 = vmul.f32 %v323, %v198
        %v325 = vmul.f32 %v323, %v199
        %328 = vrot.lane.b32.xlu0 %v324, 126
        %v329 = vpop.permute.xlu0 %328
        %330 = vrot.lane.b32.xlu0 %v325, 126
        %v331 = vpop.permute.xlu0 %330
        %v334 = vadd.f32 %v278, %v329
        %v335 = vadd.f32 %v279, %v331
        %v336 = vld [vmem:[%s192 + $0x1] sm:$0xff]
        %v337 = vld [vmem:[%s192 + $0x9] sm:$0x7f]
        %s338 = sld [smem:[#allocation2 + $0x30]]
        %v339 = vstv %s338
        %v340 = vmul.f32 %v339, %v336
        %v341 = vmul.f32 %v339, %v337
        %v342 = vadd.f32 %v292, %v340
        %v343 = vadd.f32 %v293, %v341
        %s344 = sld [smem:[#allocation2 + $0x31]]
        %v345 = vstv %s344
        %v346 = vmul.f32 %v345, %v336
        %v347 = vmul.f32 %v345, %v337
        %v348 = vadd.f32 %v306, %v346
        %v349 = vadd.f32 %v307, %v347
        %s350 = sld [smem:[#allocation2 + $0x32]]
        %v351 = vstv %s350
        %v352 = vmul.f32 %v351, %v336
        %v353 = vmul.f32 %v351, %v337
        %v354 = vadd.f32 %v320, %v352
        %v355 = vadd.f32 %v321, %v353
        %s356 = sld [smem:[#allocation2 + $0x33]]
        %v357 = vstv %s356
        %v358 = vmul.f32 %v357, %v336
        %v359 = vmul.f32 %v357, %v337
        %v360 = vadd.f32 %v334, %v358
        %v361 = vadd.f32 %v335, %v359
        %s362 = sld [smem:[#allocation2 + $0x40]]
        %v363 = vstv %s362
        %v364 = vmul.f32 %v363, %v336
        %v365 = vmul.f32 %v363, %v337
        %368 = vrot.lane.b32.xlu0 %v364, 127
        %v369 = vpop.permute.xlu0 %368
        %370 = vrot.lane.b32.xlu0 %v365, 127
        %v371 = vpop.permute.xlu0 %370
        %v374 = vadd.f32 %v342, %v369
        %v375 = vadd.f32 %v343, %v371
        %s376 = sld [smem:[#allocation2 + $0x41]]
        %v377 = vstv %s376
        %v378 = vmul.f32 %v377, %v336
        %v379 = vmul.f32 %v377, %v337
        %382 = vrot.lane.b32.xlu0 %v378, 127
        %v383 = vpop.permute.xlu0 %382
        %384 = vrot.lane.b32.xlu0 %v379, 127
        %v385 = vpop.permute.xlu0 %384
        %v388 = vadd.f32 %v348, %v383
        %v389 = vadd.f32 %v349, %v385
        %s390 = sld [smem:[#allocation2 + $0x42]]
        %v391 = vstv %s390
        %v392 = vmul.f32 %v391, %v336
        %v393 = vmul.f32 %v391, %v337
        %396 = vrot.lane.b32.xlu0 %v392, 127
        %v397 = vpop.permute.xlu0 %396
        %398 = vrot.lane.b32.xlu0 %v393, 127
        %v399 = vpop.permute.xlu0 %398
        %v402 = vadd.f32 %v354, %v397
        %v403 = vadd.f32 %v355, %v399
        %s404 = sld [smem:[#allocation2 + $0x43]]
        %v405 = vstv %s404
        %v406 = vmul.f32 %v405, %v336
        %v407 = vmul.f32 %v405, %v337
        %410 = vrot.lane.b32.xlu0 %v406, 127
        %v411 = vpop.permute.xlu0 %410
        %412 = vrot.lane.b32.xlu0 %v407, 127
        %v413 = vpop.permute.xlu0 %412
        %v416 = vadd.f32 %v360, %v411
        %v417 = vadd.f32 %v361, %v413
        %s418 = sld [smem:[#allocation2 + $0x50]]
        %v419 = vstv %s418
        %v420 = vmul.f32 %v419, %v336
        %v421 = vmul.f32 %v419, %v337
        %424 = vrot.lane.b32.xlu0 %v420, 126
        %v425 = vpop.permute.xlu0 %424
        %426 = vrot.lane.b32.xlu0 %v421, 126
        %v427 = vpop.permute.xlu0 %426
        %v430 = vadd.f32 %v374, %v425
        %v431 = vadd.f32 %v375, %v427
        %s432 = sld [smem:[#allocation2 + $0x51]]
        %v433 = vstv %s432
        %v434 = vmul.f32 %v433, %v336
        %v435 = vmul.f32 %v433, %v337
        %438 = vrot.lane.b32.xlu0 %v434, 126
        %v439 = vpop.permute.xlu0 %438
        %440 = vrot.lane.b32.xlu0 %v435, 126
        %v441 = vpop.permute.xlu0 %440
        %v444 = vadd.f32 %v388, %v439
        %v445 = vadd.f32 %v389, %v441
        %s446 = sld [smem:[#allocation2 + $0x52]]
        %v447 = vstv %s446
        %v448 = vmul.f32 %v447, %v336
        %v449 = vmul.f32 %v447, %v337
        %452 = vrot.lane.b32.xlu0 %v448, 126
        %v453 = vpop.permute.xlu0 %452
        %454 = vrot.lane.b32.xlu0 %v449, 126
        %v455 = vpop.permute.xlu0 %454
        %v458 = vadd.f32 %v402, %v453
        %v459 = vadd.f32 %v403, %v455
        %s460 = sld [smem:[#allocation2 + $0x53]]
        %v461 = vstv %s460
        %v462 = vmul.f32 %v461, %v336
        %v463 = vmul.f32 %v461, %v337
        %466 = vrot.lane.b32.xlu0 %v462, 126
        %v467 = vpop.permute.xlu0 %466
        %468 = vrot.lane.b32.xlu0 %v463, 126
        %v469 = vpop.permute.xlu0 %468
        %v472 = vadd.f32 %v416, %v467
        %v473 = vadd.f32 %v417, %v469
        %v474 = vld [vmem:[%s192 + $0x2] sm:$0xff]
        %v475 = vld [vmem:[%s192 + $0xa] sm:$0x7f]
        %s476 = sld [smem:[#allocation2 + $0x60]]
        %v477 = vstv %s476
        %v478 = vmul.f32 %v477, %v474
        %v479 = vmul.f32 %v477, %v475
        %v480 = vadd.f32 %v430, %v478
        %v481 = vadd.f32 %v431, %v479
        %s482 = sld [smem:[#allocation2 + $0x61]]
        %v483 = vstv %s482
        %v484 = vmul.f32 %v483, %v474
        %v485 = vmul.f32 %v483, %v475
        %v486 = vadd.f32 %v444, %v484
        %v487 = vadd.f32 %v445, %v485
        %s488 = sld [smem:[#allocation2 + $0x62]]
        %v489 = vstv %s488
        %v490 = vmul.f32 %v489, %v474
        %v491 = vmul.f32 %v489, %v475
        %v492 = vadd.f32 %v458, %v490
        %v493 = vadd.f32 %v459, %v491
        %s494 = sld [smem:[#allocation2 + $0x63]]
        %v495 = vstv %s494
        %v496 = vmul.f32 %v495, %v474
        %v497 = vmul.f32 %v495, %v475
        %v498 = vadd.f32 %v472, %v496
        %v499 = vadd.f32 %v473, %v497
        %s500 = sld [smem:[#allocation2 + $0x70]]
        %v501 = vstv %s500
        %v502 = vmul.f32 %v501, %v474
        %v503 = vmul.f32 %v501, %v475
        %506 = vrot.lane.b32.xlu0 %v502, 127
        %v507 = vpop.permute.xlu0 %506
        %508 = vrot.lane.b32.xlu0 %v503, 127
        %v509 = vpop.permute.xlu0 %508
        %v512 = vadd.f32 %v480, %v507
        %v513 = vadd.f32 %v481, %v509
        %s514 = sld [smem:[#allocation2 + $0x71]]
        %v515 = vstv %s514
        %v516 = vmul.f32 %v515, %v474
        %v517 = vmul.f32 %v515, %v475
        %520 = vrot.lane.b32.xlu0 %v516, 127
        %v521 = vpop.permute.xlu0 %520
        %522 = vrot.lane.b32.xlu0 %v517, 127
        %v523 = vpop.permute.xlu0 %522
        %v526 = vadd.f32 %v486, %v521
        %v527 = vadd.f32 %v487, %v523
        %s528 = sld [smem:[#allocation2 + $0x72]]
        %v529 = vstv %s528
        %v530 = vmul.f32 %v529, %v474
        %v531 = vmul.f32 %v529, %v475
        %534 = vrot.lane.b32.xlu0 %v530, 127
        %v535 = vpop.permute.xlu0 %534
        %536 = vrot.lane.b32.xlu0 %v531, 127
        %v537 = vpop.permute.xlu0 %536
        %v540 = vadd.f32 %v492, %v535
        %v541 = vadd.f32 %v493, %v537
        %s542 = sld [smem:[#allocation2 + $0x73]]
        %v543 = vstv %s542
        %v544 = vmul.f32 %v543, %v474
        %v545 = vmul.f32 %v543, %v475
        %548 = vrot.lane.b32.xlu0 %v544, 127
        %v549 = vpop.permute.xlu0 %548
        %550 = vrot.lane.b32.xlu0 %v545, 127
        %v551 = vpop.permute.xlu0 %550
        %v554 = vadd.f32 %v498, %v549
        %v555 = vadd.f32 %v499, %v551
        %s556 = sld [smem:[#allocation2 + $0x80]]
        %v557 = vstv %s556
        %v558 = vmul.f32 %v557, %v474
        %v559 = vmul.f32 %v557, %v475
        %562 = vrot.lane.b32.xlu0 %v558, 126
        %v563 = vpop.permute.xlu0 %562
        %564 = vrot.lane.b32.xlu0 %v559, 126
        %v565 = vpop.permute.xlu0 %564
        %v568 = vadd.f32 %v512, %v563
        %v569 = vadd.f32 %v513, %v565
        %s570 = sld [smem:[#allocation2 + $0x81]]
        %v571 = vstv %s570
        %v572 = vmul.f32 %v571, %v474
        %v573 = vmul.f32 %v571, %v475
        %576 = vrot.lane.b32.xlu0 %v572, 126
        %v577 = vpop.permute.xlu0 %576
        %578 = vrot.lane.b32.xlu0 %v573, 126
        %v579 = vpop.permute.xlu0 %578
        %v582 = vadd.f32 %v526, %v577
        %v583 = vadd.f32 %v527, %v579
        %s584 = sld [smem:[#allocation2 + $0x82]]
        %v585 = vstv %s584
        %v586 = vmul.f32 %v585, %v474
        %v587 = vmul.f32 %v585, %v475
        %590 = vrot.lane.b32.xlu0 %v586, 126
        %v591 = vpop.permute.xlu0 %590
        %592 = vrot.lane.b32.xlu0 %v587, 126
        %v593 = vpop.permute.xlu0 %592
        %v596 = vadd.f32 %v540, %v591
        %v597 = vadd.f32 %v541, %v593
        %s598 = sld [smem:[#allocation2 + $0x83]]
        %v599 = vstv %s598
        %v600 = vmul.f32 %v599, %v474
        %v601 = vmul.f32 %v599, %v475
        %604 = vrot.lane.b32.xlu0 %v600, 126
        %v605 = vpop.permute.xlu0 %604
        %606 = vrot.lane.b32.xlu0 %v601, 126
        %v607 = vpop.permute.xlu0 %606
        %v610 = vadd.f32 %v554, %v605
        %v611 = vadd.f32 %v555, %v607
        %s612 = scalar_lea.vmem %s192, 24
        %v613 = vld [vmem:[%s612] sm:$0xff]
        %v614 = vld [vmem:[%s612 + $0x8] sm:$0x7f]
        %s615 = sld [smem:[#allocation2 + $0x4]]
        %v616 = vstv %s615
        %v617 = vmul.f32 %v616, %v613
        %v618 = vmul.f32 %v616, %v614
        %v619 = vadd.f32 %v568, %v617
        %v620 = vadd.f32 %v569, %v618
        %s621 = sld [smem:[#allocation2 + $0x5]]
        %v622 = vstv %s621
        %v623 = vmul.f32 %v622, %v613
        %v624 = vmul.f32 %v622, %v614
        %v625 = vadd.f32 %v582, %v623
        %v626 = vadd.f32 %v583, %v624
        %s627 = sld [smem:[#allocation2 + $0x6]]
        %v628 = vstv %s627
        %v629 = vmul.f32 %v628, %v613
        %v630 = vmul.f32 %v628, %v614
        %v631 = vadd.f32 %v596, %v629
        %v632 = vadd.f32 %v597, %v630
        %s633 = sld [smem:[#allocation2 + $0x7]]
        %v634 = vstv %s633
        %v635 = vmul.f32 %v634, %v613
        %v636 = vmul.f32 %v634, %v614
        %v637 = vadd.f32 %v610, %v635
        %v638 = vadd.f32 %v611, %v636
        %s639 = sld [smem:[#allocation2 + $0x14]]
        %v640 = vstv %s639
        %v641 = vmul.f32 %v640, %v613
        %v642 = vmul.f32 %v640, %v614
        %645 = vrot.lane.b32.xlu0 %v641, 127
        %v646 = vpop.permute.xlu0 %645
        %647 = vrot.lane.b32.xlu0 %v642, 127
        %v648 = vpop.permute.xlu0 %647
        %v651 = vadd.f32 %v619, %v646
        %v652 = vadd.f32 %v620, %v648
        %s653 = sld [smem:[#allocation2 + $0x15]]
        %v654 = vstv %s653
        %v655 = vmul.f32 %v654, %v613
        %v656 = vmul.f32 %v654, %v614
        %659 = vrot.lane.b32.xlu0 %v655, 127
        %v660 = vpop.permute.xlu0 %659
        %661 = vrot.lane.b32.xlu0 %v656, 127
        %v662 = vpop.permute.xlu0 %661
        %v665 = vadd.f32 %v625, %v660
        %v666 = vadd.f32 %v626, %v662
        %s667 = sld [smem:[#allocation2 + $0x16]]
        %v668 = vstv %s667
        %v669 = vmul.f32 %v668, %v613
        %v670 = vmul.f32 %v668, %v614
        %673 = vrot.lane.b32.xlu0 %v669, 127
        %v674 = vpop.permute.xlu0 %673
        %675 = vrot.lane.b32.xlu0 %v670, 127
        %v676 = vpop.permute.xlu0 %675
        %v679 = vadd.f32 %v631, %v674
        %v680 = vadd.f32 %v632, %v676
        %s681 = sld [smem:[#allocation2 + $0x17]]
        %v682 = vstv %s681
        %v683 = vmul.f32 %v682, %v613
        %v684 = vmul.f32 %v682, %v614
        %687 = vrot.lane.b32.xlu0 %v683, 127
        %v688 = vpop.permute.xlu0 %687
        %689 = vrot.lane.b32.xlu0 %v684, 127
        %v690 = vpop.permute.xlu0 %689
        %v693 = vadd.f32 %v637, %v688
        %v694 = vadd.f32 %v638, %v690
        %s695 = sld [smem:[#allocation2 + $0x24]]
        %v696 = vstv %s695
        %v697 = vmul.f32 %v696, %v613
        %v698 = vmul.f32 %v696, %v614
        %701 = vrot.lane.b32.xlu0 %v697, 126
        %v702 = vpop.permute.xlu0 %701
        %703 = vrot.lane.b32.xlu0 %v698, 126
        %v704 = vpop.permute.xlu0 %703
        %v707 = vadd.f32 %v651, %v702
        %v708 = vadd.f32 %v652, %v704
        %s709 = sld [smem:[#allocation2 + $0x25]]
        %v710 = vstv %s709
        %v711 = vmul.f32 %v710, %v613
        %v712 = vmul.f32 %v710, %v614
        %715 = vrot.lane.b32.xlu0 %v711, 126
        %v716 = vpop.permute.xlu0 %715
        %717 = vrot.lane.b32.xlu0 %v712, 126
        %v718 = vpop.permute.xlu0 %717
        %v721 = vadd.f32 %v665, %v716
        %v722 = vadd.f32 %v666, %v718
        %s723 = sld [smem:[#allocation2 + $0x26]]
        %v724 = vstv %s723
        %v725 = vmul.f32 %v724, %v613
        %v726 = vmul.f32 %v724, %v614
        %729 = vrot.lane.b32.xlu0 %v725, 126
        %v730 = vpop.permute.xlu0 %729
        %731 = vrot.lane.b32.xlu0 %v726, 126
        %v732 = vpop.permute.xlu0 %731
        %v735 = vadd.f32 %v679, %v730
        %v736 = vadd.f32 %v680, %v732
        %s737 = sld [smem:[#allocation2 + $0x27]]
        %v738 = vstv %s737
        %v739 = vmul.f32 %v738, %v613
        %v740 = vmul.f32 %v738, %v614
        %743 = vrot.lane.b32.xlu0 %v739, 126
        %v744 = vpop.permute.xlu0 %743
        %745 = vrot.lane.b32.xlu0 %v740, 126
        %v746 = vpop.permute.xlu0 %745
        %v749 = vadd.f32 %v693, %v744
        %v750 = vadd.f32 %v694, %v746
        %v751 = vld [vmem:[%s612 + $0x1] sm:$0xff]
        %v752 = vld [vmem:[%s612 + $0x9] sm:$0x7f]
        %s753 = sld [smem:[#allocation2 + $0x34]]
        %v754 = vstv %s753
        %v755 = vmul.f32 %v754, %v751
        %v756 = vmul.f32 %v754, %v752
        %v757 = vadd.f32 %v707, %v755
        %v758 = vadd.f32 %v708, %v756
        %s759 = sld [smem:[#allocation2 + $0x35]]
        %v760 = vstv %s759
        %v761 = vmul.f32 %v760, %v751
        %v762 = vmul.f32 %v760, %v752
        %v763 = vadd.f32 %v721, %v761
        %v764 = vadd.f32 %v722, %v762
        %s765 = sld [smem:[#allocation2 + $0x36]]
        %v766 = vstv %s765
        %v767 = vmul.f32 %v766, %v751
        %v768 = vmul.f32 %v766, %v752
        %v769 = vadd.f32 %v735, %v767
        %v770 = vadd.f32 %v736, %v768
        %s771 = sld [smem:[#allocation2 + $0x37]]
        %v772 = vstv %s771
        %v773 = vmul.f32 %v772, %v751
        %v774 = vmul.f32 %v772, %v752
        %v775 = vadd.f32 %v749, %v773
        %v776 = vadd.f32 %v750, %v774
        %s777 = sld [smem:[#allocation2 + $0x44]]
        %v778 = vstv %s777
        %v779 = vmul.f32 %v778, %v751
        %v780 = vmul.f32 %v778, %v752
        %783 = vrot.lane.b32.xlu0 %v779, 127
        %v784 = vpop.permute.xlu0 %783
        %785 = vrot.lane.b32.xlu0 %v780, 127
        %v786 = vpop.permute.xlu0 %785
        %v789 = vadd.f32 %v757, %v784
        %v790 = vadd.f32 %v758, %v786
        %s791 = sld [smem:[#allocation2 + $0x45]]
        %v792 = vstv %s791
        %v793 = vmul.f32 %v792, %v751
        %v794 = vmul.f32 %v792, %v752
        %797 = vrot.lane.b32.xlu0 %v793, 127
        %v798 = vpop.permute.xlu0 %797
        %799 = vrot.lane.b32.xlu0 %v794, 127
        %v800 = vpop.permute.xlu0 %799
        %v803 = vadd.f32 %v763, %v798
        %v804 = vadd.f32 %v764, %v800
        %s805 = sld [smem:[#allocation2 + $0x46]]
        %v806 = vstv %s805
        %v807 = vmul.f32 %v806, %v751
        %v808 = vmul.f32 %v806, %v752
        %811 = vrot.lane.b32.xlu0 %v807, 127
        %v812 = vpop.permute.xlu0 %811
        %813 = vrot.lane.b32.xlu0 %v808, 127
        %v814 = vpop.permute.xlu0 %813
        %v817 = vadd.f32 %v769, %v812
        %v818 = vadd.f32 %v770, %v814
        %s819 = sld [smem:[#allocation2 + $0x47]]
        %v820 = vstv %s819
        %v821 = vmul.f32 %v820, %v751
        %v822 = vmul.f32 %v820, %v752
        %825 = vrot.lane.b32.xlu0 %v821, 127
        %v826 = vpop.permute.xlu0 %825
        %827 = vrot.lane.b32.xlu0 %v822, 127
        %v828 = vpop.permute.xlu0 %827
        %v831 = vadd.f32 %v775, %v826
        %v832 = vadd.f32 %v776, %v828
        %s833 = sld [smem:[#allocation2 + $0x54]]
        %v834 = vstv %s833
        %v835 = vmul.f32 %v834, %v751
        %v836 = vmul.f32 %v834, %v752
        %839 = vrot.lane.b32.xlu0 %v835, 126
        %v840 = vpop.permute.xlu0 %839
        %841 = vrot.lane.b32.xlu0 %v836, 126
        %v842 = vpop.permute.xlu0 %841
        %v845 = vadd.f32 %v789, %v840
        %v846 = vadd.f32 %v790, %v842
        %s847 = sld [smem:[#allocation2 + $0x55]]
        %v848 = vstv %s847
        %v849 = vmul.f32 %v848, %v751
        %v850 = vmul.f32 %v848, %v752
        %853 = vrot.lane.b32.xlu0 %v849, 126
        %v854 = vpop.permute.xlu0 %853
        %855 = vrot.lane.b32.xlu0 %v850, 126
        %v856 = vpop.permute.xlu0 %855
        %v859 = vadd.f32 %v803, %v854
        %v860 = vadd.f32 %v804, %v856
        %s861 = sld [smem:[#allocation2 + $0x56]]
        %v862 = vstv %s861
        %v863 = vmul.f32 %v862, %v751
        %v864 = vmul.f32 %v862, %v752
        %867 = vrot.lane.b32.xlu0 %v863, 126
        %v868 = vpop.permute.xlu0 %867
        %869 = vrot.lane.b32.xlu0 %v864, 126
        %v870 = vpop.permute.xlu0 %869
        %v873 = vadd.f32 %v817, %v868
        %v874 = vadd.f32 %v818, %v870
        %s875 = sld [smem:[#allocation2 + $0x57]]
        %v876 = vstv %s875
        %v877 = vmul.f32 %v876, %v751
        %v878 = vmul.f32 %v876, %v752
        %881 = vrot.lane.b32.xlu0 %v877, 126
        %v882 = vpop.permute.xlu0 %881
        %883 = vrot.lane.b32.xlu0 %v878, 126
        %v884 = vpop.permute.xlu0 %883
        %v887 = vadd.f32 %v831, %v882
        %v888 = vadd.f32 %v832, %v884
        %v889 = vld [vmem:[%s612 + $0x2] sm:$0xff]
        %v890 = vld [vmem:[%s612 + $0xa] sm:$0x7f]
        %s891 = sld [smem:[#allocation2 + $0x64]]
        %v892 = vstv %s891
        %v893 = vmul.f32 %v892, %v889
        %v894 = vmul.f32 %v892, %v890
        %v895 = vadd.f32 %v845, %v893
        %v896 = vadd.f32 %v846, %v894
        %s897 = sld [smem:[#allocation2 + $0x65]]
        %v898 = vstv %s897
        %v899 = vmul.f32 %v898, %v889
        %v900 = vmul.f32 %v898, %v890
        %v901 = vadd.f32 %v859, %v899
        %v902 = vadd.f32 %v860, %v900
        %s903 = sld [smem:[#allocation2 + $0x66]]
        %v904 = vstv %s903
        %v905 = vmul.f32 %v904, %v889
        %v906 = vmul.f32 %v904, %v890
        %v907 = vadd.f32 %v873, %v905
        %v908 = vadd.f32 %v874, %v906
        %s909 = sld [smem:[#allocation2 + $0x67]]
        %v910 = vstv %s909
        %v911 = vmul.f32 %v910, %v889
        %v912 = vmul.f32 %v910, %v890
        %v913 = vadd.f32 %v887, %v911
        %v914 = vadd.f32 %v888, %v912
        %s915 = sld [smem:[#allocation2 + $0x74]]
        %v916 = vstv %s915
        %v917 = vmul.f32 %v916, %v889
        %v918 = vmul.f32 %v916, %v890
        %921 = vrot.lane.b32.xlu0 %v917, 127
        %v922 = vpop.permute.xlu0 %921
        %923 = vrot.lane.b32.xlu0 %v918, 127
        %v924 = vpop.permute.xlu0 %923
        %v927 = vadd.f32 %v895, %v922
        %v928 = vadd.f32 %v896, %v924
        %s929 = sld [smem:[#allocation2 + $0x75]]
        %v930 = vstv %s929
        %v931 = vmul.f32 %v930, %v889
        %v932 = vmul.f32 %v930, %v890
        %935 = vrot.lane.b32.xlu0 %v931, 127
        %v936 = vpop.permute.xlu0 %935
        %937 = vrot.lane.b32.xlu0 %v932, 127
        %v938 = vpop.permute.xlu0 %937
        %v941 = vadd.f32 %v901, %v936
        %v942 = vadd.f32 %v902, %v938
        %s943 = sld [smem:[#allocation2 + $0x76]]
        %v944 = vstv %s943
        %v945 = vmul.f32 %v944, %v889
        %v946 = vmul.f32 %v944, %v890
        %949 = vrot.lane.b32.xlu0 %v945, 127
        %v950 = vpop.permute.xlu0 %949
        %951 = vrot.lane.b32.xlu0 %v946, 127
        %v952 = vpop.permute.xlu0 %951
        %v955 = vadd.f32 %v907, %v950
        %v956 = vadd.f32 %v908, %v952
        %s957 = sld [smem:[#allocation2 + $0x77]]
        %v958 = vstv %s957
        %v959 = vmul.f32 %v958, %v889
        %v960 = vmul.f32 %v958, %v890
        %963 = vrot.lane.b32.xlu0 %v959, 127
        %v964 = vpop.permute.xlu0 %963
        %965 = vrot.lane.b32.xlu0 %v960, 127
        %v966 = vpop.permute.xlu0 %965
        %v969 = vadd.f32 %v913, %v964
        %v970 = vadd.f32 %v914, %v966
        %s971 = sld [smem:[#allocation2 + $0x84]]
        %v972 = vstv %s971
        %v973 = vmul.f32 %v972, %v889
        %v974 = vmul.f32 %v972, %v890
        %977 = vrot.lane.b32.xlu0 %v973, 126
        %v978 = vpop.permute.xlu0 %977
        %979 = vrot.lane.b32.xlu0 %v974, 126
        %v980 = vpop.permute.xlu0 %979
        %v983 = vadd.f32 %v927, %v978
        %v984 = vadd.f32 %v928, %v980
        %s985 = sld [smem:[#allocation2 + $0x85]]
        %v986 = vstv %s985
        %v987 = vmul.f32 %v986, %v889
        %v988 = vmul.f32 %v986, %v890
        %991 = vrot.lane.b32.xlu0 %v987, 126
        %v992 = vpop.permute.xlu0 %991
        %993 = vrot.lane.b32.xlu0 %v988, 126
        %v994 = vpop.permute.xlu0 %993
        %v997 = vadd.f32 %v941, %v992
        %v998 = vadd.f32 %v942, %v994
        %s999 = sld [smem:[#allocation2 + $0x86]]
        %v1000 = vstv %s999
        %v1001 = vmul.f32 %v1000, %v889
        %v1002 = vmul.f32 %v1000, %v890
        %1005 = vrot.lane.b32.xlu0 %v1001, 126
        %v1006 = vpop.permute.xlu0 %1005
        %1007 = vrot.lane.b32.xlu0 %v1002, 126
        %v1008 = vpop.permute.xlu0 %1007
        %v1011 = vadd.f32 %v955, %v1006
        %v1012 = vadd.f32 %v956, %v1008
        %s1013 = sld [smem:[#allocation2 + $0x87]]
        %v1014 = vstv %s1013
        %v1015 = vmul.f32 %v1014, %v889
        %v1016 = vmul.f32 %v1014, %v890
        %1019 = vrot.lane.b32.xlu0 %v1015, 126
        %v1020 = vpop.permute.xlu0 %1019
        %1021 = vrot.lane.b32.xlu0 %v1016, 126
        %v1022 = vpop.permute.xlu0 %1021
        %v1025 = vadd.f32 %v969, %v1020
        %v1026 = vadd.f32 %v970, %v1022
        %s1027 = scalar_lea.vmem %s192, 48
        %v1028 = vld [vmem:[%s1027] sm:$0xff]
        %v1029 = vld [vmem:[%s1027 + $0x8] sm:$0x7f]
        %s1030 = sld [smem:[#allocation2 + $0x8]]
        %v1031 = vstv %s1030
        %v1032 = vmul.f32 %v1031, %v1028
        %v1033 = vmul.f32 %v1031, %v1029
        %v1034 = vadd.f32 %v983, %v1032
        %v1035 = vadd.f32 %v984, %v1033
        %s1036 = sld [smem:[#allocation2 + $0x9]]
        %v1037 = vstv %s1036
        %v1038 = vmul.f32 %v1037, %v1028
        %v1039 = vmul.f32 %v1037, %v1029
        %v1040 = vadd.f32 %v997, %v1038
        %v1041 = vadd.f32 %v998, %v1039
        %s1042 = sld [smem:[#allocation2 + $0xa]]
        %v1043 = vstv %s1042
        %v1044 = vmul.f32 %v1043, %v1028
        %v1045 = vmul.f32 %v1043, %v1029
        %v1046 = vadd.f32 %v1011, %v1044
        %v1047 = vadd.f32 %v1012, %v1045
        %s1048 = sld [smem:[#allocation2 + $0xb]]
        %v1049 = vstv %s1048
        %v1050 = vmul.f32 %v1049, %v1028
        %v1051 = vmul.f32 %v1049, %v1029
        %v1052 = vadd.f32 %v1025, %v1050
        %v1053 = vadd.f32 %v1026, %v1051
        %s1054 = sld [smem:[#allocation2 + $0x18]]
        %v1055 = vstv %s1054
        %v1056 = vmul.f32 %v1055, %v1028
        %v1057 = vmul.f32 %v1055, %v1029
        %1060 = vrot.lane.b32.xlu0 %v1056, 127
        %v1061 = vpop.permute.xlu0 %1060
        %1062 = vrot.lane.b32.xlu0 %v1057, 127
        %v1063 = vpop.permute.xlu0 %1062
        %v1066 = vadd.f32 %v1034, %v1061
        %v1067 = vadd.f32 %v1035, %v1063
        %s1068 = sld [smem:[#allocation2 + $0x19]]
        %v1069 = vstv %s1068
        %v1070 = vmul.f32 %v1069, %v1028
        %v1071 = vmul.f32 %v1069, %v1029
        %1074 = vrot.lane.b32.xlu0 %v1070, 127
        %v1075 = vpop.permute.xlu0 %1074
        %1076 = vrot.lane.b32.xlu0 %v1071, 127
        %v1077 = vpop.permute.xlu0 %1076
        %v1080 = vadd.f32 %v1040, %v1075
        %v1081 = vadd.f32 %v1041, %v1077
        %s1082 = sld [smem:[#allocation2 + $0x1a]]
        %v1083 = vstv %s1082
        %v1084 = vmul.f32 %v1083, %v1028
        %v1085 = vmul.f32 %v1083, %v1029
        %1088 = vrot.lane.b32.xlu0 %v1084, 127
        %v1089 = vpop.permute.xlu0 %1088
        %1090 = vrot.lane.b32.xlu0 %v1085, 127
        %v1091 = vpop.permute.xlu0 %1090
        %v1094 = vadd.f32 %v1046, %v1089
        %v1095 = vadd.f32 %v1047, %v1091
        %s1096 = sld [smem:[#allocation2 + $0x1b]]
        %v1097 = vstv %s1096
        %v1098 = vmul.f32 %v1097, %v1028
        %v1099 = vmul.f32 %v1097, %v1029
        %1102 = vrot.lane.b32.xlu0 %v1098, 127
        %v1103 = vpop.permute.xlu0 %1102
        %1104 = vrot.lane.b32.xlu0 %v1099, 127
        %v1105 = vpop.permute.xlu0 %1104
        %v1108 = vadd.f32 %v1052, %v1103
        %v1109 = vadd.f32 %v1053, %v1105
        %s1110 = sld [smem:[#allocation2 + $0x28]]
        %v1111 = vstv %s1110
        %v1112 = vmul.f32 %v1111, %v1028
        %v1113 = vmul.f32 %v1111, %v1029
        %1116 = vrot.lane.b32.xlu0 %v1112, 126
        %v1117 = vpop.permute.xlu0 %1116
        %1118 = vrot.lane.b32.xlu0 %v1113, 126
        %v1119 = vpop.permute.xlu0 %1118
        %v1122 = vadd.f32 %v1066, %v1117
        %v1123 = vadd.f32 %v1067, %v1119
        %s1124 = sld [smem:[#allocation2 + $0x29]]
        %v1125 = vstv %s1124
        %v1126 = vmul.f32 %v1125, %v1028
        %v1127 = vmul.f32 %v1125, %v1029
        %1130 = vrot.lane.b32.xlu0 %v1126, 126
        %v1131 = vpop.permute.xlu0 %1130
        %1132 = vrot.lane.b32.xlu0 %v1127, 126
        %v1133 = vpop.permute.xlu0 %1132
        %v1136 = vadd.f32 %v1080, %v1131
        %v1137 = vadd.f32 %v1081, %v1133
        %s1138 = sld [smem:[#allocation2 + $0x2a]]
        %v1139 = vstv %s1138
        %v1140 = vmul.f32 %v1139, %v1028
        %v1141 = vmul.f32 %v1139, %v1029
        %1144 = vrot.lane.b32.xlu0 %v1140, 126
        %v1145 = vpop.permute.xlu0 %1144
        %1146 = vrot.lane.b32.xlu0 %v1141, 126
        %v1147 = vpop.permute.xlu0 %1146
        %v1150 = vadd.f32 %v1094, %v1145
        %v1151 = vadd.f32 %v1095, %v1147
        %s1152 = sld [smem:[#allocation2 + $0x2b]]
        %v1153 = vstv %s1152
        %v1154 = vmul.f32 %v1153, %v1028
        %v1155 = vmul.f32 %v1153, %v1029
        %1158 = vrot.lane.b32.xlu0 %v1154, 126
        %v1159 = vpop.permute.xlu0 %1158
        %1160 = vrot.lane.b32.xlu0 %v1155, 126
        %v1161 = vpop.permute.xlu0 %1160
        %v1164 = vadd.f32 %v1108, %v1159
        %v1165 = vadd.f32 %v1109, %v1161
        %v1166 = vld [vmem:[%s1027 + $0x1] sm:$0xff]
        %v1167 = vld [vmem:[%s1027 + $0x9] sm:$0x7f]
        %s1168 = sld [smem:[#allocation2 + $0x38]]
        %v1169 = vstv %s1168
        %v1170 = vmul.f32 %v1169, %v1166
        %v1171 = vmul.f32 %v1169, %v1167
        %v1172 = vadd.f32 %v1122, %v1170
        %v1173 = vadd.f32 %v1123, %v1171
        %s1174 = sld [smem:[#allocation2 + $0x39]]
        %v1175 = vstv %s1174
        %v1176 = vmul.f32 %v1175, %v1166
        %v1177 = vmul.f32 %v1175, %v1167
        %v1178 = vadd.f32 %v1136, %v1176
        %v1179 = vadd.f32 %v1137, %v1177
        %s1180 = sld [smem:[#allocation2 + $0x3a]]
        %v1181 = vstv %s1180
        %v1182 = vmul.f32 %v1181, %v1166
        %v1183 = vmul.f32 %v1181, %v1167
        %v1184 = vadd.f32 %v1150, %v1182
        %v1185 = vadd.f32 %v1151, %v1183
        %s1186 = sld [smem:[#allocation2 + $0x3b]]
        %v1187 = vstv %s1186
        %v1188 = vmul.f32 %v1187, %v1166
        %v1189 = vmul.f32 %v1187, %v1167
        %v1190 = vadd.f32 %v1164, %v1188
        %v1191 = vadd.f32 %v1165, %v1189
        %s1192 = sld [smem:[#allocation2 + $0x48]]
        %v1193 = vstv %s1192
        %v1194 = vmul.f32 %v1193, %v1166
        %v1195 = vmul.f32 %v1193, %v1167
        %1198 = vrot.lane.b32.xlu0 %v1194, 127
        %v1199 = vpop.permute.xlu0 %1198
        %1200 = vrot.lane.b32.xlu0 %v1195, 127
        %v1201 = vpop.permute.xlu0 %1200
        %v1204 = vadd.f32 %v1172, %v1199
        %v1205 = vadd.f32 %v1173, %v1201
        %s1206 = sld [smem:[#allocation2 + $0x49]]
        %v1207 = vstv %s1206
        %v1208 = vmul.f32 %v1207, %v1166
        %v1209 = vmul.f32 %v1207, %v1167
        %1212 = vrot.lane.b32.xlu0 %v1208, 127
        %v1213 = vpop.permute.xlu0 %1212
        %1214 = vrot.lane.b32.xlu0 %v1209, 127
        %v1215 = vpop.permute.xlu0 %1214
        %v1218 = vadd.f32 %v1178, %v1213
        %v1219 = vadd.f32 %v1179, %v1215
        %s1220 = sld [smem:[#allocation2 + $0x4a]]
        %v1221 = vstv %s1220
        %v1222 = vmul.f32 %v1221, %v1166
        %v1223 = vmul.f32 %v1221, %v1167
        %1226 = vrot.lane.b32.xlu0 %v1222, 127
        %v1227 = vpop.permute.xlu0 %1226
        %1228 = vrot.lane.b32.xlu0 %v1223, 127
        %v1229 = vpop.permute.xlu0 %1228
        %v1232 = vadd.f32 %v1184, %v1227
        %v1233 = vadd.f32 %v1185, %v1229
        %s1234 = sld [smem:[#allocation2 + $0x4b]]
        %v1235 = vstv %s1234
        %v1236 = vmul.f32 %v1235, %v1166
        %v1237 = vmul.f32 %v1235, %v1167
        %1240 = vrot.lane.b32.xlu0 %v1236, 127
        %v1241 = vpop.permute.xlu0 %1240
        %1242 = vrot.lane.b32.xlu0 %v1237, 127
        %v1243 = vpop.permute.xlu0 %1242
        %v1246 = vadd.f32 %v1190, %v1241
        %v1247 = vadd.f32 %v1191, %v1243
        %s1248 = sld [smem:[#allocation2 + $0x58]]
        %v1249 = vstv %s1248
        %v1250 = vmul.f32 %v1249, %v1166
        %v1251 = vmul.f32 %v1249, %v1167
        %1254 = vrot.lane.b32.xlu0 %v1250, 126
        %v1255 = vpop.permute.xlu0 %1254
        %1256 = vrot.lane.b32.xlu0 %v1251, 126
        %v1257 = vpop.permute.xlu0 %1256
        %v1260 = vadd.f32 %v1204, %v1255
        %v1261 = vadd.f32 %v1205, %v1257
        %s1262 = sld [smem:[#allocation2 + $0x59]]
        %v1263 = vstv %s1262
        %v1264 = vmul.f32 %v1263, %v1166
        %v1265 = vmul.f32 %v1263, %v1167
        %1268 = vrot.lane.b32.xlu0 %v1264, 126
        %v1269 = vpop.permute.xlu0 %1268
        %1270 = vrot.lane.b32.xlu0 %v1265, 126
        %v1271 = vpop.permute.xlu0 %1270
        %v1274 = vadd.f32 %v1218, %v1269
        %v1275 = vadd.f32 %v1219, %v1271
        %s1276 = sld [smem:[#allocation2 + $0x5a]]
        %v1277 = vstv %s1276
        %v1278 = vmul.f32 %v1277, %v1166
        %v1279 = vmul.f32 %v1277, %v1167
        %1282 = vrot.lane.b32.xlu0 %v1278, 126
        %v1283 = vpop.permute.xlu0 %1282
        %1284 = vrot.lane.b32.xlu0 %v1279, 126
        %v1285 = vpop.permute.xlu0 %1284
        %v1288 = vadd.f32 %v1232, %v1283
        %v1289 = vadd.f32 %v1233, %v1285
        %s1290 = sld [smem:[#allocation2 + $0x5b]]
        %v1291 = vstv %s1290
        %v1292 = vmul.f32 %v1291, %v1166
        %v1293 = vmul.f32 %v1291, %v1167
        %1296 = vrot.lane.b32.xlu0 %v1292, 126
        %v1297 = vpop.permute.xlu0 %1296
        %1298 = vrot.lane.b32.xlu0 %v1293, 126
        %v1299 = vpop.permute.xlu0 %1298
        %v1302 = vadd.f32 %v1246, %v1297
        %v1303 = vadd.f32 %v1247, %v1299
        %v1304 = vld [vmem:[%s1027 + $0x2] sm:$0xff]
        %v1305 = vld [vmem:[%s1027 + $0xa] sm:$0x7f]
        %s1306 = sld [smem:[#allocation2 + $0x68]]
        %v1307 = vstv %s1306
        %v1308 = vmul.f32 %v1307, %v1304
        %v1309 = vmul.f32 %v1307, %v1305
        %v1310 = vadd.f32 %v1260, %v1308
        %v1311 = vadd.f32 %v1261, %v1309
        %s1312 = sld [smem:[#allocation2 + $0x69]]
        %v1313 = vstv %s1312
        %v1314 = vmul.f32 %v1313, %v1304
        %v1315 = vmul.f32 %v1313, %v1305
        %v1316 = vadd.f32 %v1274, %v1314
        %v1317 = vadd.f32 %v1275, %v1315
        %s1318 = sld [smem:[#allocation2 + $0x6a]]
        %v1319 = vstv %s1318
        %v1320 = vmul.f32 %v1319, %v1304
        %v1321 = vmul.f32 %v1319, %v1305
        %v1322 = vadd.f32 %v1288, %v1320
        %v1323 = vadd.f32 %v1289, %v1321
        %s1324 = sld [smem:[#allocation2 + $0x6b]]
        %v1325 = vstv %s1324
        %v1326 = vmul.f32 %v1325, %v1304
        %v1327 = vmul.f32 %v1325, %v1305
        %v1328 = vadd.f32 %v1302, %v1326
        %v1329 = vadd.f32 %v1303, %v1327
        %s1330 = sld [smem:[#allocation2 + $0x78]]
        %v1331 = vstv %s1330
        %v1332 = vmul.f32 %v1331, %v1304
        %v1333 = vmul.f32 %v1331, %v1305
        %1336 = vrot.lane.b32.xlu0 %v1332, 127
        %v1337 = vpop.permute.xlu0 %1336
        %1338 = vrot.lane.b32.xlu0 %v1333, 127
        %v1339 = vpop.permute.xlu0 %1338
        %v1342 = vadd.f32 %v1310, %v1337
        %v1343 = vadd.f32 %v1311, %v1339
        %s1344 = sld [smem:[#allocation2 + $0x79]]
        %v1345 = vstv %s1344
        %v1346 = vmul.f32 %v1345, %v1304
        %v1347 = vmul.f32 %v1345, %v1305
        %1350 = vrot.lane.b32.xlu0 %v1346, 127
        %v1351 = vpop.permute.xlu0 %1350
        %1352 = vrot.lane.b32.xlu0 %v1347, 127
        %v1353 = vpop.permute.xlu0 %1352
        %v1356 = vadd.f32 %v1316, %v1351
        %v1357 = vadd.f32 %v1317, %v1353
        %s1358 = sld [smem:[#allocation2 + $0x7a]]
        %v1359 = vstv %s1358
        %v1360 = vmul.f32 %v1359, %v1304
        %v1361 = vmul.f32 %v1359, %v1305
        %1364 = vrot.lane.b32.xlu0 %v1360, 127
        %v1365 = vpop.permute.xlu0 %1364
        %1366 = vrot.lane.b32.xlu0 %v1361, 127
        %v1367 = vpop.permute.xlu0 %1366
        %v1370 = vadd.f32 %v1322, %v1365
        %v1371 = vadd.f32 %v1323, %v1367
        %s1372 = sld [smem:[#allocation2 + $0x7b]]
        %v1373 = vstv %s1372
        %v1374 = vmul.f32 %v1373, %v1304
        %v1375 = vmul.f32 %v1373, %v1305
        %1378 = vrot.lane.b32.xlu0 %v1374, 127
        %v1379 = vpop.permute.xlu0 %1378
        %1380 = vrot.lane.b32.xlu0 %v1375, 127
        %v1381 = vpop.permute.xlu0 %1380
        %v1384 = vadd.f32 %v1328, %v1379
        %v1385 = vadd.f32 %v1329, %v1381
        %s1386 = sld [smem:[#allocation2 + $0x88]]
        %v1387 = vstv %s1386
        %v1388 = vmul.f32 %v1387, %v1304
        %v1389 = vmul.f32 %v1387, %v1305
        %1392 = vrot.lane.b32.xlu0 %v1388, 126
        %v1393 = vpop.permute.xlu0 %1392
        %1394 = vrot.lane.b32.xlu0 %v1389, 126
        %v1395 = vpop.permute.xlu0 %1394
        %v1398 = vadd.f32 %v1342, %v1393
        %v1399 = vadd.f32 %v1343, %v1395
        %s1400 = sld [smem:[#allocation2 + $0x89]]
        %v1401 = vstv %s1400
        %v1402 = vmul.f32 %v1401, %v1304
        %v1403 = vmul.f32 %v1401, %v1305
        %1406 = vrot.lane.b32.xlu0 %v1402, 126
        %v1407 = vpop.permute.xlu0 %1406
        %1408 = vrot.lane.b32.xlu0 %v1403, 126
        %v1409 = vpop.permute.xlu0 %1408
        %v1412 = vadd.f32 %v1356, %v1407
        %v1413 = vadd.f32 %v1357, %v1409
        %s1414 = sld [smem:[#allocation2 + $0x8a]]
        %v1415 = vstv %s1414
        %v1416 = vmul.f32 %v1415, %v1304
        %v1417 = vmul.f32 %v1415, %v1305
        %1420 = vrot.lane.b32.xlu0 %v1416, 126
        %v1421 = vpop.permute.xlu0 %1420
        %1422 = vrot.lane.b32.xlu0 %v1417, 126
        %v1423 = vpop.permute.xlu0 %1422
        %v1426 = vadd.f32 %v1370, %v1421
        %v1427 = vadd.f32 %v1371, %v1423
        %s1428 = sld [smem:[#allocation2 + $0x8b]]
        %v1429 = vstv %s1428
        %v1430 = vmul.f32 %v1429, %v1304
        %v1431 = vmul.f32 %v1429, %v1305
        %1434 = vrot.lane.b32.xlu0 %v1430, 126
        %v1435 = vpop.permute.xlu0 %1434
        %1436 = vrot.lane.b32.xlu0 %v1431, 126
        %v1437 = vpop.permute.xlu0 %1436
        %v1440 = vadd.f32 %v1384, %v1435
        %v1441 = vadd.f32 %v1385, %v1437
        %s1442 = scalar_lea.vmem %s192, 72
        %v1443 = vld [vmem:[%s1442] sm:$0xff]
        %v1444 = vld [vmem:[%s1442 + $0x8] sm:$0x7f]
        %s1445 = sld [smem:[#allocation2 + $0xc]]
        %v1446 = vstv %s1445
        %v1447 = vmul.f32 %v1446, %v1443
        %v1448 = vmul.f32 %v1446, %v1444
        %v1449 = vadd.f32 %v1398, %v1447
        %v1450 = vadd.f32 %v1399, %v1448
        %s1451 = sld [smem:[#allocation2 + $0xd]]
        %v1452 = vstv %s1451
        %v1453 = vmul.f32 %v1452, %v1443
        %v1454 = vmul.f32 %v1452, %v1444
        %v1455 = vadd.f32 %v1412, %v1453
        %v1456 = vadd.f32 %v1413, %v1454
        %s1457 = sld [smem:[#allocation2 + $0xe]]
        %v1458 = vstv %s1457
        %v1459 = vmul.f32 %v1458, %v1443
        %v1460 = vmul.f32 %v1458, %v1444
        %v1461 = vadd.f32 %v1426, %v1459
        %v1462 = vadd.f32 %v1427, %v1460
        %s1463 = sld [smem:[#allocation2 + $0xf]]
        %v1464 = vstv %s1463
        %v1465 = vmul.f32 %v1464, %v1443
        %v1466 = vmul.f32 %v1464, %v1444
        %v1467 = vadd.f32 %v1440, %v1465
        %v1468 = vadd.f32 %v1441, %v1466
        %s1469 = sld [smem:[#allocation2 + $0x1c]]
        %v1470 = vstv %s1469
        %v1471 = vmul.f32 %v1470, %v1443
        %v1472 = vmul.f32 %v1470, %v1444
        %1475 = vrot.lane.b32.xlu0 %v1471, 127
        %v1476 = vpop.permute.xlu0 %1475
        %1477 = vrot.lane.b32.xlu0 %v1472, 127
        %v1478 = vpop.permute.xlu0 %1477
        %v1481 = vadd.f32 %v1449, %v1476
        %v1482 = vadd.f32 %v1450, %v1478
        %s1483 = sld [smem:[#allocation2 + $0x1d]]
        %v1484 = vstv %s1483
        %v1485 = vmul.f32 %v1484, %v1443
        %v1486 = vmul.f32 %v1484, %v1444
        %1489 = vrot.lane.b32.xlu0 %v1485, 127
        %v1490 = vpop.permute.xlu0 %1489
        %1491 = vrot.lane.b32.xlu0 %v1486, 127
        %v1492 = vpop.permute.xlu0 %1491
        %v1495 = vadd.f32 %v1455, %v1490
        %v1496 = vadd.f32 %v1456, %v1492
        %s1497 = sld [smem:[#allocation2 + $0x1e]]
        %v1498 = vstv %s1497
        %v1499 = vmul.f32 %v1498, %v1443
        %v1500 = vmul.f32 %v1498, %v1444
        %1503 = vrot.lane.b32.xlu0 %v1499, 127
        %v1504 = vpop.permute.xlu0 %1503
        %1505 = vrot.lane.b32.xlu0 %v1500, 127
        %v1506 = vpop.permute.xlu0 %1505
        %v1509 = vadd.f32 %v1461, %v1504
        %v1510 = vadd.f32 %v1462, %v1506
        %s1511 = sld [smem:[#allocation2 + $0x1f]]
        %v1512 = vstv %s1511
        %v1513 = vmul.f32 %v1512, %v1443
        %v1514 = vmul.f32 %v1512, %v1444
        %1517 = vrot.lane.b32.xlu0 %v1513, 127
        %v1518 = vpop.permute.xlu0 %1517
        %1519 = vrot.lane.b32.xlu0 %v1514, 127
        %v1520 = vpop.permute.xlu0 %1519
        %v1523 = vadd.f32 %v1467, %v1518
        %v1524 = vadd.f32 %v1468, %v1520
        %s1525 = sld [smem:[#allocation2 + $0x2c]]
        %v1526 = vstv %s1525
        %v1527 = vmul.f32 %v1526, %v1443
        %v1528 = vmul.f32 %v1526, %v1444
        %1531 = vrot.lane.b32.xlu0 %v1527, 126
        %v1532 = vpop.permute.xlu0 %1531
        %1533 = vrot.lane.b32.xlu0 %v1528, 126
        %v1534 = vpop.permute.xlu0 %1533
        %v1537 = vadd.f32 %v1481, %v1532
        %v1538 = vadd.f32 %v1482, %v1534
        %s1539 = sld [smem:[#allocation2 + $0x2d]]
        %v1540 = vstv %s1539
        %v1541 = vmul.f32 %v1540, %v1443
        %v1542 = vmul.f32 %v1540, %v1444
        %1545 = vrot.lane.b32.xlu0 %v1541, 126
        %v1546 = vpop.permute.xlu0 %1545
        %1547 = vrot.lane.b32.xlu0 %v1542, 126
        %v1548 = vpop.permute.xlu0 %1547
        %v1551 = vadd.f32 %v1495, %v1546
        %v1552 = vadd.f32 %v1496, %v1548
        %s1553 = sld [smem:[#allocation2 + $0x2e]]
        %v1554 = vstv %s1553
        %v1555 = vmul.f32 %v1554, %v1443
        %v1556 = vmul.f32 %v1554, %v1444
        %1559 = vrot.lane.b32.xlu0 %v1555, 126
        %v1560 = vpop.permute.xlu0 %1559
        %1561 = vrot.lane.b32.xlu0 %v1556, 126
        %v1562 = vpop.permute.xlu0 %1561
        %v1565 = vadd.f32 %v1509, %v1560
        %v1566 = vadd.f32 %v1510, %v1562
        %s1567 = sld [smem:[#allocation2 + $0x2f]]
        %v1568 = vstv %s1567
        %v1569 = vmul.f32 %v1568, %v1443
        %v1570 = vmul.f32 %v1568, %v1444
        %1573 = vrot.lane.b32.xlu0 %v1569, 126
        %v1574 = vpop.permute.xlu0 %1573
        %1575 = vrot.lane.b32.xlu0 %v1570, 126
        %v1576 = vpop.permute.xlu0 %1575
        %v1579 = vadd.f32 %v1523, %v1574
        %v1580 = vadd.f32 %v1524, %v1576
        %v1581 = vld [vmem:[%s1442 + $0x1] sm:$0xff]
        %v1582 = vld [vmem:[%s1442 + $0x9] sm:$0x7f]
        %s1583 = sld [smem:[#allocation2 + $0x3c]]
        %v1584 = vstv %s1583
        %v1585 = vmul.f32 %v1584, %v1581
        %v1586 = vmul.f32 %v1584, %v1582
        %v1587 = vadd.f32 %v1537, %v1585
        %v1588 = vadd.f32 %v1538, %v1586
        %s1589 = sld [smem:[#allocation2 + $0x3d]]
        %v1590 = vstv %s1589
        %v1591 = vmul.f32 %v1590, %v1581
        %v1592 = vmul.f32 %v1590, %v1582
        %v1593 = vadd.f32 %v1551, %v1591
        %v1594 = vadd.f32 %v1552, %v1592
        %s1595 = sld [smem:[#allocation2 + $0x3e]]
        %v1596 = vstv %s1595
        %v1597 = vmul.f32 %v1596, %v1581
        %v1598 = vmul.f32 %v1596, %v1582
        %v1599 = vadd.f32 %v1565, %v1597
        %v1600 = vadd.f32 %v1566, %v1598
        %s1601 = sld [smem:[#allocation2 + $0x3f]]
        %v1602 = vstv %s1601
        %v1603 = vmul.f32 %v1602, %v1581
        %v1604 = vmul.f32 %v1602, %v1582
        %v1605 = vadd.f32 %v1579, %v1603
        %v1606 = vadd.f32 %v1580, %v1604
        %s1607 = sld [smem:[#allocation2 + $0x4c]]
        %v1608 = vstv %s1607
        %v1609 = vmul.f32 %v1608, %v1581
        %v1610 = vmul.f32 %v1608, %v1582
        %1613 = vrot.lane.b32.xlu0 %v1609, 127
        %v1614 = vpop.permute.xlu0 %1613
        %1615 = vrot.lane.b32.xlu0 %v1610, 127
        %v1616 = vpop.permute.xlu0 %1615
        %v1619 = vadd.f32 %v1587, %v1614
        %v1620 = vadd.f32 %v1588, %v1616
        %s1621 = sld [smem:[#allocation2 + $0x4d]]
        %v1622 = vstv %s1621
        %v1623 = vmul.f32 %v1622, %v1581
        %v1624 = vmul.f32 %v1622, %v1582
        %1627 = vrot.lane.b32.xlu0 %v1623, 127
        %v1628 = vpop.permute.xlu0 %1627
        %1629 = vrot.lane.b32.xlu0 %v1624, 127
        %v1630 = vpop.permute.xlu0 %1629
        %v1633 = vadd.f32 %v1593, %v1628
        %v1634 = vadd.f32 %v1594, %v1630
        %s1635 = sld [smem:[#allocation2 + $0x4e]]
        %v1636 = vstv %s1635
        %v1637 = vmul.f32 %v1636, %v1581
        %v1638 = vmul.f32 %v1636, %v1582
        %1641 = vrot.lane.b32.xlu0 %v1637, 127
        %v1642 = vpop.permute.xlu0 %1641
        %1643 = vrot.lane.b32.xlu0 %v1638, 127
        %v1644 = vpop.permute.xlu0 %1643
        %v1647 = vadd.f32 %v1599, %v1642
        %v1648 = vadd.f32 %v1600, %v1644
        %s1649 = sld [smem:[#allocation2 + $0x4f]]
        %v1650 = vstv %s1649
        %v1651 = vmul.f32 %v1650, %v1581
        %v1652 = vmul.f32 %v1650, %v1582
        %1655 = vrot.lane.b32.xlu0 %v1651, 127
        %v1656 = vpop.permute.xlu0 %1655
        %1657 = vrot.lane.b32.xlu0 %v1652, 127
        %v1658 = vpop.permute.xlu0 %1657
        %v1661 = vadd.f32 %v1605, %v1656
        %v1662 = vadd.f32 %v1606, %v1658
        %s1663 = sld [smem:[#allocation2 + $0x5c]]
        %v1664 = vstv %s1663
        %v1665 = vmul.f32 %v1664, %v1581
        %v1666 = vmul.f32 %v1664, %v1582
        %1669 = vrot.lane.b32.xlu0 %v1665, 126
        %v1670 = vpop.permute.xlu0 %1669
        %1671 = vrot.lane.b32.xlu0 %v1666, 126
        %v1672 = vpop.permute.xlu0 %1671
        %v1675 = vadd.f32 %v1619, %v1670
        %v1676 = vadd.f32 %v1620, %v1672
        %s1677 = sld [smem:[#allocation2 + $0x5d]]
        %v1678 = vstv %s1677
        %v1679 = vmul.f32 %v1678, %v1581
        %v1680 = vmul.f32 %v1678, %v1582
        %1683 = vrot.lane.b32.xlu0 %v1679, 126
        %v1684 = vpop.permute.xlu0 %1683
        %1685 = vrot.lane.b32.xlu0 %v1680, 126
        %v1686 = vpop.permute.xlu0 %1685
        %v1689 = vadd.f32 %v1633, %v1684
        %v1690 = vadd.f32 %v1634, %v1686
        %s1691 = sld [smem:[#allocation2 + $0x5e]]
        %v1692 = vstv %s1691
        %v1693 = vmul.f32 %v1692, %v1581
        %v1694 = vmul.f32 %v1692, %v1582
        %1697 = vrot.lane.b32.xlu0 %v1693, 126
        %v1698 = vpop.permute.xlu0 %1697
        %1699 = vrot.lane.b32.xlu0 %v1694, 126
        %v1700 = vpop.permute.xlu0 %1699
        %v1703 = vadd.f32 %v1647, %v1698
        %v1704 = vadd.f32 %v1648, %v1700
        %s1705 = sld [smem:[#allocation2 + $0x5f]]
        %v1706 = vstv %s1705
        %v1707 = vmul.f32 %v1706, %v1581
        %v1708 = vmul.f32 %v1706, %v1582
        %1711 = vrot.lane.b32.xlu0 %v1707, 126
        %v1712 = vpop.permute.xlu0 %1711
        %1713 = vrot.lane.b32.xlu0 %v1708, 126
        %v1714 = vpop.permute.xlu0 %1713
        %v1717 = vadd.f32 %v1661, %v1712
        %v1718 = vadd.f32 %v1662, %v1714
        %v1719 = vld [vmem:[%s1442 + $0x2] sm:$0xff]
        %v1720 = vld [vmem:[%s1442 + $0xa] sm:$0x7f]
        %s1721 = sld [smem:[#allocation2 + $0x6c]]
        %v1722 = vstv %s1721
        %v1723 = vmul.f32 %v1722, %v1719
        %v1724 = vmul.f32 %v1722, %v1720
        %v1725 = vadd.f32 %v1675, %v1723
        %v1726 = vadd.f32 %v1676, %v1724
        %s1727 = sld [smem:[#allocation2 + $0x6d]]
        %v1728 = vstv %s1727
        %v1729 = vmul.f32 %v1728, %v1719
        %v1730 = vmul.f32 %v1728, %v1720
        %v1731 = vadd.f32 %v1689, %v1729
        %v1732 = vadd.f32 %v1690, %v1730
        %s1733 = sld [smem:[#allocation2 + $0x6e]]
        %v1734 = vstv %s1733
        %v1735 = vmul.f32 %v1734, %v1719
        %v1736 = vmul.f32 %v1734, %v1720
        %v1737 = vadd.f32 %v1703, %v1735
        %v1738 = vadd.f32 %v1704, %v1736
        %s1739 = sld [smem:[#allocation2 + $0x6f]]
        %v1740 = vstv %s1739
        %v1741 = vmul.f32 %v1740, %v1719
        %v1742 = vmul.f32 %v1740, %v1720
        %v1743 = vadd.f32 %v1717, %v1741
        %v1744 = vadd.f32 %v1718, %v1742
        %s1745 = sld [smem:[#allocation2 + $0x7c]]
        %v1746 = vstv %s1745
        %v1747 = vmul.f32 %v1746, %v1719
        %v1748 = vmul.f32 %v1746, %v1720
        %1751 = vrot.lane.b32.xlu0 %v1747, 127
        %v1752 = vpop.permute.xlu0 %1751
        %1753 = vrot.lane.b32.xlu0 %v1748, 127
        %v1754 = vpop.permute.xlu0 %1753
        %v1757 = vadd.f32 %v1725, %v1752
        %v1758 = vadd.f32 %v1726, %v1754
        %s1759 = sld [smem:[#allocation2 + $0x7d]]
        %v1760 = vstv %s1759
        %v1761 = vmul.f32 %v1760, %v1719
        %v1762 = vmul.f32 %v1760, %v1720
        %1765 = vrot.lane.b32.xlu0 %v1761, 127
        %v1766 = vpop.permute.xlu0 %1765
        %1767 = vrot.lane.b32.xlu0 %v1762, 127
        %v1768 = vpop.permute.xlu0 %1767
        %v1771 = vadd.f32 %v1731, %v1766
        %v1772 = vadd.f32 %v1732, %v1768
        %s1773 = sld [smem:[#allocation2 + $0x7e]]
        %v1774 = vstv %s1773
        %v1775 = vmul.f32 %v1774, %v1719
        %v1776 = vmul.f32 %v1774, %v1720
        %1779 = vrot.lane.b32.xlu0 %v1775, 127
        %v1780 = vpop.permute.xlu0 %1779
        %1781 = vrot.lane.b32.xlu0 %v1776, 127
        %v1782 = vpop.permute.xlu0 %1781
        %v1785 = vadd.f32 %v1737, %v1780
        %v1786 = vadd.f32 %v1738, %v1782
        %s1787 = sld [smem:[#allocation2 + $0x7f]]
        %v1788 = vstv %s1787
        %v1789 = vmul.f32 %v1788, %v1719
        %v1790 = vmul.f32 %v1788, %v1720
        %1793 = vrot.lane.b32.xlu0 %v1789, 127
        %v1794 = vpop.permute.xlu0 %1793
        %1795 = vrot.lane.b32.xlu0 %v1790, 127
        %v1796 = vpop.permute.xlu0 %1795
        %v1799 = vadd.f32 %v1743, %v1794
        %v1800 = vadd.f32 %v1744, %v1796
        %s1801 = sld [smem:[#allocation2 + $0x8c]]
        %v1802 = vstv %s1801
        %v1803 = vmul.f32 %v1802, %v1719
        %v1804 = vmul.f32 %v1802, %v1720
        %1807 = vrot.lane.b32.xlu0 %v1803, 126
        %v1808 = vpop.permute.xlu0 %1807
        %1809 = vrot.lane.b32.xlu0 %v1804, 126
        %v1810 = vpop.permute.xlu0 %1809
        %v1813 = vadd.f32 %v1757, %v1808
        %v1814 = vadd.f32 %v1758, %v1810
        %s1815 = sld [smem:[#allocation2 + $0x8d]]
        %v1816 = vstv %s1815
        %v1817 = vmul.f32 %v1816, %v1719
        %v1818 = vmul.f32 %v1816, %v1720
        %1821 = vrot.lane.b32.xlu0 %v1817, 126
        %v1822 = vpop.permute.xlu0 %1821
        %1823 = vrot.lane.b32.xlu0 %v1818, 126
        %v1824 = vpop.permute.xlu0 %1823
        %v1827 = vadd.f32 %v1771, %v1822
        %v1828 = vadd.f32 %v1772, %v1824
        %s1829 = sld [smem:[#allocation2 + $0x8e]]
        %v1830 = vstv %s1829
        %v1831 = vmul.f32 %v1830, %v1719
        %v1832 = vmul.f32 %v1830, %v1720
        %1835 = vrot.lane.b32.xlu0 %v1831, 126
        %v1836 = vpop.permute.xlu0 %1835
        %1837 = vrot.lane.b32.xlu0 %v1832, 126
        %v1838 = vpop.permute.xlu0 %1837
        %v1841 = vadd.f32 %v1785, %v1836
        %v1842 = vadd.f32 %v1786, %v1838
        %s1843 = sld [smem:[#allocation2 + $0x8f]]
        %v1844 = vstv %s1843
        %v1845 = vmul.f32 %v1844, %v1719
        %v1846 = vmul.f32 %v1844, %v1720
        %1849 = vrot.lane.b32.xlu0 %v1845, 126
        %v1850 = vpop.permute.xlu0 %1849
        %1851 = vrot.lane.b32.xlu0 %v1846, 126
        %v1852 = vpop.permute.xlu0 %1851
        %v1855 = vadd.f32 %v1799, %v1850
        %v1856 = vadd.f32 %v1800, %v1852
        %s1857 = sld [smem:[#allocation4]]
        %v1858 = vstv %s1857
        %v1859 = vadd.f32 %v1813, %v1858
        %v1860 = vadd.f32 %v1814, %v1858
        %vm1861 = vcmp.ge.f32.partialorder %v1859, 0.0
        %vm1862 = vcmp.ge.f32.partialorder %v1860, 0.0
        %v1863 = vmul.f32 %v1859, 0.01
        %v1864 = vmul.f32 %v1860, 0.01
        %v1865 = vsel %vm1861, %v1859, %v1863
        %v1866 = vsel %vm1862, %v1860, %v1864
        %vm1867 = vcmask 121856
        %1868 = vst.msk [vmem:[%s197] sm:$0xff] %vm1867, %v1865
        %vm1869 = vcmask 120832
        %1870 = vst.msk [vmem:[%s197 + $0x8] sm:$0x7f] %vm1869, %v1866
        %s1871 = sld [smem:[#allocation4 + $0x1]]
        %v1872 = vstv %s1871
        %v1873 = vadd.f32 %v1827, %v1872
        %v1874 = vadd.f32 %v1828, %v1872
        %vm1875 = vcmp.ge.f32.partialorder %v1873, 0.0
        %vm1876 = vcmp.ge.f32.partialorder %v1874, 0.0
        %v1877 = vmul.f32 %v1873, 0.01
        %v1878 = vmul.f32 %v1874, 0.01
        %v1879 = vsel %vm1875, %v1873, %v1877
        %v1880 = vsel %vm1876, %v1874, %v1878
        %s1881 = scalar_lea.vmem %s197, 16
        %1882 = vst.msk [vmem:[%s1881] sm:$0xff] %vm1867, %v1879
        %1883 = vst.msk [vmem:[%s1881 + $0x8] sm:$0x7f] %vm1869, %v1880
        %s1884 = sld [smem:[#allocation4 + $0x2]]
        %v1885 = vstv %s1884
        %v1886 = vadd.f32 %v1841, %v1885
        %v1887 = vadd.f32 %v1842, %v1885
        %vm1888 = vcmp.ge.f32.partialorder %v1886, 0.0
        %vm1889 = vcmp.ge.f32.partialorder %v1887, 0.0
        %v1890 = vmul.f32 %v1886, 0.01
        %v1891 = vmul.f32 %v1887, 0.01
        %v1892 = vsel %vm1888, %v1886, %v1890
        %v1893 = vsel %vm1889, %v1887, %v1891
        %s1894 = scalar_lea.vmem %s197, 32
        %1895 = vst.msk [vmem:[%s1894] sm:$0xff] %vm1867, %v1892
        %1896 = vst.msk [vmem:[%s1894 + $0x8] sm:$0x7f] %vm1869, %v1893
        %s1897 = sld [smem:[#allocation4 + $0x3]]
        %v1898 = vstv %s1897
        %v1899 = vadd.f32 %v1855, %v1898
        %v1900 = vadd.f32 %v1856, %v1898
        %vm1901 = vcmp.ge.f32.partialorder %v1899, 0.0
        %vm1902 = vcmp.ge.f32.partialorder %v1900, 0.0
        %v1903 = vmul.f32 %v1899, 0.01
        %v1904 = vmul.f32 %v1900, 0.01
        %v1905 = vsel %vm1901, %v1899, %v1903
        %v1906 = vsel %vm1902, %v1900, %v1904
        %s1907 = scalar_lea.vmem %s197, 48
        %1908 = vst.msk [vmem:[%s1907] sm:$0xff] %vm1867, %v1905
        %1909 = vst.msk [vmem:[%s1907 + $0x8] sm:$0x7f] %vm1869, %v1906
        %p1910 = scmp.lt.s32.totalorder %s16, 1
        %s1911 = scalar_select %p1910, %s16, 1
        %s1912 = smul.addr %s1911, 8
        %s1913 = smul.addr %s1912, 8
        %s1914 = scalar_lea.vmem %s3, %s1913
        // Predicated region
        $region41: #{_lambda_.4} parent=31 // pred_check
          %p1915 = pneg %p102
        $region42: #{_lambda_.4} parent=31 // pred_check_branch
          %1917 = sbr.rel (%p1915) target = $region44
        $region43: #{_lambda_.4} parent=31 // pred_region
          _
        $region44: #{_lambda_.4} parent=31 // pred_fallthru
          _
      $region32: #{_lambda_.4} parent=5 // pred_fallthru
        _
      %p1918 = scmp.le.s32.totalorder 2, %s11
      // Predicated region
      $region45: #{_lambda_.4} parent=5 // pred_check
        %p1919 = pneg %p1918
      $region46: #{_lambda_.4} parent=5 // pred_check_branch
        %1921 = sbr.rel (%p1919) target = $region48
      $region47: #{_lambda_.4} parent=5 // pred_region
        %s1922 = ssub.s32 %s11, 2
        // Predicated region
        $region49: #{_lambda_.4} parent=47 // pred_check
          %p1923 = pneg %p108
        $region50: #{_lambda_.4} parent=47 // pred_check_branch
          %1925 = sbr.rel (%p1923) target = $region52
        $region51: #{_lambda_.4} parent=47 // pred_region
          %p1926 = scmp.lt.s32.totalorder %s17, 1
          %s1927 = scalar_select %p1926, %s17, 1
          %s1928 = smul.addr %s1927, 8
          %s1929 = smul.addr %s1928, 8
          %s1930 = scalar_lea.vmem %s3, %s1929
        $region52: #{_lambda_.4} parent=47 // pred_fallthru
          _
      $region48: #{_lambda_.4} parent=5 // pred_fallthru
        _
    $region6: #{_lambda_.4} parent=1 // loop_footer
      %s15 = sadd.s32 1, %s11
    $region7: #{_lambda_.4} parent=1 // loop_footer_branch
      %10 = sbr.rel target = $region3
    $region8: #{_lambda_.4} parent=1 // loop_exit
      _
    %1931 = vsyncpa [#allocation3], 1
    %s1932 = scalar_lea.sflag [#allocation3], 1
    %1933 = vsyncpa %s1932, 1
    %1934 = vsyncpa [#allocation5], 1

// kernel: _lambda_.5
$region0: #{_lambda_.5}
  #allocation0 [shape = 'u32[]', space=smem, size = 0x4, offset = 0x4, fixed_abs, tag = 'smem constant byte address 0x4 - core index']
  #allocation1 [shape = 'u32[144,128]{1,0:T(1,128)}', space=vmem, size = 0x12000, scoped, tag = 'internal scratch']
  %s0 = inlined_call_operand.vmem [shape: f32[2,4,17,17], index: 0, kind: input, shape index: {}]
  %s1 = inlined_call_operand.vmem [shape: f32[144], index: 1, kind: input, shape index: {}]
  %s2 = inlined_call_operand.vmem [shape: f32[4], index: 2, kind: input, shape index: {}]
  %s3 = inlined_call_operand.vmem [shape: f32[2,4,15,15], index: 3, kind: output, shape index: {}]
  %s4 = sld [smem:[#allocation0]]
  $region53: #{_lambda_.5} parent=0
    _
  %s6 = ssub.s32 1, %s4
  %s7 = scalar_select 0, %s6, %s4
  $region1: #{_lambda_.5} parent=0
    #allocation2 [shape = 'u8[1024]{0}', space=smem, size = 0x400, scoped, tag = 'input window, operand 1, single buffered']
    #allocation3 [shape = 's32[2]{0}', space=sflag, size = 0x8, scoped, tag = 'scoped memory for _lambda_.5']
    #allocation4 [shape = 'u8[512]{0}', space=smem, size = 0x200, scoped, tag = 'input window, operand 2, single buffered']
    #allocation5 [shape = 's32[1]{0}', space=sflag, size = 0x4, scoped, tag = 'scoped memory for _lambda_.5']
    %8 = vsyncpa [#allocation3], 0
    %9 = vsyncpa [#allocation5], 0
    loop: start=0, step=1, limit=4
    $region2: #{_lambda_.5} parent=1 // loop_pre_header
      _
    $region3: #{_lambda_.5} parent=1 // loop_header
      %s11 = sphi 0, %s15
      %p12 = scmp.ge.s32.totalorder %s11, 4
      %s21 = sphi 0, %s23
      %s24 = sphi 0, %s21
      %s25 = sphi 0, %s24
      %s41 = sphi 0, %s25
      %s45 = sphi 0, %s45
      %s47 = sphi 0, %s45
      %s48 = sphi 0, %s47
      %s62 = sphi 0, %s48
      %s66 = sphi 0, %s66
      %s68 = sphi 0, %s66
      %s69 = sphi 0, %s68
      %s83 = sphi 0, %s69
      %s89 = sphi 0, %s91
      %s92 = sphi 0, %s89
      %s93 = sphi 0, %s92
      %s109 = sphi 0, %s93
    $region4: #{_lambda_.5} parent=1 // loop_header_branch
      %14 = sbr.rel (%p12) target = $region8
    $region5: #{_lambda_.5} parent=1 // loop_body
      %s16 = ssub.s32 %s11, 1
      %s17 = ssub.s32 %s11, 2
      %s18 = sadd.s32 %s11, 1
      %s19 = ssub.s32 %s11, %s18
      %p20 = scmp.eq.s32.totalorder %s19, 0
      %s22 = sadd.s32 %s21, 1
      %s23 = scalar_select %p20, %s21, %s22
      %p26 = pneg %p20
      %p27 = scmp.eq.s32.totalorder %s11, 1
      %p28 = por %p26, %p27
      %p29 = scmp.ne.s32.totalorder %s21, %s24
      %p30 = scmp.eq.s32.totalorder %s11, 0
      %p31 = por %p29, %p30
      %p32 = scmp.ne.s32.totalorder %s21, %s24
      %p33 = scmp.eq.s32.totalorder %s16, 1
      %p34 = por %p32, %p33
      %p35 = scmp.ne.s32.totalorder %s24, %s25
      %p36 = scmp.eq.s32.totalorder %s16, 0
      %p37 = por %p35, %p36
      %p38 = scmp.ne.s32.totalorder %s24, %s25
      %p39 = scmp.eq.s32.totalorder %s17, 1
      %p40 = por %p38, %p39
      %p42 = scmp.ne.s32.totalorder %s25, %s41
      %p43 = scmp.eq.s32.totalorder %s17, 0
      %p44 = por %p42, %p43
      %s46 = sadd.s32 %s45, 1
      %p49 = scmp.eq.s32.totalorder %s11, 1
      %p50 = scmp.ne.s32.totalorder %s45, %s47
      %p51 = scmp.eq.s32.totalorder %s11, 0
      %p52 = por %p50, %p51
      %p53 = scmp.ne.s32.totalorder %s45, %s47
      %p54 = scmp.eq.s32.totalorder %s16, 1
      %p55 = por %p53, %p54
      %p56 = scmp.ne.s32.totalorder %s47, %s48
      %p57 = scmp.eq.s32.totalorder %s16, 0
      %p58 = por %p56, %p57
      %p59 = scmp.ne.s32.totalorder %s47, %s48
      %p60 = scmp.eq.s32.totalorder %s17, 1
      %p61 = por %p59, %p60
      %p63 = scmp.ne.s32.totalorder %s48, %s62
      %p64 = scmp.eq.s32.totalorder %s17, 0
      %p65 = por %p63, %p64
      %s67 = sadd.s32 %s66, 1
      %p70 = scmp.eq.s32.totalorder %s11, 1
      %p71 = scmp.ne.s32.totalorder %s66, %s68
      %p72 = scmp.eq.s32.totalorder %s11, 0
      %p73 = por %p71, %p72
      %p74 = scmp.ne.s32.totalorder %s66, %s68
      %p75 = scmp.eq.s32.totalorder %s16, 1
      %p76 = por %p74, %p75
      %p77 = scmp.ne.s32.totalorder %s68, %s69
      %p78 = scmp.eq.s32.totalorder %s16, 0
      %p79 = por %p77, %p78
      %p80 = scmp.ne.s32.totalorder %s68, %s69
      %p81 = scmp.eq.s32.totalorder %s17, 1
      %p82 = por %p80, %p81
      %p84 = scmp.ne.s32.totalorder %s69, %s83
      %p85 = scmp.eq.s32.totalorder %s17, 0
      %p86 = por %p84, %p85
      %s87 = ssub.s32 %s11, %s18
      %p88 = scmp.eq.s32.totalorder %s87, 0
      %s90 = sadd.s32 %s89, 1
      %s91 = scalar_select %p88, %s89, %s90
      %p94 = pneg %p88
      %p95 = scmp.eq.s32.totalorder %s11, 1
      %p96 = por %p94, %p95
      %p97 = scmp.ne.s32.totalorder %s89, %s92
      %p98 = scmp.eq.s32.totalorder %s11, 0
      %p99 = por %p97, %p98
      %p100 = scmp.ne.s32.totalorder %s89, %s92
      %p101 = scmp.eq.s32.totalorder %s16, 1
      %p102 = por %p100, %p101
      %p103 = scmp.ne.s32.totalorder %s92, %s93
      %p104 = scmp.eq.s32.totalorder %s16, 0
      %p105 = por %p103, %p104
      %p106 = scmp.ne.s32.totalorder %s92, %s93
      %p107 = scmp.eq.s32.totalorder %s17, 1
      %p108 = por %p106, %p107
      %p110 = scmp.ne.s32.totalorder %s93, %s109
      %p111 = scmp.eq.s32.totalorder %s17, 0
      %p112 = por %p110, %p111
      %p113 = scmp.le.s32.totalorder 1, %s11
      %p114 = scmp.lt.s32.totalorder %s11, 3
      %p115 = pnand %p113, %p114
      %p116 = pneg %p115
      // Predicated region
      $region9: #{_lambda_.5} parent=5 // pred_check
        _
      $region10: #{_lambda_.5} parent=5 // pred_check_branch
        %118 = sbr.rel (%p115) target = $region12
      $region11: #{_lambda_.5} parent=5 // pred_region
        %s119 = ssub.s32 %s11, 1
        // Predicated region
        $region13: #{_lambda_.5} parent=11 // pred_check
          %p120 = pneg %p58
        $region14: #{_lambda_.5} parent=11 // pred_check_branch
          %122 = sbr.rel (%p120) target = $region16
        $region15: #{_lambda_.5} parent=11 // pred_region
          %s124 = ssub.s32 32, 32
          %125 = vsyncadd [#allocation3], %s124
          %s127 = sshll.u32 %s1, 4
          %s128 = int_to_ptr.vmem [resolvable:$true] %s127
          %130 = dma.vmem_to_smem %s128, 32, [#allocation2], [#allocation3]
        $region16: #{_lambda_.5} parent=11 // pred_fallthru
          _
        // Predicated region
        $region17: #{_lambda_.5} parent=11 // pred_check
          %p131 = pneg %p79
        $region18: #{_lambda_.5} parent=11 // pred_check_branch
          %133 = sbr.rel (%p131) target = $region20
        $region19: #{_lambda_.5} parent=11 // pred_region
          %s135 = ssub.s32 16, 16
          %136 = vsyncadd [#allocation5], %s135
          %s138 = sshll.u32 %s2, 4
          %s139 = int_to_ptr.vmem [resolvable:$true] %s138
          %141 = dma.vmem_to_smem %s139, 16, [#allocation4], [#allocation5]
        $region20: #{_lambda_.5} parent=11 // pred_fallthru
          _
      $region12: #{_lambda_.5} parent=5 // pred_fallthru
        _
      %p142 = scmp.lt.s32.totalorder %s11, 2
      // Predicated region
      $region21: #{_lambda_.5} parent=5 // pred_check
        %p143 = pneg %p142
      $region22: #{_lambda_.5} parent=5 // pred_check_branch
        %145 = sbr.rel (%p143) target = $region24
      $region23: #{_lambda_.5} parent=5 // pred_region
        // Predicated region
        $region25: #{_lambda_.5} parent=23 // pred_check
          %p146 = pneg %p31
        $region26: #{_lambda_.5} parent=23 // pred_check_branch
          %148 = sbr.rel (%p146) target = $region28
        $region27: #{_lambda_.5} parent=23 // pred_region
          %p149 = scmp.lt.s32.totalorder %s11, 1
          %s150 = scalar_select %p149, %s11, 1
          %s151 = smul.addr %s150, 12
          %s152 = smul.addr %s151, 8
          %s153 = scalar_lea.vmem %s0, %s152
        $region28: #{_lambda_.5} parent=23 // pred_fallthru
          _
      $region24: #{_lambda_.5} parent=5 // pred_fallthru
        _
      %p154 = scmp.le.s32.totalorder 1, %s11
      %p155 = scmp.lt.s32.totalorder %s11, 3
      %p156 = pnand %p154, %p155
      %p157 = pneg %p156
      // Predicated region
      $region29: #{_lambda_.5} parent=5 // pred_check
        _
      $region30: #{_lambda_.5} parent=5 // pred_check_branch
        %159 = sbr.rel (%p156) target = $region32
      $region31: #{_lambda_.5} parent=5 // pred_region
        %s160 = ssub.s32 %s11, 1
        // Predicated region
        $region33: #{_lambda_.5} parent=31 // pred_check
          %p161 = pneg %p58
        $region34: #{_lambda_.5} parent=31 // pred_check_branch
          %163 = sbr.rel (%p161) target = $region36
        $region35: #{_lambda_.5} parent=31 // pred_region
          %164 = dma.done [#allocation3], 32
        $region36: #{_lambda_.5} parent=31 // pred_fallthru
          _
        // Predicated region
        $region37: #{_lambda_.5} parent=31 // pred_check
          %p165 = pneg %p79
        $region38: #{_lambda_.5} parent=31 // pred_check_branch
          %167 = sbr.rel (%p165) target = $region40
        $region39: #{_lambda_.5} parent=31 // pred_region
          %168 = dma.done [#allocation5], 16
        $region40: #{_lambda_.5} parent=31 // pred_fallthru
          _
        %169 = sfence
        %p170 = scmp.lt.s32.totalorder %s16, 1
        %s171 = scalar_select %p170, %s16, 1
        %s172 = smul.addr %s171, 12
        %s173 = smul.addr %s172, 8
        %s174 = scalar_lea.vmem %s0, %s173
        %p175 = pneg %p37
        %p176 = pneg %p34
        %p177 = pneg %p58
        %p178 = pneg %p55
        %p179 = pneg %p79
        %p180 = pneg %p76
        %p181 = pneg %p105
        %p182 = pneg %p102
        %p183 = scmp.lt.s32.totalorder %s16, 1
        %s184 = scalar_select %p183, %s16, 1
        %s185 = smul.addr %s184, 8
        %s186 = smul.addr %s185, 8
        %s187 = scalar_lea.vmem %s3, %s186
        %p188 = scmp.lt.s32.totalorder %s16, 1
        %s189 = scalar_select %p188, %s16, 1
        %s190 = smul.addr %s189, 12
        %s191 = smul.addr %s190, 8
        %s192 = scalar_lea.vmem %s0, %s191
        %p193 = scmp.lt.s32.totalorder %s16, 1
        %s194 = scalar_select %p193, %s16, 1
        %s195 = smul.addr %s194, 8
        %s196 = smul.addr %s195, 8
        %s197 = scalar_lea.vmem %s3, %s196
        %v198 = vld [vmem:[%s192] sm:$0xff]
        %v199 = vld [vmem:[%s192 + $0x8] sm:$0x7f]
        %s200 = sld [smem:[#allocation2]]
        %v201 = vstv %s200
        %v202 = vmul.f32 %v201, %v198
        %v203 = vmul.f32 %v201, %v199
        %v204 = vadd.f32 %v202, 0.0
        %v205 = vadd.f32 %v203, 0.0
        %s206 = sld [smem:[#allocation2 + $0x1]]
        %v207 = vstv %s206
        %v208 = vmul.f32 %v207, %v198
        %v209 = vmul.f32 %v207, %v199
        %v210 = vadd.f32 %v208, 0.0
        %v211 = vadd.f32 %v209, 0.0
        %s212 = sld [smem:[#allocation2 + $0x2]]
        %v213 = vstv %s212
        %v214 = vmul.f32 %v213, %v198
        %v215 = vmul.f32 %v213, %v199
        %v216 = vadd.f32 %v214, 0.0
        %v217 = vadd.f32 %v215, 0.0
        %s218 = sld [smem:[#allocation2 + $0x3]]
        %v219 = vstv %s218
        %v220 = vmul.f32 %v219, %v198
        %v221 = vmul.f32 %v219, %v199
        %v222 = vadd.f32 %v220, 0.0
        %v223 = vadd.f32 %v221, 0.0
        %s224 = sld [smem:[#allocation2 + $0x10]]
        %v225 = vstv %s224
        %v226 = vmul.f32 %v225, %v198
        %v227 = vmul.f32 %v225, %v199
        %230 = vrot.lane.b32.xlu0 %v226, 127
        %v231 = vpop.permute.xlu0 %230
        %232 = vrot.lane.b32.xlu0 %v227, 127
        %v233 = vpop.permute.xlu0 %232
        %v236 = vadd.f32 %v204, %v231
        %v237 = vadd.f32 %v205, %v233
        %s238 = sld [smem:[#allocation2 + $0x11]]
        %v239 = vstv %s238
        %v240 = vmul.f32 %v239, %v198
        %v241 = vmul.f32 %v239, %v199
        %244 = vrot.lane.b32.xlu0 %v240, 127
        %v245 = vpop.permute.xlu0 %244
        %246 = vrot.lane.b32.xlu0 %v241, 127
        %v247 = vpop.permute.xlu0 %246
        %v250 = vadd.f32 %v210, %v245
        %v251 = vadd.f32 %v211, %v247
        %s252 = sld [smem:[#allocation2 + $0x12]]
        %v253 = vstv %s252
        %v254 = vmul.f32 %v253, %v198
        %v255 = vmul.f32 %v253, %v199
        %258 = vrot.lane.b32.xlu0 %v254, 127
        %v259 = vpop.permute.xlu0 %258
        %260 = vrot.lane.b32.xlu0 %v255, 127
        %v261 = vpop.permute.xlu0 %260
        %v264 = vadd.f32 %v216, %v259
        %v265 = vadd.f32 %v217, %v261
        %s266 = sld [smem:[#allocation2 + $0x13]]
        %v267 = vstv %s266
        %v268 = vmul.f32 %v267, %v198
        %v269 = vmul.f32 %v267, %v199
        %272 = vrot.lane.b32.xlu0 %v268, 127
        %v273 = vpop.permute.xlu0 %272
        %274 = vrot.lane.b32.xlu0 %v269, 127
        %v275 = vpop.permute.xlu0 %274
        %v278 = vadd.f32 %v222, %v273
        %v279 = vadd.f32 %v223, %v275
        %s280 = sld [smem:[#allocation2 + $0x20]]
        %v281 = vstv %s280
        %v282 = vmul.f32 %v281, %v198
        %v283 = vmul.f32 %v281, %v199
        %286 = vrot.lane.b32.xlu0 %v282, 126
        %v287 = vpop.permute.xlu0 %286
        %288 = vrot.lane.b32.xlu0 %v283, 126
        %v289 = vpop.permute.xlu0 %288
        %v292 = vadd.f32 %v236, %v287
        %v293 = vadd.f32 %v237, %v289
        %s294 = sld [smem:[#allocation2 + $0x21]]
        %v295 = vstv %s294
        %v296 = vmul.f32 %v295, %v198
        %v297 = vmul.f32 %v295, %v199
        %300 = vrot.lane.b32.xlu0 %v296, 126
        %v301 = vpop.permute.xlu0 %300
        %302 = vrot.lane.b32.xlu0 %v297, 126
        %v303 = vpop.permute.xlu0 %302
        %v306 = vadd.f32 %v250, %v301
        %v307 = vadd.f32 %v251, %v303
        %s308 = sld [smem:[#allocation2 + $0x22]]
        %v309 = vstv %s308
        %v310 = vmul.f32 %v309, %v198
        %v311 = vmul.f32 %v309, %v199
        %314 = vrot.lane.b32.xlu0 %v310, 126
        %v315 = vpop.permute.xlu0 %314
        %316 = vrot.lane.b32.xlu0 %v311, 126
        %v317 = vpop.permute.xlu0 %316
        %v320 = vadd.f32 %v264, %v315
        %v321 = vadd.f32 %v265, %v317
        %s322 = sld [smem:[#allocation2 + $0x23]]
        %v323 = vstv %s322
        %v324 = vmul.f32 %v323, %v198
        %v325 = vmul.f32 %v323, %v199
        %328 = vrot.lane.b32.xlu0 %v324, 126
        %v329 = vpop.permute.xlu0 %328
        %330 = vrot.lane.b32.xlu0 %v325, 126
        %v331 = vpop.permute.xlu0 %330
        %v334 = vadd.f32 %v278, %v329
        %v335 = vadd.f32 %v279, %v331
        %v336 = vld [vmem:[%s192 + $0x1] sm:$0xff]
        %v337 = vld [vmem:[%s192 + $0x9] sm:$0x7f]
        %s338 = sld [smem:[#allocation2 + $0x30]]
        %v339 = vstv %s338
        %v340 = vmul.f32 %v339, %v336
        %v341 = vmul.f32 %v339, %v337
        %v342 = vadd.f32 %v292, %v340
        %v343 = vadd.f32 %v293, %v341
        %s344 = sld [smem:[#allocation2 + $0x31]]
        %v345 = vstv %s344
        %v346 = vmul.f32 %v345, %v336
        %v347 = vmul.f32 %v345, %v337
        %v348 = vadd.f32 %v306, %v346
        %v349 = vadd.f32 %v307, %v347
        %s350 = sld [smem:[#allocation2 + $0x32]]
        %v351 = vstv %s350
        %v352 = vmul.f32 %v351, %v336
        %v353 = vmul.f32 %v351, %v337
        %v354 = vadd.f32 %v320, %v352
        %v355 = vadd.f32 %v321, %v353
        %s356 = sld [smem:[#allocation2 + $0x33]]
        %v357 = vstv %s356
        %v358 = vmul.f32 %v357, %v336
        %v359 = vmul.f32 %v357, %v337
        %v360 = vadd.f32 %v334, %v358
        %v361 = vadd.f32 %v335, %v359
        %s362 = sld [smem:[#allocation2 + $0x40]]
        %v363 = vstv %s362
        %v364 = vmul.f32 %v363, %v336
        %v365 = vmul.f32 %v363, %v337
        %368 = vrot.lane.b32.xlu0 %v364, 127
        %v369 = vpop.permute.xlu0 %368
        %370 = vrot.lane.b32.xlu0 %v365, 127
        %v371 = vpop.permute.xlu0 %370
        %v374 = vadd.f32 %v342, %v369
        %v375 = vadd.f32 %v343, %v371
        %s376 = sld [smem:[#allocation2 + $0x41]]
        %v377 = vstv %s376
        %v378 = vmul.f32 %v377, %v336
        %v379 = vmul.f32 %v377, %v337
        %382 = vrot.lane.b32.xlu0 %v378, 127
        %v383 = vpop.permute.xlu0 %382
        %384 = vrot.lane.b32.xlu0 %v379, 127
        %v385 = vpop.permute.xlu0 %384
        %v388 = vadd.f32 %v348, %v383
        %v389 = vadd.f32 %v349, %v385
        %s390 = sld [smem:[#allocation2 + $0x42]]
        %v391 = vstv %s390
        %v392 = vmul.f32 %v391, %v336
        %v393 = vmul.f32 %v391, %v337
        %396 = vrot.lane.b32.xlu0 %v392, 127
        %v397 = vpop.permute.xlu0 %396
        %398 = vrot.lane.b32.xlu0 %v393, 127
        %v399 = vpop.permute.xlu0 %398
        %v402 = vadd.f32 %v354, %v397
        %v403 = vadd.f32 %v355, %v399
        %s404 = sld [smem:[#allocation2 + $0x43]]
        %v405 = vstv %s404
        %v406 = vmul.f32 %v405, %v336
        %v407 = vmul.f32 %v405, %v337
        %410 = vrot.lane.b32.xlu0 %v406, 127
        %v411 = vpop.permute.xlu0 %410
        %412 = vrot.lane.b32.xlu0 %v407, 127
        %v413 = vpop.permute.xlu0 %412
        %v416 = vadd.f32 %v360, %v411
        %v417 = vadd.f32 %v361, %v413
        %s418 = sld [smem:[#allocation2 + $0x50]]
        %v419 = vstv %s418
        %v420 = vmul.f32 %v419, %v336
        %v421 = vmul.f32 %v419, %v337
        %424 = vrot.lane.b32.xlu0 %v420, 126
        %v425 = vpop.permute.xlu0 %424
        %426 = vrot.lane.b32.xlu0 %v421, 126
        %v427 = vpop.permute.xlu0 %426
        %v430 = vadd.f32 %v374, %v425
        %v431 = vadd.f32 %v375, %v427
        %s432 = sld [smem:[#allocation2 + $0x51]]
        %v433 = vstv %s432
        %v434 = vmul.f32 %v433, %v336
        %v435 = vmul.f32 %v433, %v337
        %438 = vrot.lane.b32.xlu0 %v434, 126
        %v439 = vpop.permute.xlu0 %438
        %440 = vrot.lane.b32.xlu0 %v435, 126
        %v441 = vpop.permute.xlu0 %440
        %v444 = vadd.f32 %v388, %v439
        %v445 = vadd.f32 %v389, %v441
        %s446 = sld [smem:[#allocation2 + $0x52]]
        %v447 = vstv %s446
        %v448 = vmul.f32 %v447, %v336
        %v449 = vmul.f32 %v447, %v337
        %452 = vrot.lane.b32.xlu0 %v448, 126
        %v453 = vpop.permute.xlu0 %452
        %454 = vrot.lane.b32.xlu0 %v449, 126
        %v455 = vpop.permute.xlu0 %454
        %v458 = vadd.f32 %v402, %v453
        %v459 = vadd.f32 %v403, %v455
        %s460 = sld [smem:[#allocation2 + $0x53]]
        %v461 = vstv %s460
        %v462 = vmul.f32 %v461, %v336
        %v463 = vmul.f32 %v461, %v337
        %466 = vrot.lane.b32.xlu0 %v462, 126
        %v467 = vpop.permute.xlu0 %466
        %468 = vrot.lane.b32.xlu0 %v463, 126
        %v469 = vpop.permute.xlu0 %468
        %v472 = vadd.f32 %v416, %v467
        %v473 = vadd.f32 %v417, %v469
        %v474 = vld [vmem:[%s192 + $0x2] sm:$0xff]
        %v475 = vld [vmem:[%s192 + $0xa] sm:$0x7f]
        %s476 = sld [smem:[#allocation2 + $0x60]]
        %v477 = vstv %s476
        %v478 = vmul.f32 %v477, %v474
        %v479 = vmul.f32 %v477, %v475
        %v480 = vadd.f32 %v430, %v478
        %v481 = vadd.f32 %v431, %v479
        %s482 = sld [smem:[#allocation2 + $0x61]]
        %v483 = vstv %s482
        %v484 = vmul.f32 %v483, %v474
        %v485 = vmul.f32 %v483, %v475
        %v486 = vadd.f32 %v444, %v484
        %v487 = vadd.f32 %v445, %v485
        %s488 = sld [smem:[#allocation2 + $0x62]]
        %v489 = vstv %s488
        %v490 = vmul.f32 %v489, %v474
        %v491 = vmul.f32 %v489, %v475
        %v492 = vadd.f32 %v458, %v490
        %v493 = vadd.f32 %v459, %v491
        %s494 = sld [smem:[#allocation2 + $0x63]]
        %v495 = vstv %s494
        %v496 = vmul.f32 %v495, %v474
        %v497 = vmul.f32 %v495, %v475
        %v498 = vadd.f32 %v472, %v496
        %v499 = vadd.f32 %v473, %v497
        %s500 = sld [smem:[#allocation2 + $0x70]]
        %v501 = vstv %s500
        %v502 = vmul.f32 %v501, %v474
        %v503 = vmul.f32 %v501, %v475
        %506 = vrot.lane.b32.xlu0 %v502, 127
        %v507 = vpop.permute.xlu0 %506
        %508 = vrot.lane.b32.xlu0 %v503, 127
        %v509 = vpop.permute.xlu0 %508
        %v512 = vadd.f32 %v480, %v507
        %v513 = vadd.f32 %v481, %v509
        %s514 = sld [smem:[#allocation2 + $0x71]]
        %v515 = vstv %s514
        %v516 = vmul.f32 %v515, %v474
        %v517 = vmul.f32 %v515, %v475
        %520 = vrot.lane.b32.xlu0 %v516, 127
        %v521 = vpop.permute.xlu0 %520
        %522 = vrot.lane.b32.xlu0 %v517, 127
        %v523 = vpop.permute.xlu0 %522
        %v526 = vadd.f32 %v486, %v521
        %v527 = vadd.f32 %v487, %v523
        %s528 = sld [smem:[#allocation2 + $0x72]]
        %v529 = vstv %s528
        %v530 = vmul.f32 %v529, %v474
        %v531 = vmul.f32 %v529, %v475
        %534 = vrot.lane.b32.xlu0 %v530, 127
        %v535 = vpop.permute.xlu0 %534
        %536 = vrot.lane.b32.xlu0 %v531, 127
        %v537 = vpop.permute.xlu0 %536
        %v540 = vadd.f32 %v492, %v535
        %v541 = vadd.f32 %v493, %v537
        %s542 = sld [smem:[#allocation2 + $0x73]]
        %v543 = vstv %s542
        %v544 = vmul.f32 %v543, %v474
        %v545 = vmul.f32 %v543, %v475
        %548 = vrot.lane.b32.xlu0 %v544, 127
        %v549 = vpop.permute.xlu0 %548
        %550 = vrot.lane.b32.xlu0 %v545, 127
        %v551 = vpop.permute.xlu0 %550
        %v554 = vadd.f32 %v498, %v549
        %v555 = vadd.f32 %v499, %v551
        %s556 = sld [smem:[#allocation2 + $0x80]]
        %v557 = vstv %s556
        %v558 = vmul.f32 %v557, %v474
        %v559 = vmul.f32 %v557, %v475
        %562 = vrot.lane.b32.xlu0 %v558, 126
        %v563 = vpop.permute.xlu0 %562
        %564 = vrot.lane.b32.xlu0 %v559, 126
        %v565 = vpop.permute.xlu0 %564
        %v568 = vadd.f32 %v512, %v563
        %v569 = vadd.f32 %v513, %v565
        %s570 = sld [smem:[#allocation2 + $0x81]]
        %v571 = vstv %s570
        %v572 = vmul.f32 %v571, %v474
        %v573 = vmul.f32 %v571, %v475
        %576 = vrot.lane.b32.xlu0 %v572, 126
        %v577 = vpop.permute.xlu0 %576
        %578 = vrot.lane.b32.xlu0 %v573, 126
        %v579 = vpop.permute.xlu0 %578
        %v582 = vadd.f32 %v526, %v577
        %v583 = vadd.f32 %v527, %v579
        %s584 = sld [smem:[#allocation2 + $0x82]]
        %v585 = vstv %s584
        %v586 = vmul.f32 %v585, %v474
        %v587 = vmul.f32 %v585, %v475
        %590 = vrot.lane.b32.xlu0 %v586, 126
        %v591 = vpop.permute.xlu0 %590
        %592 = vrot.lane.b32.xlu0 %v587, 126
        %v593 = vpop.permute.xlu0 %592
        %v596 = vadd.f32 %v540, %v591
        %v597 = vadd.f32 %v541, %v593
        %s598 = sld [smem:[#allocation2 + $0x83]]
        %v599 = vstv %s598
        %v600 = vmul.f32 %v599, %v474
        %v601 = vmul.f32 %v599, %v475
        %604 = vrot.lane.b32.xlu0 %v600, 126
        %v605 = vpop.permute.xlu0 %604
        %606 = vrot.lane.b32.xlu0 %v601, 126
        %v607 = vpop.permute.xlu0 %606
        %v610 = vadd.f32 %v554, %v605
        %v611 = vadd.f32 %v555, %v607
        %s612 = scalar_lea.vmem %s192, 24
        %v613 = vld [vmem:[%s612] sm:$0xff]
        %v614 = vld [vmem:[%s612 + $0x8] sm:$0x7f]
        %s615 = sld [smem:[#allocation2 + $0x4]]
        %v616 = vstv %s615
        %v617 = vmul.f32 %v616, %v613
        %v618 = vmul.f32 %v616, %v614
        %v619 = vadd.f32 %v568, %v617
        %v620 = vadd.f32 %v569, %v618
        %s621 = sld [smem:[#allocation2 + $0x5]]
        %v622 = vstv %s621
        %v623 = vmul.f32 %v622, %v613
        %v624 = vmul.f32 %v622, %v614
        %v625 = vadd.f32 %v582, %v623
        %v626 = vadd.f32 %v583, %v624
        %s627 = sld [smem:[#allocation2 + $0x6]]
        %v628 = vstv %s627
        %v629 = vmul.f32 %v628, %v613
        %v630 = vmul.f32 %v628, %v614
        %v631 = vadd.f32 %v596, %v629
        %v632 = vadd.f32 %v597, %v630
        %s633 = sld [smem:[#allocation2 + $0x7]]
        %v634 = vstv %s633
        %v635 = vmul.f32 %v634, %v613
        %v636 = vmul.f32 %v634, %v614
        %v637 = vadd.f32 %v610, %v635
        %v638 = vadd.f32 %v611, %v636
        %s639 = sld [smem:[#allocation2 + $0x14]]
        %v640 = vstv %s639
        %v641 = vmul.f32 %v640, %v613
        %v642 = vmul.f32 %v640, %v614
        %645 = vrot.lane.b32.xlu0 %v641, 127
        %v646 = vpop.permute.xlu0 %645
        %647 = vrot.lane.b32.xlu0 %v642, 127
        %v648 = vpop.permute.xlu0 %647
        %v651 = vadd.f32 %v619, %v646
        %v652 = vadd.f32 %v620, %v648
        %s653 = sld [smem:[#allocation2 + $0x15]]
        %v654 = vstv %s653
        %v655 = vmul.f32 %v654, %v613
        %v656 = vmul.f32 %v654, %v614
        %659 = vrot.lane.b32.xlu0 %v655, 127
        %v660 = vpop.permute.xlu0 %659
        %661 = vrot.lane.b32.xlu0 %v656, 127
        %v662 = vpop.permute.xlu0 %661
        %v665 = vadd.f32 %v625, %v660
        %v666 = vadd.f32 %v626, %v662
        %s667 = sld [smem:[#allocation2 + $0x16]]
        %v668 = vstv %s667
        %v669 = vmul.f32 %v668, %v613
        %v670 = vmul.f32 %v668, %v614
        %673 = vrot.lane.b32.xlu0 %v669, 127
        %v674 = vpop.permute.xlu0 %673
        %675 = vrot.lane.b32.xlu0 %v670, 127
        %v676 = vpop.permute.xlu0 %675
        %v679 = vadd.f32 %v631, %v674
        %v680 = vadd.f32 %v632, %v676
        %s681 = sld [smem:[#allocation2 + $0x17]]
        %v682 = vstv %s681
        %v683 = vmul.f32 %v682, %v613
        %v684 = vmul.f32 %v682, %v614
        %687 = vrot.lane.b32.xlu0 %v683, 127
        %v688 = vpop.permute.xlu0 %687
        %689 = vrot.lane.b32.xlu0 %v684, 127
        %v690 = vpop.permute.xlu0 %689
        %v693 = vadd.f32 %v637, %v688
        %v694 = vadd.f32 %v638, %v690
        %s695 = sld [smem:[#allocation2 + $0x24]]
        %v696 = vstv %s695
        %v697 = vmul.f32 %v696, %v613
        %v698 = vmul.f32 %v696, %v614
        %701 = vrot.lane.b32.xlu0 %v697, 126
        %v702 = vpop.permute.xlu0 %701
        %703 = vrot.lane.b32.xlu0 %v698, 126
        %v704 = vpop.permute.xlu0 %703
        %v707 = vadd.f32 %v651, %v702
        %v708 = vadd.f32 %v652, %v704
        %s709 = sld [smem:[#allocation2 + $0x25]]
        %v710 = vstv %s709
        %v711 = vmul.f32 %v710, %v613
        %v712 = vmul.f32 %v710, %v614
        %715 = vrot.lane.b32.xlu0 %v711, 126
        %v716 = vpop.permute.xlu0 %715
        %717 = vrot.lane.b32.xlu0 %v712, 126
        %v718 = vpop.permute.xlu0 %717
        %v721 = vadd.f32 %v665, %v716
        %v722 = vadd.f32 %v666, %v718
        %s723 = sld [smem:[#allocation2 + $0x26]]
        %v724 = vstv %s723
        %v725 = vmul.f32 %v724, %v613
        %v726 = vmul.f32 %v724, %v614
        %729 = vrot.lane.b32.xlu0 %v725, 126
        %v730 = vpop.permute.xlu0 %729
        %731 = vrot.lane.b32.xlu0 %v726, 126
        %v732 = vpop.permute.xlu0 %731
        %v735 = vadd.f32 %v679, %v730
        %v736 = vadd.f32 %v680, %v732
        %s737 = sld [smem:[#allocation2 + $0x27]]
        %v738 = vstv %s737
        %v739 = vmul.f32 %v738, %v613
        %v740 = vmul.f32 %v738, %v614
        %743 = vrot.lane.b32.xlu0 %v739, 126
        %v744 = vpop.permute.xlu0 %743
        %745 = vrot.lane.b32.xlu0 %v740, 126
        %v746 = vpop.permute.xlu0 %745
        %v749 = vadd.f32 %v693, %v744
        %v750 = vadd.f32 %v694, %v746
        %v751 = vld [vmem:[%s612 + $0x1] sm:$0xff]
        %v752 = vld [vmem:[%s612 + $0x9] sm:$0x7f]
        %s753 = sld [smem:[#allocation2 + $0x34]]
        %v754 = vstv %s753
        %v755 = vmul.f32 %v754, %v751
        %v756 = vmul.f32 %v754, %v752
        %v757 = vadd.f32 %v707, %v755
        %v758 = vadd.f32 %v708, %v756
        %s759 = sld [smem:[#allocation2 + $0x35]]
        %v760 = vstv %s759
        %v761 = vmul.f32 %v760, %v751
        %v762 = vmul.f32 %v760, %v752
        %v763 = vadd.f32 %v721, %v761
        %v764 = vadd.f32 %v722, %v762
        %s765 = sld [smem:[#allocation2 + $0x36]]
        %v766 = vstv %s765
        %v767 = vmul.f32 %v766, %v751
        %v768 = vmul.f32 %v766, %v752
        %v769 = vadd.f32 %v735, %v767
        %v770 = vadd.f32 %v736, %v768
        %s771 = sld [smem:[#allocation2 + $0x37]]
        %v772 = vstv %s771
        %v773 = vmul.f32 %v772, %v751
        %v774 = vmul.f32 %v772, %v752
        %v775 = vadd.f32 %v749, %v773
        %v776 = vadd.f32 %v750, %v774
        %s777 = sld [smem:[#allocation2 + $0x44]]
        %v778 = vstv %s777
        %v779 = vmul.f32 %v778, %v751
        %v780 = vmul.f32 %v778, %v752
        %783 = vrot.lane.b32.xlu0 %v779, 127
        %v784 = vpop.permute.xlu0 %783
        %785 = vrot.lane.b32.xlu0 %v780, 127
        %v786 = vpop.permute.xlu0 %785
        %v789 = vadd.f32 %v757, %v784
        %v790 = vadd.f32 %v758, %v786
        %s791 = sld [smem:[#allocation2 + $0x45]]
        %v792 = vstv %s791
        %v793 = vmul.f32 %v792, %v751
        %v794 = vmul.f32 %v792, %v752
        %797 = vrot.lane.b32.xlu0 %v793, 127
        %v798 = vpop.permute.xlu0 %797
        %799 = vrot.lane.b32.xlu0 %v794, 127
        %v800 = vpop.permute.xlu0 %799
        %v803 = vadd.f32 %v763, %v798
        %v804 = vadd.f32 %v764, %v800
        %s805 = sld [smem:[#allocation2 + $0x46]]
        %v806 = vstv %s805
        %v807 = vmul.f32 %v806, %v751
        %v808 = vmul.f32 %v806, %v752
        %811 = vrot.lane.b32.xlu0 %v807, 127
        %v812 = vpop.permute.xlu0 %811
        %813 = vrot.lane.b32.xlu0 %v808, 127
        %v814 = vpop.permute.xlu0 %813
        %v817 = vadd.f32 %v769, %v812
        %v818 = vadd.f32 %v770, %v814
        %s819 = sld [smem:[#allocation2 + $0x47]]
        %v820 = vstv %s819
        %v821 = vmul.f32 %v820, %v751
        %v822 = vmul.f32 %v820, %v752
        %825 = vrot.lane.b32.xlu0 %v821, 127
        %v826 = vpop.permute.xlu0 %825
        %827 = vrot.lane.b32.xlu0 %v822, 127
        %v828 = vpop.permute.xlu0 %827
        %v831 = vadd.f32 %v775, %v826
        %v832 = vadd.f32 %v776, %v828
        %s833 = sld [smem:[#allocation2 + $0x54]]
        %v834 = vstv %s833
        %v835 = vmul.f32 %v834, %v751
        %v836 = vmul.f32 %v834, %v752
        %839 = vrot.lane.b32.xlu0 %v835, 126
        %v840 = vpop.permute.xlu0 %839
        %841 = vrot.lane.b32.xlu0 %v836, 126
        %v842 = vpop.permute.xlu0 %841
        %v845 = vadd.f32 %v789, %v840
        %v846 = vadd.f32 %v790, %v842
        %s847 = sld [smem:[#allocation2 + $0x55]]
        %v848 = vstv %s847
        %v849 = vmul.f32 %v848, %v751
        %v850 = vmul.f32 %v848, %v752
        %853 = vrot.lane.b32.xlu0 %v849, 126
        %v854 = vpop.permute.xlu0 %853
        %855 = vrot.lane.b32.xlu0 %v850, 126
        %v856 = vpop.permute.xlu0 %855
        %v859 = vadd.f32 %v803, %v854
        %v860 = vadd.f32 %v804, %v856
        %s861 = sld [smem:[#allocation2 + $0x56]]
        %v862 = vstv %s861
        %v863 = vmul.f32 %v862, %v751
        %v864 = vmul.f32 %v862, %v752
        %867 = vrot.lane.b32.xlu0 %v863, 126
        %v868 = vpop.permute.xlu0 %867
        %869 = vrot.lane.b32.xlu0 %v864, 126
        %v870 = vpop.permute.xlu0 %869
        %v873 = vadd.f32 %v817, %v868
        %v874 = vadd.f32 %v818, %v870
        %s875 = sld [smem:[#allocation2 + $0x57]]
        %v876 = vstv %s875
        %v877 = vmul.f32 %v876, %v751
        %v878 = vmul.f32 %v876, %v752
        %881 = vrot.lane.b32.xlu0 %v877, 126
        %v882 = vpop.permute.xlu0 %881
        %883 = vrot.lane.b32.xlu0 %v878, 126
        %v884 = vpop.permute.xlu0 %883
        %v887 = vadd.f32 %v831, %v882
        %v888 = vadd.f32 %v832, %v884
        %v889 = vld [vmem:[%s612 + $0x2] sm:$0xff]
        %v890 = vld [vmem:[%s612 + $0xa] sm:$0x7f]
        %s891 = sld [smem:[#allocation2 + $0x64]]
        %v892 = vstv %s891
        %v893 = vmul.f32 %v892, %v889
        %v894 = vmul.f32 %v892, %v890
        %v895 = vadd.f32 %v845, %v893
        %v896 = vadd.f32 %v846, %v894
        %s897 = sld [smem:[#allocation2 + $0x65]]
        %v898 = vstv %s897
        %v899 = vmul.f32 %v898, %v889
        %v900 = vmul.f32 %v898, %v890
        %v901 = vadd.f32 %v859, %v899
        %v902 = vadd.f32 %v860, %v900
        %s903 = sld [smem:[#allocation2 + $0x66]]
        %v904 = vstv %s903
        %v905 = vmul.f32 %v904, %v889
        %v906 = vmul.f32 %v904, %v890
        %v907 = vadd.f32 %v873, %v905
        %v908 = vadd.f32 %v874, %v906
        %s909 = sld [smem:[#allocation2 + $0x67]]
        %v910 = vstv %s909
        %v911 = vmul.f32 %v910, %v889
        %v912 = vmul.f32 %v910, %v890
        %v913 = vadd.f32 %v887, %v911
        %v914 = vadd.f32 %v888, %v912
        %s915 = sld [smem:[#allocation2 + $0x74]]
        %v916 = vstv %s915
        %v917 = vmul.f32 %v916, %v889
        %v918 = vmul.f32 %v916, %v890
        %921 = vrot.lane.b32.xlu0 %v917, 127
        %v922 = vpop.permute.xlu0 %921
        %923 = vrot.lane.b32.xlu0 %v918, 127
        %v924 = vpop.permute.xlu0 %923
        %v927 = vadd.f32 %v895, %v922
        %v928 = vadd.f32 %v896, %v924
        %s929 = sld [smem:[#allocation2 + $0x75]]
        %v930 = vstv %s929
        %v931 = vmul.f32 %v930, %v889
        %v932 = vmul.f32 %v930, %v890
        %935 = vrot.lane.b32.xlu0 %v931, 127
        %v936 = vpop.permute.xlu0 %935
        %937 = vrot.lane.b32.xlu0 %v932, 127
        %v938 = vpop.permute.xlu0 %937
        %v941 = vadd.f32 %v901, %v936
        %v942 = vadd.f32 %v902, %v938
        %s943 = sld [smem:[#allocation2 + $0x76]]
        %v944 = vstv %s943
        %v945 = vmul.f32 %v944, %v889
        %v946 = vmul.f32 %v944, %v890
        %949 = vrot.lane.b32.xlu0 %v945, 127
        %v950 = vpop.permute.xlu0 %949
        %951 = vrot.lane.b32.xlu0 %v946, 127
        %v952 = vpop.permute.xlu0 %951
        %v955 = vadd.f32 %v907, %v950
        %v956 = vadd.f32 %v908, %v952
        %s957 = sld [smem:[#allocation2 + $0x77]]
        %v958 = vstv %s957
        %v959 = vmul.f32 %v958, %v889
        %v960 = vmul.f32 %v958, %v890
        %963 = vrot.lane.b32.xlu0 %v959, 127
        %v964 = vpop.permute.xlu0 %963
        %965 = vrot.lane.b32.xlu0 %v960, 127
        %v966 = vpop.permute.xlu0 %965
        %v969 = vadd.f32 %v913, %v964
        %v970 = vadd.f32 %v914, %v966
        %s971 = sld [smem:[#allocation2 + $0x84]]
        %v972 = vstv %s971
        %v973 = vmul.f32 %v972, %v889
        %v974 = vmul.f32 %v972, %v890
        %977 = vrot.lane.b32.xlu0 %v973, 126
        %v978 = vpop.permute.xlu0 %977
        %979 = vrot.lane.b32.xlu0 %v974, 126
        %v980 = vpop.permute.xlu0 %979
        %v983 = vadd.f32 %v927, %v978
        %v984 = vadd.f32 %v928, %v980
        %s985 = sld [smem:[#allocation2 + $0x85]]
        %v986 = vstv %s985
        %v987 = vmul.f32 %v986, %v889
        %v988 = vmul.f32 %v986, %v890
        %991 = vrot.lane.b32.xlu0 %v987, 126
        %v992 = vpop.permute.xlu0 %991
        %993 = vrot.lane.b32.xlu0 %v988, 126
        %v994 = vpop.permute.xlu0 %993
        %v997 = vadd.f32 %v941, %v992
        %v998 = vadd.f32 %v942, %v994
        %s999 = sld [smem:[#allocation2 + $0x86]]
        %v1000 = vstv %s999
        %v1001 = vmul.f32 %v1000, %v889
        %v1002 = vmul.f32 %v1000, %v890
        %1005 = vrot.lane.b32.xlu0 %v1001, 126
        %v1006 = vpop.permute.xlu0 %1005
        %1007 = vrot.lane.b32.xlu0 %v1002, 126
        %v1008 = vpop.permute.xlu0 %1007
        %v1011 = vadd.f32 %v955, %v1006
        %v1012 = vadd.f32 %v956, %v1008
        %s1013 = sld [smem:[#allocation2 + $0x87]]
        %v1014 = vstv %s1013
        %v1015 = vmul.f32 %v1014, %v889
        %v1016 = vmul.f32 %v1014, %v890
        %1019 = vrot.lane.b32.xlu0 %v1015, 126
        %v1020 = vpop.permute.xlu0 %1019
        %1021 = vrot.lane.b32.xlu0 %v1016, 126
        %v1022 = vpop.permute.xlu0 %1021
        %v1025 = vadd.f32 %v969, %v1020
        %v1026 = vadd.f32 %v970, %v1022
        %s1027 = scalar_lea.vmem %s192, 48
        %v1028 = vld [vmem:[%s1027] sm:$0xff]
        %v1029 = vld [vmem:[%s1027 + $0x8] sm:$0x7f]
        %s1030 = sld [smem:[#allocation2 + $0x8]]
        %v1031 = vstv %s1030
        %v1032 = vmul.f32 %v1031, %v1028
        %v1033 = vmul.f32 %v1031, %v1029
        %v1034 = vadd.f32 %v983, %v1032
        %v1035 = vadd.f32 %v984, %v1033
        %s1036 = sld [smem:[#allocation2 + $0x9]]
        %v1037 = vstv %s1036
        %v1038 = vmul.f32 %v1037, %v1028
        %v1039 = vmul.f32 %v1037, %v1029
        %v1040 = vadd.f32 %v997, %v1038
        %v1041 = vadd.f32 %v998, %v1039
        %s1042 = sld [smem:[#allocation2 + $0xa]]
        %v1043 = vstv %s1042
        %v1044 = vmul.f32 %v1043, %v1028
        %v1045 = vmul.f32 %v1043, %v1029
        %v1046 = vadd.f32 %v1011, %v1044
        %v1047 = vadd.f32 %v1012, %v1045
        %s1048 = sld [smem:[#allocation2 + $0xb]]
        %v1049 = vstv %s1048
        %v1050 = vmul.f32 %v1049, %v1028
        %v1051 = vmul.f32 %v1049, %v1029
        %v1052 = vadd.f32 %v1025, %v1050
        %v1053 = vadd.f32 %v1026, %v1051
        %s1054 = sld [smem:[#allocation2 + $0x18]]
        %v1055 = vstv %s1054
        %v1056 = vmul.f32 %v1055, %v1028
        %v1057 = vmul.f32 %v1055, %v1029
        %1060 = vrot.lane.b32.xlu0 %v1056, 127
        %v1061 = vpop.permute.xlu0 %1060
        %1062 = vrot.lane.b32.xlu0 %v1057, 127
        %v1063 = vpop.permute.xlu0 %1062
        %v1066 = vadd.f32 %v1034, %v1061
        %v1067 = vadd.f32 %v1035, %v1063
        %s1068 = sld [smem:[#allocation2 + $0x19]]
        %v1069 = vstv %s1068
        %v1070 = vmul.f32 %v1069, %v1028
        %v1071 = vmul.f32 %v1069, %v1029
        %1074 = vrot.lane.b32.xlu0 %v1070, 127
        %v1075 = vpop.permute.xlu0 %1074
        %1076 = vrot.lane.b32.xlu0 %v1071, 127
        %v1077 = vpop.permute.xlu0 %1076
        %v1080 = vadd.f32 %v1040, %v1075
        %v1081 = vadd.f32 %v1041, %v1077
        %s1082 = sld [smem:[#allocation2 + $0x1a]]
        %v1083 = vstv %s1082
        %v1084 = vmul.f32 %v1083, %v1028
        %v1085 = vmul.f32 %v1083, %v1029
        %1088 = vrot.lane.b32.xlu0 %v1084, 127
        %v1089 = vpop.permute.xlu0 %1088
        %1090 = vrot.lane.b32.xlu0 %v1085, 127
        %v1091 = vpop.permute.xlu0 %1090
        %v1094 = vadd.f32 %v1046, %v1089
        %v1095 = vadd.f32 %v1047, %v1091
        %s1096 = sld [smem:[#allocation2 + $0x1b]]
        %v1097 = vstv %s1096
        %v1098 = vmul.f32 %v1097, %v1028
        %v1099 = vmul.f32 %v1097, %v1029
        %1102 = vrot.lane.b32.xlu0 %v1098, 127
        %v1103 = vpop.permute.xlu0 %1102
        %1104 = vrot.lane.b32.xlu0 %v1099, 127
        %v1105 = vpop.permute.xlu0 %1104
        %v1108 = vadd.f32 %v1052, %v1103
        %v1109 = vadd.f32 %v1053, %v1105
        %s1110 = sld [smem:[#allocation2 + $0x28]]
        %v1111 = vstv %s1110
        %v1112 = vmul.f32 %v1111, %v1028
        %v1113 = vmul.f32 %v1111, %v1029
        %1116 = vrot.lane.b32.xlu0 %v1112, 126
        %v1117 = vpop.permute.xlu0 %1116
        %1118 = vrot.lane.b32.xlu0 %v1113, 126
        %v1119 = vpop.permute.xlu0 %1118
        %v1122 = vadd.f32 %v1066, %v1117
        %v1123 = vadd.f32 %v1067, %v1119
        %s1124 = sld [smem:[#allocation2 + $0x29]]
        %v1125 = vstv %s1124
        %v1126 = vmul.f32 %v1125, %v1028
        %v1127 = vmul.f32 %v1125, %v1029
        %1130 = vrot.lane.b32.xlu0 %v1126, 126
        %v1131 = vpop.permute.xlu0 %1130
        %1132 = vrot.lane.b32.xlu0 %v1127, 126
        %v1133 = vpop.permute.xlu0 %1132
        %v1136 = vadd.f32 %v1080, %v1131
        %v1137 = vadd.f32 %v1081, %v1133
        %s1138 = sld [smem:[#allocation2 + $0x2a]]
        %v1139 = vstv %s1138
        %v1140 = vmul.f32 %v1139, %v1028
        %v1141 = vmul.f32 %v1139, %v1029
        %1144 = vrot.lane.b32.xlu0 %v1140, 126
        %v1145 = vpop.permute.xlu0 %1144
        %1146 = vrot.lane.b32.xlu0 %v1141, 126
        %v1147 = vpop.permute.xlu0 %1146
        %v1150 = vadd.f32 %v1094, %v1145
        %v1151 = vadd.f32 %v1095, %v1147
        %s1152 = sld [smem:[#allocation2 + $0x2b]]
        %v1153 = vstv %s1152
        %v1154 = vmul.f32 %v1153, %v1028
        %v1155 = vmul.f32 %v1153, %v1029
        %1158 = vrot.lane.b32.xlu0 %v1154, 126
        %v1159 = vpop.permute.xlu0 %1158
        %1160 = vrot.lane.b32.xlu0 %v1155, 126
        %v1161 = vpop.permute.xlu0 %1160
        %v1164 = vadd.f32 %v1108, %v1159
        %v1165 = vadd.f32 %v1109, %v1161
        %v1166 = vld [vmem:[%s1027 + $0x1] sm:$0xff]
        %v1167 = vld [vmem:[%s1027 + $0x9] sm:$0x7f]
        %s1168 = sld [smem:[#allocation2 + $0x38]]
        %v1169 = vstv %s1168
        %v1170 = vmul.f32 %v1169, %v1166
        %v1171 = vmul.f32 %v1169, %v1167
        %v1172 = vadd.f32 %v1122, %v1170
        %v1173 = vadd.f32 %v1123, %v1171
        %s1174 = sld [smem:[#allocation2 + $0x39]]
        %v1175 = vstv %s1174
        %v1176 = vmul.f32 %v1175, %v1166
        %v1177 = vmul.f32 %v1175, %v1167
        %v1178 = vadd.f32 %v1136, %v1176
        %v1179 = vadd.f32 %v1137, %v1177
        %s1180 = sld [smem:[#allocation2 + $0x3a]]
        %v1181 = vstv %s1180
        %v1182 = vmul.f32 %v1181, %v1166
        %v1183 = vmul.f32 %v1181, %v1167
        %v1184 = vadd.f32 %v1150, %v1182
        %v1185 = vadd.f32 %v1151, %v1183
        %s1186 = sld [smem:[#allocation2 + $0x3b]]
        %v1187 = vstv %s1186
        %v1188 = vmul.f32 %v1187, %v1166
        %v1189 = vmul.f32 %v1187, %v1167
        %v1190 = vadd.f32 %v1164, %v1188
        %v1191 = vadd.f32 %v1165, %v1189
        %s1192 = sld [smem:[#allocation2 + $0x48]]
        %v1193 = vstv %s1192
        %v1194 = vmul.f32 %v1193, %v1166
        %v1195 = vmul.f32 %v1193, %v1167
        %1198 = vrot.lane.b32.xlu0 %v1194, 127
        %v1199 = vpop.permute.xlu0 %1198
        %1200 = vrot.lane.b32.xlu0 %v1195, 127
        %v1201 = vpop.permute.xlu0 %1200
        %v1204 = vadd.f32 %v1172, %v1199
        %v1205 = vadd.f32 %v1173, %v1201
        %s1206 = sld [smem:[#allocation2 + $0x49]]
        %v1207 = vstv %s1206
        %v1208 = vmul.f32 %v1207, %v1166
        %v1209 = vmul.f32 %v1207, %v1167
        %1212 = vrot.lane.b32.xlu0 %v1208, 127
        %v1213 = vpop.permute.xlu0 %1212
        %1214 = vrot.lane.b32.xlu0 %v1209, 127
        %v1215 = vpop.permute.xlu0 %1214
        %v1218 = vadd.f32 %v1178, %v1213
        %v1219 = vadd.f32 %v1179, %v1215
        %s1220 = sld [smem:[#allocation2 + $0x4a]]
        %v1221 = vstv %s1220
        %v1222 = vmul.f32 %v1221, %v1166
        %v1223 = vmul.f32 %v1221, %v1167
        %1226 = vrot.lane.b32.xlu0 %v1222, 127
        %v1227 = vpop.permute.xlu0 %1226
        %1228 = vrot.lane.b32.xlu0 %v1223, 127
        %v1229 = vpop.permute.xlu0 %1228
        %v1232 = vadd.f32 %v1184, %v1227
        %v1233 = vadd.f32 %v1185, %v1229
        %s1234 = sld [smem:[#allocation2 + $0x4b]]
        %v1235 = vstv %s1234
        %v1236 = vmul.f32 %v1235, %v1166
        %v1237 = vmul.f32 %v1235, %v1167
        %1240 = vrot.lane.b32.xlu0 %v1236, 127
        %v1241 = vpop.permute.xlu0 %1240
        %1242 = vrot.lane.b32.xlu0 %v1237, 127
        %v1243 = vpop.permute.xlu0 %1242
        %v1246 = vadd.f32 %v1190, %v1241
        %v1247 = vadd.f32 %v1191, %v1243
        %s1248 = sld [smem:[#allocation2 + $0x58]]
        %v1249 = vstv %s1248
        %v1250 = vmul.f32 %v1249, %v1166
        %v1251 = vmul.f32 %v1249, %v1167
        %1254 = vrot.lane.b32.xlu0 %v1250, 126
        %v1255 = vpop.permute.xlu0 %1254
        %1256 = vrot.lane.b32.xlu0 %v1251, 126
        %v1257 = vpop.permute.xlu0 %1256
        %v1260 = vadd.f32 %v1204, %v1255
        %v1261 = vadd.f32 %v1205, %v1257
        %s1262 = sld [smem:[#allocation2 + $0x59]]
        %v1263 = vstv %s1262
        %v1264 = vmul.f32 %v1263, %v1166
        %v1265 = vmul.f32 %v1263, %v1167
        %1268 = vrot.lane.b32.xlu0 %v1264, 126
        %v1269 = vpop.permute.xlu0 %1268
        %1270 = vrot.lane.b32.xlu0 %v1265, 126
        %v1271 = vpop.permute.xlu0 %1270
        %v1274 = vadd.f32 %v1218, %v1269
        %v1275 = vadd.f32 %v1219, %v1271
        %s1276 = sld [smem:[#allocation2 + $0x5a]]
        %v1277 = vstv %s1276
        %v1278 = vmul.f32 %v1277, %v1166
        %v1279 = vmul.f32 %v1277, %v1167
        %1282 = vrot.lane.b32.xlu0 %v1278, 126
        %v1283 = vpop.permute.xlu0 %1282
        %1284 = vrot.lane.b32.xlu0 %v1279, 126
        %v1285 = vpop.permute.xlu0 %1284
        %v1288 = vadd.f32 %v1232, %v1283
        %v1289 = vadd.f32 %v1233, %v1285
        %s1290 = sld [smem:[#allocation2 + $0x5b]]
        %v1291 = vstv %s1290
        %v1292 = vmul.f32 %v1291, %v1166
        %v1293 = vmul.f32 %v1291, %v1167
        %1296 = vrot.lane.b32.xlu0 %v1292, 126
        %v1297 = vpop.permute.xlu0 %1296
        %1298 = vrot.lane.b32.xlu0 %v1293, 126
        %v1299 = vpop.permute.xlu0 %1298
        %v1302 = vadd.f32 %v1246, %v1297
        %v1303 = vadd.f32 %v1247, %v1299
        %v1304 = vld [vmem:[%s1027 + $0x2] sm:$0xff]
        %v1305 = vld [vmem:[%s1027 + $0xa] sm:$0x7f]
        %s1306 = sld [smem:[#allocation2 + $0x68]]
        %v1307 = vstv %s1306
        %v1308 = vmul.f32 %v1307, %v1304
        %v1309 = vmul.f32 %v1307, %v1305
        %v1310 = vadd.f32 %v1260, %v1308
        %v1311 = vadd.f32 %v1261, %v1309
        %s1312 = sld [smem:[#allocation2 + $0x69]]
        %v1313 = vstv %s1312
        %v1314 = vmul.f32 %v1313, %v1304
        %v1315 = vmul.f32 %v1313, %v1305
        %v1316 = vadd.f32 %v1274, %v1314
        %v1317 = vadd.f32 %v1275, %v1315
        %s1318 = sld [smem:[#allocation2 + $0x6a]]
        %v1319 = vstv %s1318
        %v1320 = vmul.f32 %v1319, %v1304
        %v1321 = vmul.f32 %v1319, %v1305
        %v1322 = vadd.f32 %v1288, %v1320
        %v1323 = vadd.f32 %v1289, %v1321
        %s1324 = sld [smem:[#allocation2 + $0x6b]]
        %v1325 = vstv %s1324
        %v1326 = vmul.f32 %v1325, %v1304
        %v1327 = vmul.f32 %v1325, %v1305
        %v1328 = vadd.f32 %v1302, %v1326
        %v1329 = vadd.f32 %v1303, %v1327
        %s1330 = sld [smem:[#allocation2 + $0x78]]
        %v1331 = vstv %s1330
        %v1332 = vmul.f32 %v1331, %v1304
        %v1333 = vmul.f32 %v1331, %v1305
        %1336 = vrot.lane.b32.xlu0 %v1332, 127
        %v1337 = vpop.permute.xlu0 %1336
        %1338 = vrot.lane.b32.xlu0 %v1333, 127
        %v1339 = vpop.permute.xlu0 %1338
        %v1342 = vadd.f32 %v1310, %v1337
        %v1343 = vadd.f32 %v1311, %v1339
        %s1344 = sld [smem:[#allocation2 + $0x79]]
        %v1345 = vstv %s1344
        %v1346 = vmul.f32 %v1345, %v1304
        %v1347 = vmul.f32 %v1345, %v1305
        %1350 = vrot.lane.b32.xlu0 %v1346, 127
        %v1351 = vpop.permute.xlu0 %1350
        %1352 = vrot.lane.b32.xlu0 %v1347, 127
        %v1353 = vpop.permute.xlu0 %1352
        %v1356 = vadd.f32 %v1316, %v1351
        %v1357 = vadd.f32 %v1317, %v1353
        %s1358 = sld [smem:[#allocation2 + $0x7a]]
        %v1359 = vstv %s1358
        %v1360 = vmul.f32 %v1359, %v1304
        %v1361 = vmul.f32 %v1359, %v1305
        %1364 = vrot.lane.b32.xlu0 %v1360, 127
        %v1365 = vpop.permute.xlu0 %1364
        %1366 = vrot.lane.b32.xlu0 %v1361, 127
        %v1367 = vpop.permute.xlu0 %1366
        %v1370 = vadd.f32 %v1322, %v1365
        %v1371 = vadd.f32 %v1323, %v1367
        %s1372 = sld [smem:[#allocation2 + $0x7b]]
        %v1373 = vstv %s1372
        %v1374 = vmul.f32 %v1373, %v1304
        %v1375 = vmul.f32 %v1373, %v1305
        %1378 = vrot.lane.b32.xlu0 %v1374, 127
        %v1379 = vpop.permute.xlu0 %1378
        %1380 = vrot.lane.b32.xlu0 %v1375, 127
        %v1381 = vpop.permute.xlu0 %1380
        %v1384 = vadd.f32 %v1328, %v1379
        %v1385 = vadd.f32 %v1329, %v1381
        %s1386 = sld [smem:[#allocation2 + $0x88]]
        %v1387 = vstv %s1386
        %v1388 = vmul.f32 %v1387, %v1304
        %v1389 = vmul.f32 %v1387, %v1305
        %1392 = vrot.lane.b32.xlu0 %v1388, 126
        %v1393 = vpop.permute.xlu0 %1392
        %1394 = vrot.lane.b32.xlu0 %v1389, 126
        %v1395 = vpop.permute.xlu0 %1394
        %v1398 = vadd.f32 %v1342, %v1393
        %v1399 = vadd.f32 %v1343, %v1395
        %s1400 = sld [smem:[#allocation2 + $0x89]]
        %v1401 = vstv %s1400
        %v1402 = vmul.f32 %v1401, %v1304
        %v1403 = vmul.f32 %v1401, %v1305
        %1406 = vrot.lane.b32.xlu0 %v1402, 126
        %v1407 = vpop.permute.xlu0 %1406
        %1408 = vrot.lane.b32.xlu0 %v1403, 126
        %v1409 = vpop.permute.xlu0 %1408
        %v1412 = vadd.f32 %v1356, %v1407
        %v1413 = vadd.f32 %v1357, %v1409
        %s1414 = sld [smem:[#allocation2 + $0x8a]]
        %v1415 = vstv %s1414
        %v1416 = vmul.f32 %v1415, %v1304
        %v1417 = vmul.f32 %v1415, %v1305
        %1420 = vrot.lane.b32.xlu0 %v1416, 126
        %v1421 = vpop.permute.xlu0 %1420
        %1422 = vrot.lane.b32.xlu0 %v1417, 126
        %v1423 = vpop.permute.xlu0 %1422
        %v1426 = vadd.f32 %v1370, %v1421
        %v1427 = vadd.f32 %v1371, %v1423
        %s1428 = sld [smem:[#allocation2 + $0x8b]]
        %v1429 = vstv %s1428
        %v1430 = vmul.f32 %v1429, %v1304
        %v1431 = vmul.f32 %v1429, %v1305
        %1434 = vrot.lane.b32.xlu0 %v1430, 126
        %v1435 = vpop.permute.xlu0 %1434
        %1436 = vrot.lane.b32.xlu0 %v1431, 126
        %v1437 = vpop.permute.xlu0 %1436
        %v1440 = vadd.f32 %v1384, %v1435
        %v1441 = vadd.f32 %v1385, %v1437
        %s1442 = scalar_lea.vmem %s192, 72
        %v1443 = vld [vmem:[%s1442] sm:$0xff]
        %v1444 = vld [vmem:[%s1442 + $0x8] sm:$0x7f]
        %s1445 = sld [smem:[#allocation2 + $0xc]]
        %v1446 = vstv %s1445
        %v1447 = vmul.f32 %v1446, %v1443
        %v1448 = vmul.f32 %v1446, %v1444
        %v1449 = vadd.f32 %v1398, %v1447
        %v1450 = vadd.f32 %v1399, %v1448
        %s1451 = sld [smem:[#allocation2 + $0xd]]
        %v1452 = vstv %s1451
        %v1453 = vmul.f32 %v1452, %v1443
        %v1454 = vmul.f32 %v1452, %v1444
        %v1455 = vadd.f32 %v1412, %v1453
        %v1456 = vadd.f32 %v1413, %v1454
        %s1457 = sld [smem:[#allocation2 + $0xe]]
        %v1458 = vstv %s1457
        %v1459 = vmul.f32 %v1458, %v1443
        %v1460 = vmul.f32 %v1458, %v1444
        %v1461 = vadd.f32 %v1426, %v1459
        %v1462 = vadd.f32 %v1427, %v1460
        %s1463 = sld [smem:[#allocation2 + $0xf]]
        %v1464 = vstv %s1463
        %v1465 = vmul.f32 %v1464, %v1443
        %v1466 = vmul.f32 %v1464, %v1444
        %v1467 = vadd.f32 %v1440, %v1465
        %v1468 = vadd.f32 %v1441, %v1466
        %s1469 = sld [smem:[#allocation2 + $0x1c]]
        %v1470 = vstv %s1469
        %v1471 = vmul.f32 %v1470, %v1443
        %v1472 = vmul.f32 %v1470, %v1444
        %1475 = vrot.lane.b32.xlu0 %v1471, 127
        %v1476 = vpop.permute.xlu0 %1475
        %1477 = vrot.lane.b32.xlu0 %v1472, 127
        %v1478 = vpop.permute.xlu0 %1477
        %v1481 = vadd.f32 %v1449, %v1476
        %v1482 = vadd.f32 %v1450, %v1478
        %s1483 = sld [smem:[#allocation2 + $0x1d]]
        %v1484 = vstv %s1483
        %v1485 = vmul.f32 %v1484, %v1443
        %v1486 = vmul.f32 %v1484, %v1444
        %1489 = vrot.lane.b32.xlu0 %v1485, 127
        %v1490 = vpop.permute.xlu0 %1489
        %1491 = vrot.lane.b32.xlu0 %v1486, 127
        %v1492 = vpop.permute.xlu0 %1491
        %v1495 = vadd.f32 %v1455, %v1490
        %v1496 = vadd.f32 %v1456, %v1492
        %s1497 = sld [smem:[#allocation2 + $0x1e]]
        %v1498 = vstv %s1497
        %v1499 = vmul.f32 %v1498, %v1443
        %v1500 = vmul.f32 %v1498, %v1444
        %1503 = vrot.lane.b32.xlu0 %v1499, 127
        %v1504 = vpop.permute.xlu0 %1503
        %1505 = vrot.lane.b32.xlu0 %v1500, 127
        %v1506 = vpop.permute.xlu0 %1505
        %v1509 = vadd.f32 %v1461, %v1504
        %v1510 = vadd.f32 %v1462, %v1506
        %s1511 = sld [smem:[#allocation2 + $0x1f]]
        %v1512 = vstv %s1511
        %v1513 = vmul.f32 %v1512, %v1443
        %v1514 = vmul.f32 %v1512, %v1444
        %1517 = vrot.lane.b32.xlu0 %v1513, 127
        %v1518 = vpop.permute.xlu0 %1517
        %1519 = vrot.lane.b32.xlu0 %v1514, 127
        %v1520 = vpop.permute.xlu0 %1519
        %v1523 = vadd.f32 %v1467, %v1518
        %v1524 = vadd.f32 %v1468, %v1520
        %s1525 = sld [smem:[#allocation2 + $0x2c]]
        %v1526 = vstv %s1525
        %v1527 = vmul.f32 %v1526, %v1443
        %v1528 = vmul.f32 %v1526, %v1444
        %1531 = vrot.lane.b32.xlu0 %v1527, 126
        %v1532 = vpop.permute.xlu0 %1531
        %1533 = vrot.lane.b32.xlu0 %v1528, 126
        %v1534 = vpop.permute.xlu0 %1533
        %v1537 = vadd.f32 %v1481, %v1532
        %v1538 = vadd.f32 %v1482, %v1534
        %s1539 = sld [smem:[#allocation2 + $0x2d]]
        %v1540 = vstv %s1539
        %v1541 = vmul.f32 %v1540, %v1443
        %v1542 = vmul.f32 %v1540, %v1444
        %1545 = vrot.lane.b32.xlu0 %v1541, 126
        %v1546 = vpop.permute.xlu0 %1545
        %1547 = vrot.lane.b32.xlu0 %v1542, 126
        %v1548 = vpop.permute.xlu0 %1547
        %v1551 = vadd.f32 %v1495, %v1546
        %v1552 = vadd.f32 %v1496, %v1548
        %s1553 = sld [smem:[#allocation2 + $0x2e]]
        %v1554 = vstv %s1553
        %v1555 = vmul.f32 %v1554, %v1443
        %v1556 = vmul.f32 %v1554, %v1444
        %1559 = vrot.lane.b32.xlu0 %v1555, 126
        %v1560 = vpop.permute.xlu0 %1559
        %1561 = vrot.lane.b32.xlu0 %v1556, 126
        %v1562 = vpop.permute.xlu0 %1561
        %v1565 = vadd.f32 %v1509, %v1560
        %v1566 = vadd.f32 %v1510, %v1562
        %s1567 = sld [smem:[#allocation2 + $0x2f]]
        %v1568 = vstv %s1567
        %v1569 = vmul.f32 %v1568, %v1443
        %v1570 = vmul.f32 %v1568, %v1444
        %1573 = vrot.lane.b32.xlu0 %v1569, 126
        %v1574 = vpop.permute.xlu0 %1573
        %1575 = vrot.lane.b32.xlu0 %v1570, 126
        %v1576 = vpop.permute.xlu0 %1575
        %v1579 = vadd.f32 %v1523, %v1574
        %v1580 = vadd.f32 %v1524, %v1576
        %v1581 = vld [vmem:[%s1442 + $0x1] sm:$0xff]
        %v1582 = vld [vmem:[%s1442 + $0x9] sm:$0x7f]
        %s1583 = sld [smem:[#allocation2 + $0x3c]]
        %v1584 = vstv %s1583
        %v1585 = vmul.f32 %v1584, %v1581
        %v1586 = vmul.f32 %v1584, %v1582
        %v1587 = vadd.f32 %v1537, %v1585
        %v1588 = vadd.f32 %v1538, %v1586
        %s1589 = sld [smem:[#allocation2 + $0x3d]]
        %v1590 = vstv %s1589
        %v1591 = vmul.f32 %v1590, %v1581
        %v1592 = vmul.f32 %v1590, %v1582
        %v1593 = vadd.f32 %v1551, %v1591
        %v1594 = vadd.f32 %v1552, %v1592
        %s1595 = sld [smem:[#allocation2 + $0x3e]]
        %v1596 = vstv %s1595
        %v1597 = vmul.f32 %v1596, %v1581
        %v1598 = vmul.f32 %v1596, %v1582
        %v1599 = vadd.f32 %v1565, %v1597
        %v1600 = vadd.f32 %v1566, %v1598
        %s1601 = sld [smem:[#allocation2 + $0x3f]]
        %v1602 = vstv %s1601
        %v1603 = vmul.f32 %v1602, %v1581
        %v1604 = vmul.f32 %v1602, %v1582
        %v1605 = vadd.f32 %v1579, %v1603
        %v1606 = vadd.f32 %v1580, %v1604
        %s1607 = sld [smem:[#allocation2 + $0x4c]]
        %v1608 = vstv %s1607
        %v1609 = vmul.f32 %v1608, %v1581
        %v1610 = vmul.f32 %v1608, %v1582
        %1613 = vrot.lane.b32.xlu0 %v1609, 127
        %v1614 = vpop.permute.xlu0 %1613
        %1615 = vrot.lane.b32.xlu0 %v1610, 127
        %v1616 = vpop.permute.xlu0 %1615
        %v1619 = vadd.f32 %v1587, %v1614
        %v1620 = vadd.f32 %v1588, %v1616
        %s1621 = sld [smem:[#allocation2 + $0x4d]]
        %v1622 = vstv %s1621
        %v1623 = vmul.f32 %v1622, %v1581
        %v1624 = vmul.f32 %v1622, %v1582
        %1627 = vrot.lane.b32.xlu0 %v1623, 127
        %v1628 = vpop.permute.xlu0 %1627
        %1629 = vrot.lane.b32.xlu0 %v1624, 127
        %v1630 = vpop.permute.xlu0 %1629
        %v1633 = vadd.f32 %v1593, %v1628
        %v1634 = vadd.f32 %v1594, %v1630
        %s1635 = sld [smem:[#allocation2 + $0x4e]]
        %v1636 = vstv %s1635
        %v1637 = vmul.f32 %v1636, %v1581
        %v1638 = vmul.f32 %v1636, %v1582
        %1641 = vrot.lane.b32.xlu0 %v1637, 127
        %v1642 = vpop.permute.xlu0 %1641
        %1643 = vrot.lane.b32.xlu0 %v1638, 127
        %v1644 = vpop.permute.xlu0 %1643
        %v1647 = vadd.f32 %v1599, %v1642
        %v1648 = vadd.f32 %v1600, %v1644
        %s1649 = sld [smem:[#allocation2 + $0x4f]]
        %v1650 = vstv %s1649
        %v1651 = vmul.f32 %v1650, %v1581
        %v1652 = vmul.f32 %v1650, %v1582
        %1655 = vrot.lane.b32.xlu0 %v1651, 127
        %v1656 = vpop.permute.xlu0 %1655
        %1657 = vrot.lane.b32.xlu0 %v1652, 127
        %v1658 = vpop.permute.xlu0 %1657
        %v1661 = vadd.f32 %v1605, %v1656
        %v1662 = vadd.f32 %v1606, %v1658
        %s1663 = sld [smem:[#allocation2 + $0x5c]]
        %v1664 = vstv %s1663
        %v1665 = vmul.f32 %v1664, %v1581
        %v1666 = vmul.f32 %v1664, %v1582
        %1669 = vrot.lane.b32.xlu0 %v1665, 126
        %v1670 = vpop.permute.xlu0 %1669
        %1671 = vrot.lane.b32.xlu0 %v1666, 126
        %v1672 = vpop.permute.xlu0 %1671
        %v1675 = vadd.f32 %v1619, %v1670
        %v1676 = vadd.f32 %v1620, %v1672
        %s1677 = sld [smem:[#allocation2 + $0x5d]]
        %v1678 = vstv %s1677
        %v1679 = vmul.f32 %v1678, %v1581
        %v1680 = vmul.f32 %v1678, %v1582
        %1683 = vrot.lane.b32.xlu0 %v1679, 126
        %v1684 = vpop.permute.xlu0 %1683
        %1685 = vrot.lane.b32.xlu0 %v1680, 126
        %v1686 = vpop.permute.xlu0 %1685
        %v1689 = vadd.f32 %v1633, %v1684
        %v1690 = vadd.f32 %v1634, %v1686
        %s1691 = sld [smem:[#allocation2 + $0x5e]]
        %v1692 = vstv %s1691
        %v1693 = vmul.f32 %v1692, %v1581
        %v1694 = vmul.f32 %v1692, %v1582
        %1697 = vrot.lane.b32.xlu0 %v1693, 126
        %v1698 = vpop.permute.xlu0 %1697
        %1699 = vrot.lane.b32.xlu0 %v1694, 126
        %v1700 = vpop.permute.xlu0 %1699
        %v1703 = vadd.f32 %v1647, %v1698
        %v1704 = vadd.f32 %v1648, %v1700
        %s1705 = sld [smem:[#allocation2 + $0x5f]]
        %v1706 = vstv %s1705
        %v1707 = vmul.f32 %v1706, %v1581
        %v1708 = vmul.f32 %v1706, %v1582
        %1711 = vrot.lane.b32.xlu0 %v1707, 126
        %v1712 = vpop.permute.xlu0 %1711
        %1713 = vrot.lane.b32.xlu0 %v1708, 126
        %v1714 = vpop.permute.xlu0 %1713
        %v1717 = vadd.f32 %v1661, %v1712
        %v1718 = vadd.f32 %v1662, %v1714
        %v1719 = vld [vmem:[%s1442 + $0x2] sm:$0xff]
        %v1720 = vld [vmem:[%s1442 + $0xa] sm:$0x7f]
        %s1721 = sld [smem:[#allocation2 + $0x6c]]
        %v1722 = vstv %s1721
        %v1723 = vmul.f32 %v1722, %v1719
        %v1724 = vmul.f32 %v1722, %v1720
        %v1725 = vadd.f32 %v1675, %v1723
        %v1726 = vadd.f32 %v1676, %v1724
        %s1727 = sld [smem:[#allocation2 + $0x6d]]
        %v1728 = vstv %s1727
        %v1729 = vmul.f32 %v1728, %v1719
        %v1730 = vmul.f32 %v1728, %v1720
        %v1731 = vadd.f32 %v1689, %v1729
        %v1732 = vadd.f32 %v1690, %v1730
        %s1733 = sld [smem:[#allocation2 + $0x6e]]
        %v1734 = vstv %s1733
        %v1735 = vmul.f32 %v1734, %v1719
        %v1736 = vmul.f32 %v1734, %v1720
        %v1737 = vadd.f32 %v1703, %v1735
        %v1738 = vadd.f32 %v1704, %v1736
        %s1739 = sld [smem:[#allocation2 + $0x6f]]
        %v1740 = vstv %s1739
        %v1741 = vmul.f32 %v1740, %v1719
        %v1742 = vmul.f32 %v1740, %v1720
        %v1743 = vadd.f32 %v1717, %v1741
        %v1744 = vadd.f32 %v1718, %v1742
        %s1745 = sld [smem:[#allocation2 + $0x7c]]
        %v1746 = vstv %s1745
        %v1747 = vmul.f32 %v1746, %v1719
        %v1748 = vmul.f32 %v1746, %v1720
        %1751 = vrot.lane.b32.xlu0 %v1747, 127
        %v1752 = vpop.permute.xlu0 %1751
        %1753 = vrot.lane.b32.xlu0 %v1748, 127
        %v1754 = vpop.permute.xlu0 %1753
        %v1757 = vadd.f32 %v1725, %v1752
        %v1758 = vadd.f32 %v1726, %v1754
        %s1759 = sld [smem:[#allocation2 + $0x7d]]
        %v1760 = vstv %s1759
        %v1761 = vmul.f32 %v1760, %v1719
        %v1762 = vmul.f32 %v1760, %v1720
        %1765 = vrot.lane.b32.xlu0 %v1761, 127
        %v1766 = vpop.permute.xlu0 %1765
        %1767 = vrot.lane.b32.xlu0 %v1762, 127
        %v1768 = vpop.permute.xlu0 %1767
        %v1771 = vadd.f32 %v1731, %v1766
        %v1772 = vadd.f32 %v1732, %v1768
        %s1773 = sld [smem:[#allocation2 + $0x7e]]
        %v1774 = vstv %s1773
        %v1775 = vmul.f32 %v1774, %v1719
        %v1776 = vmul.f32 %v1774, %v1720
        %1779 = vrot.lane.b32.xlu0 %v1775, 127
        %v1780 = vpop.permute.xlu0 %1779
        %1781 = vrot.lane.b32.xlu0 %v1776, 127
        %v1782 = vpop.permute.xlu0 %1781
        %v1785 = vadd.f32 %v1737, %v1780
        %v1786 = vadd.f32 %v1738, %v1782
        %s1787 = sld [smem:[#allocation2 + $0x7f]]
        %v1788 = vstv %s1787
        %v1789 = vmul.f32 %v1788, %v1719
        %v1790 = vmul.f32 %v1788, %v1720
        %1793 = vrot.lane.b32.xlu0 %v1789, 127
        %v1794 = vpop.permute.xlu0 %1793
        %1795 = vrot.lane.b32.xlu0 %v1790, 127
        %v1796 = vpop.permute.xlu0 %1795
        %v1799 = vadd.f32 %v1743, %v1794
        %v1800 = vadd.f32 %v1744, %v1796
        %s1801 = sld [smem:[#allocation2 + $0x8c]]
        %v1802 = vstv %s1801
        %v1803 = vmul.f32 %v1802, %v1719
        %v1804 = vmul.f32 %v1802, %v1720
        %1807 = vrot.lane.b32.xlu0 %v1803, 126
        %v1808 = vpop.permute.xlu0 %1807
        %1809 = vrot.lane.b32.xlu0 %v1804, 126
        %v1810 = vpop.permute.xlu0 %1809
        %v1813 = vadd.f32 %v1757, %v1808
        %v1814 = vadd.f32 %v1758, %v1810
        %s1815 = sld [smem:[#allocation2 + $0x8d]]
        %v1816 = vstv %s1815
        %v1817 = vmul.f32 %v1816, %v1719
        %v1818 = vmul.f32 %v1816, %v1720
        %1821 = vrot.lane.b32.xlu0 %v1817, 126
        %v1822 = vpop.permute.xlu0 %1821
        %1823 = vrot.lane.b32.xlu0 %v1818, 126
        %v1824 = vpop.permute.xlu0 %1823
        %v1827 = vadd.f32 %v1771, %v1822
        %v1828 = vadd.f32 %v1772, %v1824
        %s1829 = sld [smem:[#allocation2 + $0x8e]]
        %v1830 = vstv %s1829
        %v1831 = vmul.f32 %v1830, %v1719
        %v1832 = vmul.f32 %v1830, %v1720
        %1835 = vrot.lane.b32.xlu0 %v1831, 126
        %v1836 = vpop.permute.xlu0 %1835
        %1837 = vrot.lane.b32.xlu0 %v1832, 126
        %v1838 = vpop.permute.xlu0 %1837
        %v1841 = vadd.f32 %v1785, %v1836
        %v1842 = vadd.f32 %v1786, %v1838
        %s1843 = sld [smem:[#allocation2 + $0x8f]]
        %v1844 = vstv %s1843
        %v1845 = vmul.f32 %v1844, %v1719
        %v1846 = vmul.f32 %v1844, %v1720
        %1849 = vrot.lane.b32.xlu0 %v1845, 126
        %v1850 = vpop.permute.xlu0 %1849
        %1851 = vrot.lane.b32.xlu0 %v1846, 126
        %v1852 = vpop.permute.xlu0 %1851
        %v1855 = vadd.f32 %v1799, %v1850
        %v1856 = vadd.f32 %v1800, %v1852
        %s1857 = sld [smem:[#allocation4]]
        %v1858 = vstv %s1857
        %v1859 = vadd.f32 %v1813, %v1858
        %v1860 = vadd.f32 %v1814, %v1858
        %vm1861 = vcmp.ge.f32.partialorder %v1859, 0.0
        %vm1862 = vcmp.ge.f32.partialorder %v1860, 0.0
        %v1863 = vmul.f32 %v1859, 0.01
        %v1864 = vmul.f32 %v1860, 0.01
        %v1865 = vsel %vm1861, %v1859, %v1863
        %v1866 = vsel %vm1862, %v1860, %v1864
        %v1867 = vsub.f32 0.0, %v1865
        %v1868 = vsub.f32 0.0, %v1866
        %v1869 = vmul.f32 %v1867, 1.442695
        %v1870 = vpow.pop %v1869
        %v1871 = vmul.f32 %v1868, 1.442695
        %v1872 = vpow.pop %v1871
        %v1873 = vadd.f32 %v1870, 1.0
        %v1874 = vadd.f32 %v1872, 1.0
        %v1875 = vrcp.pop %v1873
        %v1876 = vrcp.pop %v1874
        %vm1877 = vcmask 121856
        %1878 = vst.msk [vmem:[%s197] sm:$0xff] %vm1877, %v1875
        %vm1879 = vcmask 120832
        %1880 = vst.msk [vmem:[%s197 + $0x8] sm:$0x7f] %vm1879, %v1876
        %s1881 = sld [smem:[#allocation4 + $0x1]]
        %v1882 = vstv %s1881
        %v1883 = vadd.f32 %v1827, %v1882
        %v1884 = vadd.f32 %v1828, %v1882
        %vm1885 = vcmp.ge.f32.partialorder %v1883, 0.0
        %vm1886 = vcmp.ge.f32.partialorder %v1884, 0.0
        %v1887 = vmul.f32 %v1883, 0.01
        %v1888 = vmul.f32 %v1884, 0.01
        %v1889 = vsel %vm1885, %v1883, %v1887
        %v1890 = vsel %vm1886, %v1884, %v1888
        %v1891 = vsub.f32 0.0, %v1889
        %v1892 = vsub.f32 0.0, %v1890
        %v1893 = vmul.f32 %v1891, 1.442695
        %v1894 = vpow.pop %v1893
        %v1895 = vmul.f32 %v1892, 1.442695
        %v1896 = vpow.pop %v1895
        %v1897 = vadd.f32 %v1894, 1.0
        %v1898 = vadd.f32 %v1896, 1.0
        %v1899 = vrcp.pop %v1897
        %v1900 = vrcp.pop %v1898
        %s1901 = scalar_lea.vmem %s197, 16
        %1902 = vst.msk [vmem:[%s1901] sm:$0xff] %vm1877, %v1899
        %1903 = vst.msk [vmem:[%s1901 + $0x8] sm:$0x7f] %vm1879, %v1900
        %s1904 = sld [smem:[#allocation4 + $0x2]]
        %v1905 = vstv %s1904
        %v1906 = vadd.f32 %v1841, %v1905
        %v1907 = vadd.f32 %v1842, %v1905
        %vm1908 = vcmp.ge.f32.partialorder %v1906, 0.0
        %vm1909 = vcmp.ge.f32.partialorder %v1907, 0.0
        %v1910 = vmul.f32 %v1906, 0.01
        %v1911 = vmul.f32 %v1907, 0.01
        %v1912 = vsel %vm1908, %v1906, %v1910
        %v1913 = vsel %vm1909, %v1907, %v1911
        %v1914 = vsub.f32 0.0, %v1912
        %v1915 = vsub.f32 0.0, %v1913
        %v1916 = vmul.f32 %v1914, 1.442695
        %v1917 = vpow.pop %v1916
        %v1918 = vmul.f32 %v1915, 1.442695
        %v1919 = vpow.pop %v1918
        %v1920 = vadd.f32 %v1917, 1.0
        %v1921 = vadd.f32 %v1919, 1.0
        %v1922 = vrcp.pop %v1920
        %v1923 = vrcp.pop %v1921
        %s1924 = scalar_lea.vmem %s197, 32
        %1925 = vst.msk [vmem:[%s1924] sm:$0xff] %vm1877, %v1922
        %1926 = vst.msk [vmem:[%s1924 + $0x8] sm:$0x7f] %vm1879, %v1923
        %s1927 = sld [smem:[#allocation4 + $0x3]]
        %v1928 = vstv %s1927
        %v1929 = vadd.f32 %v1855, %v1928
        %v1930 = vadd.f32 %v1856, %v1928
        %vm1931 = vcmp.ge.f32.partialorder %v1929, 0.0
        %vm1932 = vcmp.ge.f32.partialorder %v1930, 0.0
        %v1933 = vmul.f32 %v1929, 0.01
        %v1934 = vmul.f32 %v1930, 0.01
        %v1935 = vsel %vm1931, %v1929, %v1933
        %v1936 = vsel %vm1932, %v1930, %v1934
        %v1937 = vsub.f32 0.0, %v1935
        %v1938 = vsub.f32 0.0, %v1936
        %v1939 = vmul.f32 %v1937, 1.442695
        %v1940 = vpow.pop %v1939
        %v1941 = vmul.f32 %v1938, 1.442695
        %v1942 = vpow.pop %v1941
        %v1943 = vadd.f32 %v1940, 1.0
        %v1944 = vadd.f32 %v1942, 1.0
        %v1945 = vrcp.pop %v1943
        %v1946 = vrcp.pop %v1944
        %s1947 = scalar_lea.vmem %s197, 48
        %1948 = vst.msk [vmem:[%s1947] sm:$0xff] %vm1877, %v1945
        %1949 = vst.msk [vmem:[%s1947 + $0x8] sm:$0x7f] %vm1879, %v1946
        %p1950 = scmp.lt.s32.totalorder %s16, 1
        %s1951 = scalar_select %p1950, %s16, 1
        %s1952 = smul.addr %s1951, 8
        %s1953 = smul.addr %s1952, 8
        %s1954 = scalar_lea.vmem %s3, %s1953
        // Predicated region
        $region41: #{_lambda_.5} parent=31 // pred_check
          %p1955 = pneg %p102
        $region42: #{_lambda_.5} parent=31 // pred_check_branch
          %1957 = sbr.rel (%p1955) target = $region44
        $region43: #{_lambda_.5} parent=31 // pred_region
          _
        $region44: #{_lambda_.5} parent=31 // pred_fallthru
          _
      $region32: #{_lambda_.5} parent=5 // pred_fallthru
        _
      %p1958 = scmp.le.s32.totalorder 2, %s11
      // Predicated region
      $region45: #{_lambda_.5} parent=5 // pred_check
        %p1959 = pneg %p1958
      $region46: #{_lambda_.5} parent=5 // pred_check_branch
        %1961 = sbr.rel (%p1959) target = $region48
      $region47: #{_lambda_.5} parent=5 // pred_region
        %s1962 = ssub.s32 %s11, 2
        // Predicated region
        $region49: #{_lambda_.5} parent=47 // pred_check
          %p1963 = pneg %p108
        $region50: #{_lambda_.5} parent=47 // pred_check_branch
          %1965 = sbr.rel (%p1963) target = $region52
        $region51: #{_lambda_.5} parent=47 // pred_region
          %p1966 = scmp.lt.s32.totalorder %s17, 1
          %s1967 = scalar_select %p1966, %s17, 1
          %s1968 = smul.addr %s1967, 8
          %s1969 = smul.addr %s1968, 8
          %s1970 = scalar_lea.vmem %s3, %s1969
        $region52: #{_lambda_.5} parent=47 // pred_fallthru
          _
      $region48: #{_lambda_.5} parent=5 // pred_fallthru
        _
    $region6: #{_lambda_.5} parent=1 // loop_footer
      %s15 = sadd.s32 1, %s11
    $region7: #{_lambda_.5} parent=1 // loop_footer_branch
      %10 = sbr.rel target = $region3
    $region8: #{_lambda_.5} parent=1 // loop_exit
      _
    %1971 = vsyncpa [#allocation3], 1
    %s1972 = scalar_lea.sflag [#allocation3], 1
    %1973 = vsyncpa %s1972, 1
    %1974 = vsyncpa [#allocation5], 1

</llo_original>
